<compile_context>
chip_gen: v7x
topology: tpu7x:2x2x1
jax: 0.10.0
libtpu: 0.0.40
codegen_flags: <defaults>
</compile_context>

<pallas_src>
import functools
import warnings

import jax
import jax.numpy as jnp
from jax.experimental import pallas as pl
from jax.experimental.pallas import tpu as pltpu


def _round_up(x, m):
    return (x + m - 1) // m * m


def _decoder_attention_kernel(
    enc_ref,     # (BT, S_pad, E_pad)  compute dtype (bf16 or f32)
    decp_ref,    # (BT, A_pad)         f32  -- dec@W_dec + b_dec + b_enc
    w_enc_ref,   # (E_pad, A_pad)      compute dtype
    w_att_ref,   # (1, A_pad)          f32  -- W_att as a row vector
    ctx_ref,     # (BT, E_pad)         f32 output (lane-dense)
    att_ref,     # (BT, S_pad)         f32 output (lane-dense)
    *,
    s_valid,     # static: number of un-padded source positions
):
    bt, s_pad, e_pad = enc_ref.shape
    a_pad = w_enc_ref.shape[1]

    enc = enc_ref[...]                                     # (BT, S, E)

    # enc_linear over all BT*S rows at once -> fills the MXU.  S_pad % 8 == 0
    # and E_pad % 128 == 0 (wrapper padding) keep this reshape a free
    # relayout, not a VMEM copy.  f32 accumulation.
    enc_p = jnp.dot(enc.reshape(bt * s_pad, e_pad), w_enc_ref[...],
                    preferred_element_type=jnp.float32)    # (BT*S, A)
    enc_p = enc_p.reshape(bt, s_pad, a_pad)

    # dec_linear (+ both biases) was hoisted to the wrapper; broadcast over S.
    # TODO(synk): if xprof/bundle shows the EUP saturating (v6e/v7x), cast the
    # tanh input to bf16 (not on v5e -- no bf16 EUP).
    t = jnp.tanh(enc_p + decp_ref[...][:, None, :])        # (BT, S, A) f32

    # att_linear: degenerate N=1 matmul replaced by broadcast-mul + lane
    # (XLU) reduction over A.  Result is lane-major (BT, S) -- no transpose.
    w_att = w_att_ref[...].astype(jnp.float32)             # (1, A)
    e = jnp.sum(t * w_att[None, :, :], axis=-1)            # (BT, S)
    # NOTE: + b_att dropped -- a uniform logit shift cancels in softmax.
    # TODO(synk): optional boolean `mask` (masked_fill_ with -inf) not wired
    # in; the reference call path here passes mask=None.

    # Mask padded key positions: zero-padded enc rows still produce
    # e = w_att . tanh(dec_p) != 0 and would otherwise steal attention mass.
    if s_valid < s_pad:
        lane = jax.lax.broadcasted_iota(jnp.int32, (bt, s_pad), 1)
        e = jnp.where(lane < s_valid, e, -1e30)

    # softmax over the S (lane) axis, all in f32.
    e_max = jnp.max(e, axis=-1, keepdims=True)             # (BT, 1)
    p = jnp.exp(e - e_max)                                 # (BT, S)
    denom = jnp.sum(p, axis=-1, keepdims=True)             # (BT, 1)
    inv = pl.reciprocal(denom, approx=True)                # EUP vrcp (free slot)
    inv = inv * (2.0 - denom * inv)                        # one Newton step
    att = p * inv                                          # (BT, S)

    # h_context: batched MXU matvec in the streaming dtype with f32
    # accumulation -- no f32 enc duplicate, no (BT,S,E) broadcast temp.
    ctx = jnp.einsum('bqs,bse->bqe',
                     att[:, None, :].astype(enc.dtype), enc,
                     preferred_element_type=jnp.float32)[:, 0, :]   # (BT, E)

    ctx_ref[...] = ctx.astype(ctx_ref.dtype)
    att_ref[...] = att.astype(att_ref.dtype)


def decoder_attention(enc, dec, params, *, block_b=None,
                      compute_dtype=jnp.bfloat16,
                      vmem_limit_bytes=48 * 1024 * 1024):
    """enc: [B, S, E] f32; dec: [B, D] f32.

    Returns (h_context [B, E] f32, att [B, S] f32).

    block_b: batch elements per grid step (multiple of 8, or == B).  Default
      aims for grid_b >= 2 so both v7x TensorCores get a shard.
      Sizing: the bf16 enc block (block_b * S_pad * E_pad * 2 bytes, double
      buffered) plus ~2 f32 temps of block_b * S_pad * A_pad * 4 bytes must
      fit vmem_limit_bytes with ~25% headroom.
    vmem_limit_bytes: default 48 MiB suits v7x (64 MiB/TC).  On v5e/v6e
      (128 MiB VMEM) raise toward ~96-112 MiB and take ~2x larger blocks; the
      explicit raise is mandatory on v5e (16 MiB scoped default).
    """
    B, S, E = enc.shape
    w_enc, b_enc, w_dec, b_dec, w_att, b_att = params
    A = w_enc.shape[1]
    del b_att  # cancels in softmax; never needed.

    # Pad to lane-dense layouts: S is the last dim of att, E of enc/ctx, A of
    # enc_p / dec_p / w_enc.  Zero padding is exact (masked pre-softmax).
    S_pad = _round_up(S, 128)
    E_pad = _round_up(E, 128)
    A_pad = _round_up(A, 128)

    # Pick a batch tile (second-minor dim of 2-D blocks must be a multiple of
    # 8 or equal the full batch).  Prefer grid_b >= 2 for the v7x 2-TC split.
    if block_b is None:
        block_b = B // 2 if (B % 16 == 0) else B
    block_b = min(block_b, B)
    if block_b != B and (B % block_b != 0 or block_b % 8 != 0):
        warnings.warn(
            "decoder_attention: block_b=%d is not a legal tile for B=%d; "
            "falling back to block_b=B (single grid step -- one v7x "
            "TensorCore will idle)." % (block_b, B))
        block_b = B
    grid_b = B // block_b

    # Hoist dec_linear out of the kernel: one fused XLA [B,D]@[D,A] matmul,
    # with both biases folded in (tanh(enc@We + be + dec@Wd + bd)).
    dec_p = (dec.astype(jnp.float32) @ w_dec.astype(jnp.float32)
             + b_dec + b_enc)                               # (B, A) f32
    dec_p = jnp.pad(dec_p, ((0, 0), (0, A_pad - A)))

    enc_in = jnp.pad(
        enc, ((0, 0), (0, S_pad - S), (0, E_pad - E))).astype(compute_dtype)
    w_enc_in = jnp.pad(
        w_enc, ((0, E_pad - E), (0, A_pad - A))).astype(compute_dtype)
    w_att_row = jnp.pad(
        w_att.astype(jnp.float32).T, ((0, 0), (0, A_pad - A)))      # (1, A_pad)

    # TODO(synk): v7x only -- stream enc as fp8 with a per-block scale for the
    # enc_linear matmul (halves the dominant HBM stream); not drop-in for
    # v5e/v6e.
    # TODO(synk): on v6e/v5e sweep pipeline_mode=pl.Buffered(3) on the enc
    # BlockSpec if xprof shows exposed DMA at grid-step boundaries.
    kernel = pl.pallas_call(
        functools.partial(_decoder_attention_kernel, s_valid=S),
        out_shape=(
            jax.ShapeDtypeStruct((B, E_pad), jnp.float32),
            jax.ShapeDtypeStruct((B, S_pad), jnp.float32),
        ),
        grid_spec=pltpu.PrefetchScalarGridSpec(
            num_scalar_prefetch=0,
            grid=(grid_b,),
            in_specs=[
                pl.BlockSpec((block_b, S_pad, E_pad), lambda b: (b, 0, 0)),  # enc
                pl.BlockSpec((block_b, A_pad), lambda b: (b, 0)),            # dec_p
                pl.BlockSpec((E_pad, A_pad), lambda b: (0, 0)),              # W_enc
                pl.BlockSpec((1, A_pad), lambda b: (0, 0)),                  # W_att
            ],
            out_specs=[
                pl.BlockSpec((block_b, E_pad), lambda b: (b, 0)),            # ctx
                pl.BlockSpec((block_b, S_pad), lambda b: (b, 0)),            # att
            ],
        ),
        compiler_params=pltpu.CompilerParams(
            dimension_semantics=("parallel",),
            vmem_limit_bytes=vmem_limit_bytes,
        ),
    )
    ctx_p, att_p = kernel(enc_in, dec_p, w_enc_in, w_att_row)
    return ctx_p[:, :E], att_p[:, :S]


def init_params(key, enc_hidden, dec_hidden, att_hidden):
    """Deterministic xavier-normal weights and small uniform biases."""
    k1, k2, k3, k4, k5, k6 = jax.random.split(key, 6)

    def xavier_normal(k, fan_in, fan_out):
        std = (2.0 / (fan_in + fan_out)) ** 0.5
        # stored as [fan_in, fan_out] (transposed relative to torch's [out,in])
        return std * jax.random.normal(k, (fan_in, fan_out), dtype=jnp.float32)

    def bias(k, fan_in, fan_out):
        bound = 1.0 / (fan_in ** 0.5)
        return jax.random.uniform(
            k, (1, fan_out), minval=-bound, maxval=bound, dtype=jnp.float32)

    w_enc = xavier_normal(k1, enc_hidden, att_hidden)
    b_enc = bias(k2, enc_hidden, att_hidden)
    w_dec = xavier_normal(k3, dec_hidden, att_hidden)
    b_dec = bias(k4, dec_hidden, att_hidden)
    w_att = xavier_normal(k5, att_hidden, 1)
    b_att = bias(k6, att_hidden, 1)
    return (w_enc, b_enc, w_dec, b_dec, w_att, b_att)


def _reference(enc, dec, params):
    """Pure-JAX reference matching the PyTorch forward (mask=None)."""
    w_enc, b_enc, w_dec, b_dec, w_att, b_att = params
    enc_p = enc @ w_enc + b_enc                                  # [B,S,A]
    dec_p = dec[:, None, :] @ w_dec + b_dec                      # [B,1,A]
    e = jnp.squeeze(jnp.tanh(enc_p + dec_p) @ w_att + b_att, -1)  # [B,S]
    att = jax.nn.softmax(e, axis=-1)
    ctx = jnp.squeeze(att[:, None, :] @ enc, 1)                  # [B,E]
    return ctx, att


if __name__ == "__main__":
    B, S = 16, 8
    enc_hidden, dec_hidden, att_hidden = 32, 16, 24

    key = jax.random.PRNGKey(0)
    kp, ke, kd = jax.random.split(key, 3)

    params = init_params(kp, enc_hidden, dec_hidden, att_hidden)
    enc = jax.random.normal(ke, (B, S, enc_hidden), dtype=jnp.float32)
    dec = jax.random.normal(kd, (B, dec_hidden), dtype=jnp.float32)

    h_expected, att_expected = _reference(enc, dec, params)

    # f32 compute path (tight correctness check), 2-step batch-tiled grid,
    # padded + masked softmax path exercised (S=8 -> S_pad=128).
    h32, a32 = decoder_attention(enc, dec, params, block_b=8,
                                 compute_dtype=jnp.float32)
    (h32, a32) = jax.block_until_ready((h32, a32))
    assert h32.shape == (B, enc_hidden) and a32.shape == (B, S)
    assert jnp.allclose(h32, h_expected, atol=1e-5, rtol=1e-5)
    assert jnp.allclose(a32, att_expected, atol=1e-5, rtol=1e-5)
    assert jnp.allclose(jnp.sum(a32, axis=-1), 1.0, atol=1e-5)

    # bf16-streaming path (default block_b -> grid of 2) -- looser tolerance.
    hbf, abf = decoder_attention(enc, dec, params,
                                 compute_dtype=jnp.bfloat16)
    (hbf, abf) = jax.block_until_ready((hbf, abf))
    assert hbf.shape == (B, enc_hidden) and abf.shape == (B, S)
    assert jnp.allclose(hbf, h_expected, atol=5e-2, rtol=5e-2)
    assert jnp.allclose(abf, att_expected, atol=5e-2, rtol=5e-2)
    assert jnp.allclose(jnp.sum(abf, axis=-1), 1.0, atol=1e-5)

    print("KERNEL_OK")
</pallas_src>

<mosaic_0001>
module attributes {stable_mosaic.version = 11 : i64} {
  func.func @_decoder_attention_kernel(%arg0: i32, %arg1: memref<8x128x128xf32, #tpu.memory_space<vmem>>, %arg2: memref<8x128xf32, #tpu.memory_space<vmem>>, %arg3: memref<128x128xf32, #tpu.memory_space<vmem>>, %arg4: memref<1x128xf32, #tpu.memory_space<vmem>>, %arg5: memref<8x128xf32, #tpu.memory_space<vmem>>, %arg6: memref<8x128xf32, #tpu.memory_space<vmem>>) attributes {dimension_semantics = [#tpu.dimension_semantics<parallel>], iteration_bounds = array<i64: 2>, scalar_prefetch = 0 : i64, scratch_operands = 0 : i64, tpu.core_type = #tpu.core_type<tc>, window_params = [{transform_indices = @transform_0, window_bounds = array<i64: 8, 128, 128>}, {transform_indices = @transform_1, window_bounds = array<i64: 8, 128>}, {pipeline_mode = #tpu.pipeline_mode<synchronous>, transform_indices = @transform_2, window_bounds = array<i64: 128, 128>}, {pipeline_mode = #tpu.pipeline_mode<synchronous>, transform_indices = @transform_3, window_bounds = array<i64: 1, 128>}, {transform_indices = @transform_4, window_bounds = array<i64: 8, 128>}, {transform_indices = @transform_5, window_bounds = array<i64: 8, 128>}]} {
    %c0 = arith.constant 0 : index
    %c0_0 = arith.constant 0 : index
    %c0_1 = arith.constant 0 : index
    %0 = vector.load %arg1[%c0, %c0_0, %c0_1] : memref<8x128x128xf32, #tpu.memory_space<vmem>>, vector<8x128x128xf32>
    %1 = vector.shape_cast %0 : vector<8x128x128xf32> to vector<1024x128xf32>
    %c0_2 = arith.constant 0 : index
    %c0_3 = arith.constant 0 : index
    %2 = vector.load %arg3[%c0_2, %c0_3] : memref<128x128xf32, #tpu.memory_space<vmem>>, vector<128x128xf32>
    %cst = arith.constant dense<0.000000e+00> : vector<1024x128xf32>
    %3 = tpu.matmul %1, %2, %cst {dimension_numbers = #tpu.dot_dimension_numbers<[1], [0], [0], [1], [0, 0, 1, 1], [], []>} : vector<1024x128xf32>, vector<128x128xf32>, vector<1024x128xf32> -> vector<1024x128xf32>
    %4 = vector.shape_cast %3 : vector<1024x128xf32> to vector<8x128x128xf32>
    %c0_4 = arith.constant 0 : index
    %c0_5 = arith.constant 0 : index
    %5 = vector.load %arg2[%c0_4, %c0_5] : memref<8x128xf32, #tpu.memory_space<vmem>>, vector<8x128xf32>
    %6 = vector.shape_cast %5 : vector<8x128xf32> to vector<8x1x128xf32>
    %7 = vector.broadcast %6 : vector<8x1x128xf32> to vector<8x128x128xf32>
    %8 = arith.addf %4, %7 : vector<8x128x128xf32>
    %9 = math.tanh %8 : vector<8x128x128xf32>
    %c0_6 = arith.constant 0 : index
    %c0_7 = arith.constant 0 : index
    %10 = vector.load %arg4[%c0_6, %c0_7] : memref<1x128xf32, #tpu.memory_space<vmem>>, vector<1x128xf32>
    %11 = vector.shape_cast %10 : vector<1x128xf32> to vector<1x1x128xf32>
    %12 = vector.broadcast %11 : vector<1x1x128xf32> to vector<8x128x128xf32>
    %13 = arith.mulf %9, %12 : vector<8x128x128xf32>
    %cst_8 = arith.constant dense<0.000000e+00> : vector<8x128xf32>
    %14 = vector.multi_reduction <add>, %13, %cst_8 [2] : vector<8x128x128xf32> to vector<8x128xf32>
    %15 = tpu.iota {dimensions = array<i32: 1>} : vector<8x128xi32>
    %c8_i32 = arith.constant 8 : i32
    %16 = vector.broadcast %c8_i32 : i32 to vector<8x128xi32>
    %17 = arith.cmpi slt, %15, %16 : vector<8x128xi32>
    %cst_9 = arith.constant -1.000000e+30 : f32
    %18 = vector.broadcast %cst_9 : f32 to vector<8x128xf32>
    %19 = arith.select %17, %14, %18 : vector<8x128xi1>, vector<8x128xf32>
    %cst_10 = arith.constant dense<0xFF800000> : vector<8xf32>
    %20 = vector.multi_reduction <maximumf>, %19, %cst_10 [1] : vector<8x128xf32> to vector<8xf32>
    %21 = vector.shape_cast %20 : vector<8xf32> to vector<8x1xf32>
    %22 = vector.broadcast %21 : vector<8x1xf32> to vector<8x128xf32>
    %23 = arith.subf %19, %22 : vector<8x128xf32>
    %24 = math.exp %23 : vector<8x128xf32>
    %cst_11 = arith.constant dense<0.000000e+00> : vector<8xf32>
    %25 = vector.multi_reduction <add>, %24, %cst_11 [1] : vector<8x128xf32> to vector<8xf32>
    %26 = vector.shape_cast %25 : vector<8xf32> to vector<8x1xf32>
    %27 = tpu.reciprocal %26 {approx = true} : vector<8x1xf32> -> vector<8x1xf32>
    %28 = arith.mulf %26, %27 : vector<8x1xf32>
    %cst_12 = arith.constant 2.000000e+00 : f32
    %29 = vector.broadcast %cst_12 : f32 to vector<8x1xf32>
    %30 = arith.subf %29, %28 : vector<8x1xf32>
    %31 = arith.mulf %27, %30 : vector<8x1xf32>
    %32 = vector.broadcast %31 : vector<8x1xf32> to vector<8x128xf32>
    %33 = arith.mulf %24, %32 : vector<8x128xf32>
    %34 = vector.shape_cast %33 : vector<8x128xf32> to vector<8x1x128xf32>
    "tpu.trace_start"() <{level = 10 : i32, message = "bqs,bse->bqe"}> : () -> ()
    %cst_13 = arith.constant dense<0.000000e+00> : vector<8x1x128xf32>
    %35 = tpu.matmul %34, %0, %cst_13 {dimension_numbers = #tpu.dot_dimension_numbers<[2], [1], [1], [2], [0, 0, 0, 1, 1, 2], [0], [0]>} : vector<8x1x128xf32>, vector<8x128x128xf32>, vector<8x1x128xf32> -> vector<8x1x128xf32>
    "tpu.trace_stop"() : () -> ()
    %36 = vector.shape_cast %35 : vector<8x1x128xf32> to vector<8x128xf32>
    %c0_14 = arith.constant 0 : index
    %c0_15 = arith.constant 0 : index
    %37 = vector.load %arg5[%c0_14, %c0_15] : memref<8x128xf32, #tpu.memory_space<vmem>>, vector<8x128xf32>
    tpu.vector_store %arg5[%c0_14, %c0_15], %36 {strides = array<i32>} : memref<8x128xf32, #tpu.memory_space<vmem>>, vector<8x128xf32>,
    %c0_16 = arith.constant 0 : index
    %c0_17 = arith.constant 0 : index
    %38 = vector.load %arg6[%c0_16, %c0_17] : memref<8x128xf32, #tpu.memory_space<vmem>>, vector<8x128xf32>
    tpu.vector_store %arg6[%c0_16, %c0_17], %33 {strides = array<i32>} : memref<8x128xf32, #tpu.memory_space<vmem>>, vector<8x128xf32>,
    return
  }
  func.func @transform_0(%arg0: i32) -> (i32, i32, i32) {
    %c0_i32 = arith.constant 0 : i32
    %c0_i32_0 = arith.constant 0 : i32
    %c0_i32_1 = arith.constant 0 : i32
    return %arg0, %c0_i32, %c0_i32_0 : i32, i32, i32
  }
  func.func @transform_1(%arg0: i32) -> (i32, i32) {
    %c0_i32 = arith.constant 0 : i32
    %c0_i32_0 = arith.constant 0 : i32
    return %arg0, %c0_i32 : i32, i32
  }
  func.func @transform_2(%arg0: i32) -> (i32, i32) {
    %c0_i32 = arith.constant 0 : i32
    %c0_i32_0 = arith.constant 0 : i32
    %c0_i32_1 = arith.constant 0 : i32
    return %c0_i32, %c0_i32_0 : i32, i32
  }
  func.func @transform_3(%arg0: i32) -> (i32, i32) {
    %c0_i32 = arith.constant 0 : i32
    %c0_i32_0 = arith.constant 0 : i32
    %c0_i32_1 = arith.constant 0 : i32
    return %c0_i32, %c0_i32_0 : i32, i32
  }
  func.func @transform_4(%arg0: i32) -> (i32, i32) {
    %c0_i32 = arith.constant 0 : i32
    %c0_i32_0 = arith.constant 0 : i32
    return %arg0, %c0_i32 : i32, i32
  }
  func.func @transform_5(%arg0: i32) -> (i32, i32) {
    %c0_i32 = arith.constant 0 : i32
    %c0_i32_0 = arith.constant 0 : i32
    return %arg0, %c0_i32 : i32, i32
  }
}

</mosaic_0001>

<llo_original>
// kernel: tpu_custom_call.1
$region0: #{tpu_custom_call.1}
  #allocation0 [shape = 'u32[]', space=smem, size = 0x4, offset = 0x4, fixed_abs, tag = 'smem constant byte address 0x4 - core index']
  #allocation1 [shape = 'u32[144,128]{1,0:T(1,128)}', space=vmem, size = 0x12000, scoped, tag = 'internal scratch']
  %s0 = inlined_call_operand.hbm [shape: f32[16,128,128], index: 0, kind: input, shape index: {}]
  %s1 = inlined_call_operand.hbm [shape: f32[16,128], index: 1, kind: input, shape index: {}]
  %s2 = inlined_call_operand.hbm [shape: f32[128,128], index: 2, kind: input, shape index: {}]
  %s3 = inlined_call_operand.vmem [shape: f32[1,128], index: 3, kind: input, shape index: {}]
  %s4 = inlined_call_operand.hbm [shape: f32[16,128], index: 4, kind: output, shape index: {0}]
  %s5 = inlined_call_operand.hbm [shape: f32[16,128], index: 5, kind: output, shape index: {1}]
  %6 = xla_tuple %s4, %s5
  %s7 = sld [smem:[#allocation0]]
  $region69: #{tpu_custom_call.1} parent=0
    _
  %s9 = ssub.s32 1, %s7
  %s10 = scalar_select 0, %s9, %s7
  $region1: #{tpu_custom_call.1} parent=0
    #allocation2 [shape = 'u8[1048576]{0}', space=vmem, size = 0x100000, scoped, tag = 'input window, operand 0']
    #allocation3 [shape = 's32[2]{0}', space=sflag, size = 0x8, scoped, tag = 'scoped memory for tpu_custom_call.1']
    #allocation4 [shape = 's32[2]{0}', space=sflag, size = 0x8, scoped, tag = 'scoped memory for tpu_custom_call.1']
    #allocation5 [shape = 'u8[8192]{0}', space=vmem, size = 0x2000, scoped, tag = 'input window, operand 1']
    #allocation6 [shape = 's32[2]{0}', space=sflag, size = 0x8, scoped, tag = 'scoped memory for tpu_custom_call.1']
    #allocation7 [shape = 'u8[65536]{0}', space=vmem, size = 0x10000, scoped, tag = 'input window, operand 2, single buffered']
    #allocation8 [shape = 'u8[8192]{0}', space=vmem, size = 0x2000, scoped, tag = 'output window, operand 0']
    #allocation9 [shape = 'u8[8192]{0}', space=vmem, size = 0x2000, scoped, tag = 'output window, operand 1']
    #allocation10 [shape = 's32[2]{0}', space=sflag, size = 0x8, scoped, tag = 'scoped memory for tpu_custom_call.1']
    %11 = vsyncpa [#allocation3], 0
    %s12 = scalar_lea.sflag [#allocation3], 1
    %13 = vsyncpa %s12, 0
    %14 = vsyncpa [#allocation6], 0
    %s15 = scalar_lea.sflag [#allocation6], 1
    %16 = vsyncpa %s15, 0
    %17 = vsyncpa [#allocation4], 0
    %s18 = scalar_lea.sflag [#allocation4], 1
    %19 = vsyncpa %s18, 0
    %20 = vsyncpa [#allocation10], 0
    %s21 = scalar_lea.sflag [#allocation10], 1
    %22 = vsyncpa %s21, 0
    loop: start=0, step=1, limit=4
    $region2: #{tpu_custom_call.1} parent=1 // loop_pre_header
      _
    $region3: #{tpu_custom_call.1} parent=1 // loop_header
      %s24 = sphi 0, %s28
      %p25 = scmp.ge.s32.totalorder %s24, 4
      %s34 = sphi 0, %s36
      %s37 = sphi 0, %s34
      %s38 = sphi 0, %s37
      %s54 = sphi 0, %s38
      %s60 = sphi 0, %s62
      %s63 = sphi 0, %s60
      %s64 = sphi 0, %s63
      %s80 = sphi 0, %s64
      %s84 = sphi 0, %s84
      %s86 = sphi 0, %s84
      %s87 = sphi 0, %s86
      %s101 = sphi 0, %s87
      %s105 = sphi 0, %s105
      %s107 = sphi 0, %s105
      %s108 = sphi 0, %s107
      %s122 = sphi 0, %s108
      %s128 = sphi 0, %s130
      %s131 = sphi 0, %s128
      %s132 = sphi 0, %s131
      %s148 = sphi 0, %s132
      %s154 = sphi 0, %s156
      %s157 = sphi 0, %s154
      %s158 = sphi 0, %s157
      %s174 = sphi 0, %s158
    $region4: #{tpu_custom_call.1} parent=1 // loop_header_branch
      %27 = sbr.rel (%p25) target = $region8
    $region5: #{tpu_custom_call.1} parent=1 // loop_body
      %s29 = ssub.s32 %s24, 1
      %s30 = ssub.s32 %s24, 2
      %s31 = sadd.s32 %s24, 1
      %s32 = ssub.s32 %s24, %s31
      %p33 = scmp.eq.s32.totalorder %s32, 0
      %s35 = sadd.s32 %s34, 1
      %s36 = scalar_select %p33, %s34, %s35
      %p39 = pneg %p33
      %p40 = scmp.eq.s32.totalorder %s24, 1
      %p41 = por %p39, %p40
      %p42 = scmp.ne.s32.totalorder %s34, %s37
      %p43 = scmp.eq.s32.totalorder %s24, 0
      %p44 = por %p42, %p43
      %p45 = scmp.ne.s32.totalorder %s34, %s37
      %p46 = scmp.eq.s32.totalorder %s29, 1
      %p47 = por %p45, %p46
      %p48 = scmp.ne.s32.totalorder %s37, %s38
      %p49 = scmp.eq.s32.totalorder %s29, 0
      %p50 = por %p48, %p49
      %p51 = scmp.ne.s32.totalorder %s37, %s38
      %p52 = scmp.eq.s32.totalorder %s30, 1
      %p53 = por %p51, %p52
      %p55 = scmp.ne.s32.totalorder %s38, %s54
      %p56 = scmp.eq.s32.totalorder %s30, 0
      %p57 = por %p55, %p56
      %s58 = ssub.s32 %s24, %s31
      %p59 = scmp.eq.s32.totalorder %s58, 0
      %s61 = sadd.s32 %s60, 1
      %s62 = scalar_select %p59, %s60, %s61
      %p65 = pneg %p59
      %p66 = scmp.eq.s32.totalorder %s24, 1
      %p67 = por %p65, %p66
      %p68 = scmp.ne.s32.totalorder %s60, %s63
      %p69 = scmp.eq.s32.totalorder %s24, 0
      %p70 = por %p68, %p69
      %p71 = scmp.ne.s32.totalorder %s60, %s63
      %p72 = scmp.eq.s32.totalorder %s29, 1
      %p73 = por %p71, %p72
      %p74 = scmp.ne.s32.totalorder %s63, %s64
      %p75 = scmp.eq.s32.totalorder %s29, 0
      %p76 = por %p74, %p75
      %p77 = scmp.ne.s32.totalorder %s63, %s64
      %p78 = scmp.eq.s32.totalorder %s30, 1
      %p79 = por %p77, %p78
      %p81 = scmp.ne.s32.totalorder %s64, %s80
      %p82 = scmp.eq.s32.totalorder %s30, 0
      %p83 = por %p81, %p82
      %s85 = sadd.s32 %s84, 1
      %p88 = scmp.eq.s32.totalorder %s24, 1
      %p89 = scmp.ne.s32.totalorder %s84, %s86
      %p90 = scmp.eq.s32.totalorder %s24, 0
      %p91 = por %p89, %p90
      %p92 = scmp.ne.s32.totalorder %s84, %s86
      %p93 = scmp.eq.s32.totalorder %s29, 1
      %p94 = por %p92, %p93
      %p95 = scmp.ne.s32.totalorder %s86, %s87
      %p96 = scmp.eq.s32.totalorder %s29, 0
      %p97 = por %p95, %p96
      %p98 = scmp.ne.s32.totalorder %s86, %s87
      %p99 = scmp.eq.s32.totalorder %s30, 1
      %p100 = por %p98, %p99
      %p102 = scmp.ne.s32.totalorder %s87, %s101
      %p103 = scmp.eq.s32.totalorder %s30, 0
      %p104 = por %p102, %p103
      %s106 = sadd.s32 %s105, 1
      %p109 = scmp.eq.s32.totalorder %s24, 1
      %p110 = scmp.ne.s32.totalorder %s105, %s107
      %p111 = scmp.eq.s32.totalorder %s24, 0
      %p112 = por %p110, %p111
      %p113 = scmp.ne.s32.totalorder %s105, %s107
      %p114 = scmp.eq.s32.totalorder %s29, 1
      %p115 = por %p113, %p114
      %p116 = scmp.ne.s32.totalorder %s107, %s108
      %p117 = scmp.eq.s32.totalorder %s29, 0
      %p118 = por %p116, %p117
      %p119 = scmp.ne.s32.totalorder %s107, %s108
      %p120 = scmp.eq.s32.totalorder %s30, 1
      %p121 = por %p119, %p120
      %p123 = scmp.ne.s32.totalorder %s108, %s122
      %p124 = scmp.eq.s32.totalorder %s30, 0
      %p125 = por %p123, %p124
      %s126 = ssub.s32 %s24, %s31
      %p127 = scmp.eq.s32.totalorder %s126, 0
      %s129 = sadd.s32 %s128, 1
      %s130 = scalar_select %p127, %s128, %s129
      %p133 = pneg %p127
      %p134 = scmp.eq.s32.totalorder %s24, 1
      %p135 = por %p133, %p134
      %p136 = scmp.ne.s32.totalorder %s128, %s131
      %p137 = scmp.eq.s32.totalorder %s24, 0
      %p138 = por %p136, %p137
      %p139 = scmp.ne.s32.totalorder %s128, %s131
      %p140 = scmp.eq.s32.totalorder %s29, 1
      %p141 = por %p139, %p140
      %p142 = scmp.ne.s32.totalorder %s131, %s132
      %p143 = scmp.eq.s32.totalorder %s29, 0
      %p144 = por %p142, %p143
      %p145 = scmp.ne.s32.totalorder %s131, %s132
      %p146 = scmp.eq.s32.totalorder %s30, 1
      %p147 = por %p145, %p146
      %p149 = scmp.ne.s32.totalorder %s132, %s148
      %p150 = scmp.eq.s32.totalorder %s30, 0
      %p151 = por %p149, %p150
      %s152 = ssub.s32 %s24, %s31
      %p153 = scmp.eq.s32.totalorder %s152, 0
      %s155 = sadd.s32 %s154, 1
      %s156 = scalar_select %p153, %s154, %s155
      %p159 = pneg %p153
      %p160 = scmp.eq.s32.totalorder %s24, 1
      %p161 = por %p159, %p160
      %p162 = scmp.ne.s32.totalorder %s154, %s157
      %p163 = scmp.eq.s32.totalorder %s24, 0
      %p164 = por %p162, %p163
      %p165 = scmp.ne.s32.totalorder %s154, %s157
      %p166 = scmp.eq.s32.totalorder %s29, 1
      %p167 = por %p165, %p166
      %p168 = scmp.ne.s32.totalorder %s157, %s158
      %p169 = scmp.eq.s32.totalorder %s29, 0
      %p170 = por %p168, %p169
      %p171 = scmp.ne.s32.totalorder %s157, %s158
      %p172 = scmp.eq.s32.totalorder %s30, 1
      %p173 = por %p171, %p172
      %p175 = scmp.ne.s32.totalorder %s158, %s174
      %p176 = scmp.eq.s32.totalorder %s30, 0
      %p177 = por %p175, %p176
      %p178 = scmp.le.s32.totalorder 1, %s24
      %p179 = scmp.lt.s32.totalorder %s24, 3
      %p180 = pnand %p178, %p179
      %p181 = pneg %p180
      // Predicated region
      $region9: #{tpu_custom_call.1} parent=5 // pred_check
        _
      $region10: #{tpu_custom_call.1} parent=5 // pred_check_branch
        %183 = sbr.rel (%p180) target = $region12
      $region11: #{tpu_custom_call.1} parent=5 // pred_region
        %s184 = ssub.s32 %s24, 1
        // Predicated region
        $region13: #{tpu_custom_call.1} parent=11 // pred_check
          %p185 = pneg %p97
        $region14: #{tpu_custom_call.1} parent=11 // pred_check_branch
          %187 = sbr.rel (%p185) target = $region16
        $region15: #{tpu_custom_call.1} parent=11 // pred_region
          %s189 = ssub.s32 2048, 2048
          %190 = vsyncadd [#allocation6], %s189
          %s191 = sshll.u32 [#allocation7], 4
          %s192 = int_to_ptr.vmem [resolvable:$true] %s191
          %197 = dma.hbm_to_vmem [thread:$0]  %s2, 2048, %s192, [#allocation6], 128, 128, 8
        $region16: #{tpu_custom_call.1} parent=11 // pred_fallthru
          _
        // Predicated region
        $region17: #{tpu_custom_call.1} parent=11 // pred_check
          %p198 = pneg %p118
        $region18: #{tpu_custom_call.1} parent=11 // pred_check_branch
          %200 = sbr.rel (%p198) target = $region20
        $region19: #{tpu_custom_call.1} parent=11 // pred_region
          _
        $region20: #{tpu_custom_call.1} parent=11 // pred_fallthru
          _
      $region12: #{tpu_custom_call.1} parent=5 // pred_fallthru
        _
      %p201 = scmp.lt.s32.totalorder %s24, 2
      // Predicated region
      $region21: #{tpu_custom_call.1} parent=5 // pred_check
        %p202 = pneg %p201
      $region22: #{tpu_custom_call.1} parent=5 // pred_check_branch
        %204 = sbr.rel (%p202) target = $region24
      $region23: #{tpu_custom_call.1} parent=5 // pred_region
        // Predicated region
        $region25: #{tpu_custom_call.1} parent=23 // pred_check
          %p205 = pneg %p44
        $region26: #{tpu_custom_call.1} parent=23 // pred_check_branch
          %207 = sbr.rel (%p205) target = $region28
        $region27: #{tpu_custom_call.1} parent=23 // pred_region
          %s208 = sand.u32 %s34, 1
          %s209 = scalar_lea.sflag [#allocation3], %s208
          %s210 = sand.u32 %s34, 1
          %s211 = smul.addr %s210, 1024
          %s212 = scalar_lea.vmem [#allocation2], %s211
          %s213 = smul.u32 8, %s24
          %s215 = ssub.s32 16384, 16384
          %216 = vsyncadd %s209, %s215
          %s217 = smul.addr %s213, 16
          %s218 = smul.addr %s217, 128
          %s219 = scalar_lea.hbm %s0, %s218
          %s220 = sshll.u32 %s212, 4
          %s221 = int_to_ptr.vmem [resolvable:$true] %s220
          %226 = dma.hbm_to_vmem [thread:$0]  %s219, 16384, %s221, %s209, 128, 128, 8
        $region28: #{tpu_custom_call.1} parent=23 // pred_fallthru
          _
        // Predicated region
        $region29: #{tpu_custom_call.1} parent=23 // pred_check
          %p227 = pneg %p70
        $region30: #{tpu_custom_call.1} parent=23 // pred_check_branch
          %229 = sbr.rel (%p227) target = $region32
        $region31: #{tpu_custom_call.1} parent=23 // pred_region
          %s230 = sand.u32 %s24, 1
          %s231 = scalar_lea.sflag [#allocation6], %s230
          %s232 = sand.u32 %s60, 1
          %s233 = smul.addr %s232, 8
          %s234 = scalar_lea.vmem [#allocation5], %s233
          %s236 = ssub.s32 128, 128
          %237 = vsyncadd %s231, %s236
          %s238 = smul.addr %s24, 128
          %s239 = scalar_lea.hbm %s1, %s238
          %s241 = sshll.u32 %s234, 4
          %s242 = int_to_ptr.vmem [resolvable:$true] %s241
          %244 = dma.hbm_to_vmem [thread:$0]  %s239, 128, %s242, %s231
        $region32: #{tpu_custom_call.1} parent=23 // pred_fallthru
          _
      $region24: #{tpu_custom_call.1} parent=5 // pred_fallthru
        _
      %p245 = scmp.le.s32.totalorder 1, %s24
      %p246 = scmp.lt.s32.totalorder %s24, 3
      %p247 = pnand %p245, %p246
      %p248 = pneg %p247
      // Predicated region
      $region33: #{tpu_custom_call.1} parent=5 // pred_check
        _
      $region34: #{tpu_custom_call.1} parent=5 // pred_check_branch
        %250 = sbr.rel (%p247) target = $region36
      $region35: #{tpu_custom_call.1} parent=5 // pred_region
        %s251 = ssub.s32 %s24, 1
        %s252 = sand.u32 %s37, 1
        %s253 = scalar_lea.sflag [#allocation3], %s252
        %s254 = sand.u32 %s37, 1
        %s255 = smul.addr %s254, 1024
        %s256 = scalar_lea.vmem [#allocation2], %s255
        // Predicated region
        $region37: #{tpu_custom_call.1} parent=35 // pred_check
          %p257 = pneg %p50
        $region38: #{tpu_custom_call.1} parent=35 // pred_check_branch
          %259 = sbr.rel (%p257) target = $region40
        $region39: #{tpu_custom_call.1} parent=35 // pred_region
          %260 = dma.done %s253, 16384
        $region40: #{tpu_custom_call.1} parent=35 // pred_fallthru
          _
        %s261 = sand.u32 %s29, 1
        %s262 = scalar_lea.sflag [#allocation6], %s261
        %s263 = sand.u32 %s63, 1
        %s264 = smul.addr %s263, 8
        %s265 = scalar_lea.vmem [#allocation5], %s264
        // Predicated region
        $region41: #{tpu_custom_call.1} parent=35 // pred_check
          %p266 = pneg %p76
        $region42: #{tpu_custom_call.1} parent=35 // pred_check_branch
          %268 = sbr.rel (%p266) target = $region44
        $region43: #{tpu_custom_call.1} parent=35 // pred_region
          %269 = dma.done %s262, 128
        $region44: #{tpu_custom_call.1} parent=35 // pred_fallthru
          _
        // Predicated region
        $region45: #{tpu_custom_call.1} parent=35 // pred_check
          %p270 = pneg %p97
        $region46: #{tpu_custom_call.1} parent=35 // pred_check_branch
          %272 = sbr.rel (%p270) target = $region48
        $region47: #{tpu_custom_call.1} parent=35 // pred_region
          %273 = dma.done [#allocation6], 2048
        $region48: #{tpu_custom_call.1} parent=35 // pred_fallthru
          _
        %s274 = sand.u32 %s37, 1
        %s275 = scalar_lea.sflag [#allocation3], %s274
        %s276 = sand.u32 %s37, 1
        %s277 = smul.addr %s276, 1024
        %s278 = scalar_lea.vmem [#allocation2], %s277
        %p279 = pneg %p50
        %p280 = pneg %p47
        %s281 = sand.u32 %s29, 1
        %s282 = scalar_lea.sflag [#allocation6], %s281
        %s283 = sand.u32 %s63, 1
        %s284 = smul.addr %s283, 8
        %s285 = scalar_lea.vmem [#allocation5], %s284
        %p286 = pneg %p76
        %p287 = pneg %p73
        %p288 = pneg %p97
        %p289 = pneg %p94
        %p290 = pneg %p118
        %p291 = pneg %p115
        %p292 = pneg %p144
        %p293 = pneg %p141
        %s294 = sand.u32 %s131, 1
        %s295 = scalar_lea.sflag [#allocation4], %s294
        %s296 = sand.u32 %s131, 1
        %s297 = smul.addr %s296, 8
        %s298 = scalar_lea.vmem [#allocation8], %s297
        %p299 = pneg %p170
        %p300 = pneg %p167
        %s301 = sand.u32 %s157, 1
        %s302 = scalar_lea.sflag [#allocation10], %s301
        %s303 = sand.u32 %s157, 1
        %s304 = smul.addr %s303, 8
        %s305 = scalar_lea.vmem [#allocation9], %s304
        %s306 = smul.u32 8, %s29
        %v307 = vld [vmem:[%s256] sm:$0xff]
        %v308 = vld [vmem:[%s256 + $0x8] sm:$0xff]
        %v309 = vld [vmem:[%s256 + $0x10] sm:$0xff]
        %v310 = vld [vmem:[%s256 + $0x18] sm:$0xff]
        %v311 = vld [vmem:[%s256 + $0x20] sm:$0xff]
        %v312 = vld [vmem:[%s256 + $0x28] sm:$0xff]
        %v313 = vld [vmem:[%s256 + $0x30] sm:$0xff]
        %v314 = vld [vmem:[%s256 + $0x38] sm:$0xff]
        %v315 = vld [vmem:[%s256 + $0x40] sm:$0xff]
        %v316 = vld [vmem:[%s256 + $0x48] sm:$0xff]
        %v317 = vld [vmem:[%s256 + $0x50] sm:$0xff]
        %v318 = vld [vmem:[%s256 + $0x58] sm:$0xff]
        %v319 = vld [vmem:[%s256 + $0x60] sm:$0xff]
        %v320 = vld [vmem:[%s256 + $0x68] sm:$0xff]
        %v321 = vld [vmem:[%s256 + $0x70] sm:$0xff]
        %v322 = vld [vmem:[%s256 + $0x78] sm:$0xff]
        %v323 = vld [vmem:[%s256 + $0x80] sm:$0xff]
        %v324 = vld [vmem:[%s256 + $0x88] sm:$0xff]
        %v325 = vld [vmem:[%s256 + $0x90] sm:$0xff]
        %v326 = vld [vmem:[%s256 + $0x98] sm:$0xff]
        %v327 = vld [vmem:[%s256 + $0xa0] sm:$0xff]
        %v328 = vld [vmem:[%s256 + $0xa8] sm:$0xff]
        %v329 = vld [vmem:[%s256 + $0xb0] sm:$0xff]
        %v330 = vld [vmem:[%s256 + $0xb8] sm:$0xff]
        %v331 = vld [vmem:[%s256 + $0xc0] sm:$0xff]
        %v332 = vld [vmem:[%s256 + $0xc8] sm:$0xff]
        %v333 = vld [vmem:[%s256 + $0xd0] sm:$0xff]
        %v334 = vld [vmem:[%s256 + $0xd8] sm:$0xff]
        %v335 = vld [vmem:[%s256 + $0xe0] sm:$0xff]
        %v336 = vld [vmem:[%s256 + $0xe8] sm:$0xff]
        %v337 = vld [vmem:[%s256 + $0xf0] sm:$0xff]
        %v338 = vld [vmem:[%s256 + $0xf8] sm:$0xff]
        %v339 = vld [vmem:[%s256 + $0x100] sm:$0xff]
        %v340 = vld [vmem:[%s256 + $0x108] sm:$0xff]
        %v341 = vld [vmem:[%s256 + $0x110] sm:$0xff]
        %v342 = vld [vmem:[%s256 + $0x118] sm:$0xff]
        %v343 = vld [vmem:[%s256 + $0x120] sm:$0xff]
        %v344 = vld [vmem:[%s256 + $0x128] sm:$0xff]
        %v345 = vld [vmem:[%s256 + $0x130] sm:$0xff]
        %v346 = vld [vmem:[%s256 + $0x138] sm:$0xff]
        %v347 = vld [vmem:[%s256 + $0x140] sm:$0xff]
        %v348 = vld [vmem:[%s256 + $0x148] sm:$0xff]
        %v349 = vld [vmem:[%s256 + $0x150] sm:$0xff]
        %v350 = vld [vmem:[%s256 + $0x158] sm:$0xff]
        %v351 = vld [vmem:[%s256 + $0x160] sm:$0xff]
        %v352 = vld [vmem:[%s256 + $0x168] sm:$0xff]
        %v353 = vld [vmem:[%s256 + $0x170] sm:$0xff]
        %v354 = vld [vmem:[%s256 + $0x178] sm:$0xff]
        %v355 = vld [vmem:[%s256 + $0x180] sm:$0xff]
        %v356 = vld [vmem:[%s256 + $0x188] sm:$0xff]
        %v357 = vld [vmem:[%s256 + $0x190] sm:$0xff]
        %v358 = vld [vmem:[%s256 + $0x198] sm:$0xff]
        %v359 = vld [vmem:[%s256 + $0x1a0] sm:$0xff]
        %v360 = vld [vmem:[%s256 + $0x1a8] sm:$0xff]
        %v361 = vld [vmem:[%s256 + $0x1b0] sm:$0xff]
        %v362 = vld [vmem:[%s256 + $0x1b8] sm:$0xff]
        %v363 = vld [vmem:[%s256 + $0x1c0] sm:$0xff]
        %v364 = vld [vmem:[%s256 + $0x1c8] sm:$0xff]
        %v365 = vld [vmem:[%s256 + $0x1d0] sm:$0xff]
        %v366 = vld [vmem:[%s256 + $0x1d8] sm:$0xff]
        %v367 = vld [vmem:[%s256 + $0x1e0] sm:$0xff]
        %v368 = vld [vmem:[%s256 + $0x1e8] sm:$0xff]
        %v369 = vld [vmem:[%s256 + $0x1f0] sm:$0xff]
        %v370 = vld [vmem:[%s256 + $0x1f8] sm:$0xff]
        %v371 = vld [vmem:[%s256 + $0x200] sm:$0xff]
        %v372 = vld [vmem:[%s256 + $0x208] sm:$0xff]
        %v373 = vld [vmem:[%s256 + $0x210] sm:$0xff]
        %v374 = vld [vmem:[%s256 + $0x218] sm:$0xff]
        %v375 = vld [vmem:[%s256 + $0x220] sm:$0xff]
        %v376 = vld [vmem:[%s256 + $0x228] sm:$0xff]
        %v377 = vld [vmem:[%s256 + $0x230] sm:$0xff]
        %v378 = vld [vmem:[%s256 + $0x238] sm:$0xff]
        %v379 = vld [vmem:[%s256 + $0x240] sm:$0xff]
        %v380 = vld [vmem:[%s256 + $0x248] sm:$0xff]
        %v381 = vld [vmem:[%s256 + $0x250] sm:$0xff]
        %v382 = vld [vmem:[%s256 + $0x258] sm:$0xff]
        %v383 = vld [vmem:[%s256 + $0x260] sm:$0xff]
        %v384 = vld [vmem:[%s256 + $0x268] sm:$0xff]
        %v385 = vld [vmem:[%s256 + $0x270] sm:$0xff]
        %v386 = vld [vmem:[%s256 + $0x278] sm:$0xff]
        %v387 = vld [vmem:[%s256 + $0x280] sm:$0xff]
        %v388 = vld [vmem:[%s256 + $0x288] sm:$0xff]
        %v389 = vld [vmem:[%s256 + $0x290] sm:$0xff]
        %v390 = vld [vmem:[%s256 + $0x298] sm:$0xff]
        %v391 = vld [vmem:[%s256 + $0x2a0] sm:$0xff]
        %v392 = vld [vmem:[%s256 + $0x2a8] sm:$0xff]
        %v393 = vld [vmem:[%s256 + $0x2b0] sm:$0xff]
        %v394 = vld [vmem:[%s256 + $0x2b8] sm:$0xff]
        %v395 = vld [vmem:[%s256 + $0x2c0] sm:$0xff]
        %v396 = vld [vmem:[%s256 + $0x2c8] sm:$0xff]
        %v397 = vld [vmem:[%s256 + $0x2d0] sm:$0xff]
        %v398 = vld [vmem:[%s256 + $0x2d8] sm:$0xff]
        %v399 = vld [vmem:[%s256 + $0x2e0] sm:$0xff]
        %v400 = vld [vmem:[%s256 + $0x2e8] sm:$0xff]
        %v401 = vld [vmem:[%s256 + $0x2f0] sm:$0xff]
        %v402 = vld [vmem:[%s256 + $0x2f8] sm:$0xff]
        %v403 = vld [vmem:[%s256 + $0x300] sm:$0xff]
        %v404 = vld [vmem:[%s256 + $0x308] sm:$0xff]
        %v405 = vld [vmem:[%s256 + $0x310] sm:$0xff]
        %v406 = vld [vmem:[%s256 + $0x318] sm:$0xff]
        %v407 = vld [vmem:[%s256 + $0x320] sm:$0xff]
        %v408 = vld [vmem:[%s256 + $0x328] sm:$0xff]
        %v409 = vld [vmem:[%s256 + $0x330] sm:$0xff]
        %v410 = vld [vmem:[%s256 + $0x338] sm:$0xff]
        %v411 = vld [vmem:[%s256 + $0x340] sm:$0xff]
        %v412 = vld [vmem:[%s256 + $0x348] sm:$0xff]
        %v413 = vld [vmem:[%s256 + $0x350] sm:$0xff]
        %v414 = vld [vmem:[%s256 + $0x358] sm:$0xff]
        %v415 = vld [vmem:[%s256 + $0x360] sm:$0xff]
        %v416 = vld [vmem:[%s256 + $0x368] sm:$0xff]
        %v417 = vld [vmem:[%s256 + $0x370] sm:$0xff]
        %v418 = vld [vmem:[%s256 + $0x378] sm:$0xff]
        %v419 = vld [vmem:[%s256 + $0x380] sm:$0xff]
        %v420 = vld [vmem:[%s256 + $0x388] sm:$0xff]
        %v421 = vld [vmem:[%s256 + $0x390] sm:$0xff]
        %v422 = vld [vmem:[%s256 + $0x398] sm:$0xff]
        %v423 = vld [vmem:[%s256 + $0x3a0] sm:$0xff]
        %v424 = vld [vmem:[%s256 + $0x3a8] sm:$0xff]
        %v425 = vld [vmem:[%s256 + $0x3b0] sm:$0xff]
        %v426 = vld [vmem:[%s256 + $0x3b8] sm:$0xff]
        %v427 = vld [vmem:[%s256 + $0x3c0] sm:$0xff]
        %v428 = vld [vmem:[%s256 + $0x3c8] sm:$0xff]
        %v429 = vld [vmem:[%s256 + $0x3d0] sm:$0xff]
        %v430 = vld [vmem:[%s256 + $0x3d8] sm:$0xff]
        %v431 = vld [vmem:[%s256 + $0x3e0] sm:$0xff]
        %v432 = vld [vmem:[%s256 + $0x3e8] sm:$0xff]
        %v433 = vld [vmem:[%s256 + $0x3f0] sm:$0xff]
        %v434 = vld [vmem:[%s256 + $0x3f8] sm:$0xff]
        %v435 = vld [vmem:[#allocation7] sm:$0xff]
        %v436 = vld [vmem:[#allocation7 + $0x8] sm:$0xff]
        %v437 = vld [vmem:[#allocation7 + $0x10] sm:$0xff]
        %v438 = vld [vmem:[#allocation7 + $0x18] sm:$0xff]
        %v439 = vld [vmem:[#allocation7 + $0x20] sm:$0xff]
        %v440 = vld [vmem:[#allocation7 + $0x28] sm:$0xff]
        %v441 = vld [vmem:[#allocation7 + $0x30] sm:$0xff]
        %v442 = vld [vmem:[#allocation7 + $0x38] sm:$0xff]
        %v443 = vld [vmem:[#allocation7 + $0x40] sm:$0xff]
        %v444 = vld [vmem:[#allocation7 + $0x48] sm:$0xff]
        %v445 = vld [vmem:[#allocation7 + $0x50] sm:$0xff]
        %v446 = vld [vmem:[#allocation7 + $0x58] sm:$0xff]
        %v447 = vld [vmem:[#allocation7 + $0x60] sm:$0xff]
        %v448 = vld [vmem:[#allocation7 + $0x68] sm:$0xff]
        %v449 = vld [vmem:[#allocation7 + $0x70] sm:$0xff]
        %v450 = vld [vmem:[#allocation7 + $0x78] sm:$0xff]
        %451 = vmatprep.subr.mxu0 0.0
        %452 = vmatpush1.msra.mxu0 %v435
        %453 = vmatprep.subr.mxu0 0.0
        %454 = vmatpush1.msra.mxu0 %v436
        %455 = vmatprep.subr.mxu0 0.0
        %456 = vmatpush1.msra.mxu0 %v437
        %457 = vmatprep.subr.mxu0 0.0
        %458 = vmatpush1.msra.mxu0 %v438
        %459 = vmatprep.subr.mxu0 0.0
        %460 = vmatpush1.msra.mxu0 %v439
        %461 = vmatprep.subr.mxu0 0.0
        %462 = vmatpush1.msra.mxu0 %v440
        %463 = vmatprep.subr.mxu0 0.0
        %464 = vmatpush1.msra.mxu0 %v441
        %465 = vmatprep.subr.mxu0 0.0
        %466 = vmatpush1.msra.mxu0 %v442
        %467 = vmatprep.subr.mxu0 0.0
        %468 = vmatpush1.msra.mxu0 %v443
        %469 = vmatprep.subr.mxu0 0.0
        %470 = vmatpush1.msra.mxu0 %v444
        %471 = vmatprep.subr.mxu0 0.0
        %472 = vmatpush1.msra.mxu0 %v445
        %473 = vmatprep.subr.mxu0 0.0
        %474 = vmatpush1.msra.mxu0 %v446
        %475 = vmatprep.subr.mxu0 0.0
        %476 = vmatpush1.msra.mxu0 %v447
        %477 = vmatprep.subr.mxu0 0.0
        %478 = vmatpush1.msra.mxu0 %v448
        %479 = vmatprep.subr.mxu0 0.0
        %480 = vmatpush1.msra.mxu0 %v449
        %481 = vmatprep.subr.mxu0 0.0
        %482 = vmatpush1.msra.mxu0 %v450
        %483 = vmatprep.subr.mxu0 0.0
        %484 = vmatpush1.msra.mxu0 0.0
        %485 = vmatprep.subr.mxu0 0.0
        %486 = vmatpush1.msra.mxu0 0.0
        %487 = vmatprep.subr.mxu0 0.0
        %488 = vmatpush1.msra.mxu0 0.0
        %489 = vmatprep.subr.mxu0 0.0
        %490 = vmatpush1.msra.mxu0 0.0
        %491 = vmatprep.subr.mxu0 0.0
        %492 = vmatpush1.msra.mxu0 0.0
        %493 = vmatprep.subr.mxu0 0.0
        %494 = vmatpush1.msra.mxu0 0.0
        %495 = vmatprep.subr.mxu0 0.0
        %496 = vmatpush1.msra.mxu0 0.0
        %497 = vmatprep.subr.mxu0 0.0
        %498 = vmatpush1.msra.mxu0 0.0
        %499 = vmatprep.subr.mxu0 0.0
        %500 = vmatpush1.msra.mxu0 0.0
        %501 = vmatprep.subr.mxu0 0.0
        %502 = vmatpush1.msra.mxu0 0.0
        %503 = vmatprep.subr.mxu0 0.0
        %504 = vmatpush1.msra.mxu0 0.0
        %505 = vmatprep.subr.mxu0 0.0
        %506 = vmatpush1.msra.mxu0 0.0
        %507 = vmatprep.subr.mxu0 0.0
        %508 = vmatpush1.msra.mxu0 0.0
        %509 = vmatprep.subr.mxu0 0.0
        %510 = vmatpush1.msra.mxu0 0.0
        %511 = vmatprep.subr.mxu0 0.0
        %512 = vmatpush1.msra.mxu0 0.0
        %513 = vmatprep.subr.mxu0 0.0
        %514 = vmatpush1.msra.mxu0 0.0
        %515 = vmatprep.mubr.f32.mxu0 0.0
        %516 = vmatmul.mubr.f32.gmra.mrb[0].mxu0 %v307
        %v517 = vpop.f32.mrb[0].mxu0
        %v518 = vadd.f32 0.0, %v517
        %v519 = vpop.f32.mrb[0].mxu0
        %520 = vmatprep.mubr.f32.mxu0 0.0
        %521 = vmatmul.mubr.f32.gmra.mrb[0].mxu0 %v308
        %v522 = vpop.f32.mrb[0].mxu0
        %v523 = vadd.f32 0.0, %v522
        %v524 = vpop.f32.mrb[0].mxu0
        %525 = vmatprep.mubr.f32.mxu0 0.0
        %526 = vmatmul.mubr.f32.gmra.mrb[0].mxu0 %v309
        %v527 = vpop.f32.mrb[0].mxu0
        %v528 = vadd.f32 0.0, %v527
        %v529 = vpop.f32.mrb[0].mxu0
        %530 = vmatprep.mubr.f32.mxu0 0.0
        %531 = vmatmul.mubr.f32.gmra.mrb[0].mxu0 %v310
        %v532 = vpop.f32.mrb[0].mxu0
        %v533 = vadd.f32 0.0, %v532
        %v534 = vpop.f32.mrb[0].mxu0
        %535 = vmatprep.mubr.f32.mxu0 0.0
        %536 = vmatmul.mubr.f32.gmra.mrb[0].mxu0 %v311
        %v537 = vpop.f32.mrb[0].mxu0
        %v538 = vadd.f32 0.0, %v537
        %v539 = vpop.f32.mrb[0].mxu0
        %540 = vmatprep.mubr.f32.mxu0 0.0
        %541 = vmatmul.mubr.f32.gmra.mrb[0].mxu0 %v312
        %v542 = vpop.f32.mrb[0].mxu0
        %v543 = vadd.f32 0.0, %v542
        %v544 = vpop.f32.mrb[0].mxu0
        %545 = vmatprep.mubr.f32.mxu0 0.0
        %546 = vmatmul.mubr.f32.gmra.mrb[0].mxu0 %v313
        %v547 = vpop.f32.mrb[0].mxu0
        %v548 = vadd.f32 0.0, %v547
        %v549 = vpop.f32.mrb[0].mxu0
        %550 = vmatprep.mubr.f32.mxu0 0.0
        %551 = vmatmul.mubr.f32.gmra.mrb[0].mxu0 %v314
        %v552 = vpop.f32.mrb[0].mxu0
        %v553 = vadd.f32 0.0, %v552
        %v554 = vpop.f32.mrb[0].mxu0
        %555 = vmatprep.mubr.f32.mxu0 0.0
        %556 = vmatmul.mubr.f32.gmra.mrb[0].mxu0 %v315
        %v557 = vpop.f32.mrb[0].mxu0
        %v558 = vadd.f32 0.0, %v557
        %v559 = vpop.f32.mrb[0].mxu0
        %560 = vmatprep.mubr.f32.mxu0 0.0
        %561 = vmatmul.mubr.f32.gmra.mrb[0].mxu0 %v316
        %v562 = vpop.f32.mrb[0].mxu0
        %v563 = vadd.f32 0.0, %v562
        %v564 = vpop.f32.mrb[0].mxu0
        %565 = vmatprep.mubr.f32.mxu0 0.0
        %566 = vmatmul.mubr.f32.gmra.mrb[0].mxu0 %v317
        %v567 = vpop.f32.mrb[0].mxu0
        %v568 = vadd.f32 0.0, %v567
        %v569 = vpop.f32.mrb[0].mxu0
        %570 = vmatprep.mubr.f32.mxu0 0.0
        %571 = vmatmul.mubr.f32.gmra.mrb[0].mxu0 %v318
        %v572 = vpop.f32.mrb[0].mxu0
        %v573 = vadd.f32 0.0, %v572
        %v574 = vpop.f32.mrb[0].mxu0
        %575 = vmatprep.mubr.f32.mxu0 0.0
        %576 = vmatmul.mubr.f32.gmra.mrb[0].mxu0 %v319
        %v577 = vpop.f32.mrb[0].mxu0
        %v578 = vadd.f32 0.0, %v577
        %v579 = vpop.f32.mrb[0].mxu0
        %580 = vmatprep.mubr.f32.mxu0 0.0
        %581 = vmatmul.mubr.f32.gmra.mrb[0].mxu0 %v320
        %v582 = vpop.f32.mrb[0].mxu0
        %v583 = vadd.f32 0.0, %v582
        %v584 = vpop.f32.mrb[0].mxu0
        %585 = vmatprep.mubr.f32.mxu0 0.0
        %586 = vmatmul.mubr.f32.gmra.mrb[0].mxu0 %v321
        %v587 = vpop.f32.mrb[0].mxu0
        %v588 = vadd.f32 0.0, %v587
        %v589 = vpop.f32.mrb[0].mxu0
        %590 = vmatprep.mubr.f32.mxu0 0.0
        %591 = vmatmul.mubr.f32.gmra.mrb[0].mxu0 %v322
        %v592 = vpop.f32.mrb[0].mxu0
        %v593 = vadd.f32 0.0, %v592
        %v594 = vpop.f32.mrb[0].mxu0
        %595 = vmatprep.mubr.f32.mxu0 0.0
        %596 = vmatmul.mubr.f32.gmra.mrb[0].mxu0 %v323
        %v597 = vpop.f32.mrb[0].mxu0
        %v598 = vadd.f32 0.0, %v597
        %v599 = vpop.f32.mrb[0].mxu0
        %600 = vmatprep.mubr.f32.mxu0 0.0
        %601 = vmatmul.mubr.f32.gmra.mrb[0].mxu0 %v324
        %v602 = vpop.f32.mrb[0].mxu0
        %v603 = vadd.f32 0.0, %v602
        %v604 = vpop.f32.mrb[0].mxu0
        %605 = vmatprep.mubr.f32.mxu0 0.0
        %606 = vmatmul.mubr.f32.gmra.mrb[0].mxu0 %v325
        %v607 = vpop.f32.mrb[0].mxu0
        %v608 = vadd.f32 0.0, %v607
        %v609 = vpop.f32.mrb[0].mxu0
        %610 = vmatprep.mubr.f32.mxu0 0.0
        %611 = vmatmul.mubr.f32.gmra.mrb[0].mxu0 %v326
        %v612 = vpop.f32.mrb[0].mxu0
        %v613 = vadd.f32 0.0, %v612
        %v614 = vpop.f32.mrb[0].mxu0
        %615 = vmatprep.mubr.f32.mxu0 0.0
        %616 = vmatmul.mubr.f32.gmra.mrb[0].mxu0 %v327
        %v617 = vpop.f32.mrb[0].mxu0
        %v618 = vadd.f32 0.0, %v617
        %v619 = vpop.f32.mrb[0].mxu0
        %620 = vmatprep.mubr.f32.mxu0 0.0
        %621 = vmatmul.mubr.f32.gmra.mrb[0].mxu0 %v328
        %v622 = vpop.f32.mrb[0].mxu0
        %v623 = vadd.f32 0.0, %v622
        %v624 = vpop.f32.mrb[0].mxu0
        %625 = vmatprep.mubr.f32.mxu0 0.0
        %626 = vmatmul.mubr.f32.gmra.mrb[0].mxu0 %v329
        %v627 = vpop.f32.mrb[0].mxu0
        %v628 = vadd.f32 0.0, %v627
        %v629 = vpop.f32.mrb[0].mxu0
        %630 = vmatprep.mubr.f32.mxu0 0.0
        %631 = vmatmul.mubr.f32.gmra.mrb[0].mxu0 %v330
        %v632 = vpop.f32.mrb[0].mxu0
        %v633 = vadd.f32 0.0, %v632
        %v634 = vpop.f32.mrb[0].mxu0
        %635 = vmatprep.mubr.f32.mxu0 0.0
        %636 = vmatmul.mubr.f32.gmra.mrb[0].mxu0 %v331
        %v637 = vpop.f32.mrb[0].mxu0
        %v638 = vadd.f32 0.0, %v637
        %v639 = vpop.f32.mrb[0].mxu0
        %640 = vmatprep.mubr.f32.mxu0 0.0
        %641 = vmatmul.mubr.f32.gmra.mrb[0].mxu0 %v332
        %v642 = vpop.f32.mrb[0].mxu0
        %v643 = vadd.f32 0.0, %v642
        %v644 = vpop.f32.mrb[0].mxu0
        %645 = vmatprep.mubr.f32.mxu0 0.0
        %646 = vmatmul.mubr.f32.gmra.mrb[0].mxu0 %v333
        %v647 = vpop.f32.mrb[0].mxu0
        %v648 = vadd.f32 0.0, %v647
        %v649 = vpop.f32.mrb[0].mxu0
        %650 = vmatprep.mubr.f32.mxu0 0.0
        %651 = vmatmul.mubr.f32.gmra.mrb[0].mxu0 %v334
        %v652 = vpop.f32.mrb[0].mxu0
        %v653 = vadd.f32 0.0, %v652
        %v654 = vpop.f32.mrb[0].mxu0
        %655 = vmatprep.mubr.f32.mxu0 0.0
        %656 = vmatmul.mubr.f32.gmra.mrb[0].mxu0 %v335
        %v657 = vpop.f32.mrb[0].mxu0
        %v658 = vadd.f32 0.0, %v657
        %v659 = vpop.f32.mrb[0].mxu0
        %660 = vmatprep.mubr.f32.mxu0 0.0
        %661 = vmatmul.mubr.f32.gmra.mrb[0].mxu0 %v336
        %v662 = vpop.f32.mrb[0].mxu0
        %v663 = vadd.f32 0.0, %v662
        %v664 = vpop.f32.mrb[0].mxu0
        %665 = vmatprep.mubr.f32.mxu0 0.0
        %666 = vmatmul.mubr.f32.gmra.mrb[0].mxu0 %v337
        %v667 = vpop.f32.mrb[0].mxu0
        %v668 = vadd.f32 0.0, %v667
        %v669 = vpop.f32.mrb[0].mxu0
        %670 = vmatprep.mubr.f32.mxu0 0.0
        %671 = vmatmul.mubr.f32.gmra.mrb[0].mxu0 %v338
        %v672 = vpop.f32.mrb[0].mxu0
        %v673 = vadd.f32 0.0, %v672
        %v674 = vpop.f32.mrb[0].mxu0
        %675 = vmatprep.mubr.f32.mxu0 0.0
        %676 = vmatmul.mubr.f32.gmra.mrb[0].mxu0 %v339
        %v677 = vpop.f32.mrb[0].mxu0
        %v678 = vadd.f32 0.0, %v677
        %v679 = vpop.f32.mrb[0].mxu0
        %680 = vmatprep.mubr.f32.mxu0 0.0
        %681 = vmatmul.mubr.f32.gmra.mrb[0].mxu0 %v340
        %v682 = vpop.f32.mrb[0].mxu0
        %v683 = vadd.f32 0.0, %v682
        %v684 = vpop.f32.mrb[0].mxu0
        %685 = vmatprep.mubr.f32.mxu0 0.0
        %686 = vmatmul.mubr.f32.gmra.mrb[0].mxu0 %v341
        %v687 = vpop.f32.mrb[0].mxu0
        %v688 = vadd.f32 0.0, %v687
        %v689 = vpop.f32.mrb[0].mxu0
        %690 = vmatprep.mubr.f32.mxu0 0.0
        %691 = vmatmul.mubr.f32.gmra.mrb[0].mxu0 %v342
        %v692 = vpop.f32.mrb[0].mxu0
        %v693 = vadd.f32 0.0, %v692
        %v694 = vpop.f32.mrb[0].mxu0
        %695 = vmatprep.mubr.f32.mxu0 0.0
        %696 = vmatmul.mubr.f32.gmra.mrb[0].mxu0 %v343
        %v697 = vpop.f32.mrb[0].mxu0
        %v698 = vadd.f32 0.0, %v697
        %v699 = vpop.f32.mrb[0].mxu0
        %700 = vmatprep.mubr.f32.mxu0 0.0
        %701 = vmatmul.mubr.f32.gmra.mrb[0].mxu0 %v344
        %v702 = vpop.f32.mrb[0].mxu0
        %v703 = vadd.f32 0.0, %v702
        %v704 = vpop.f32.mrb[0].mxu0
        %705 = vmatprep.mubr.f32.mxu0 0.0
        %706 = vmatmul.mubr.f32.gmra.mrb[0].mxu0 %v345
        %v707 = vpop.f32.mrb[0].mxu0
        %v708 = vadd.f32 0.0, %v707
        %v709 = vpop.f32.mrb[0].mxu0
        %710 = vmatprep.mubr.f32.mxu0 0.0
        %711 = vmatmul.mubr.f32.gmra.mrb[0].mxu0 %v346
        %v712 = vpop.f32.mrb[0].mxu0
        %v713 = vadd.f32 0.0, %v712
        %v714 = vpop.f32.mrb[0].mxu0
        %715 = vmatprep.mubr.f32.mxu0 0.0
        %716 = vmatmul.mubr.f32.gmra.mrb[0].mxu0 %v347
        %v717 = vpop.f32.mrb[0].mxu0
        %v718 = vadd.f32 0.0, %v717
        %v719 = vpop.f32.mrb[0].mxu0
        %720 = vmatprep.mubr.f32.mxu0 0.0
        %721 = vmatmul.mubr.f32.gmra.mrb[0].mxu0 %v348
        %v722 = vpop.f32.mrb[0].mxu0
        %v723 = vadd.f32 0.0, %v722
        %v724 = vpop.f32.mrb[0].mxu0
        %725 = vmatprep.mubr.f32.mxu0 0.0
        %726 = vmatmul.mubr.f32.gmra.mrb[0].mxu0 %v349
        %v727 = vpop.f32.mrb[0].mxu0
        %v728 = vadd.f32 0.0, %v727
        %v729 = vpop.f32.mrb[0].mxu0
        %730 = vmatprep.mubr.f32.mxu0 0.0
        %731 = vmatmul.mubr.f32.gmra.mrb[0].mxu0 %v350
        %v732 = vpop.f32.mrb[0].mxu0
        %v733 = vadd.f32 0.0, %v732
        %v734 = vpop.f32.mrb[0].mxu0
        %735 = vmatprep.mubr.f32.mxu0 0.0
        %736 = vmatmul.mubr.f32.gmra.mrb[0].mxu0 %v351
        %v737 = vpop.f32.mrb[0].mxu0
        %v738 = vadd.f32 0.0, %v737
        %v739 = vpop.f32.mrb[0].mxu0
        %740 = vmatprep.mubr.f32.mxu0 0.0
        %741 = vmatmul.mubr.f32.gmra.mrb[0].mxu0 %v352
        %v742 = vpop.f32.mrb[0].mxu0
        %v743 = vadd.f32 0.0, %v742
        %v744 = vpop.f32.mrb[0].mxu0
        %745 = vmatprep.mubr.f32.mxu0 0.0
        %746 = vmatmul.mubr.f32.gmra.mrb[0].mxu0 %v353
        %v747 = vpop.f32.mrb[0].mxu0
        %v748 = vadd.f32 0.0, %v747
        %v749 = vpop.f32.mrb[0].mxu0
        %750 = vmatprep.mubr.f32.mxu0 0.0
        %751 = vmatmul.mubr.f32.gmra.mrb[0].mxu0 %v354
        %v752 = vpop.f32.mrb[0].mxu0
        %v753 = vadd.f32 0.0, %v752
        %v754 = vpop.f32.mrb[0].mxu0
        %755 = vmatprep.mubr.f32.mxu0 0.0
        %756 = vmatmul.mubr.f32.gmra.mrb[0].mxu0 %v355
        %v757 = vpop.f32.mrb[0].mxu0
        %v758 = vadd.f32 0.0, %v757
        %v759 = vpop.f32.mrb[0].mxu0
        %760 = vmatprep.mubr.f32.mxu0 0.0
        %761 = vmatmul.mubr.f32.gmra.mrb[0].mxu0 %v356
        %v762 = vpop.f32.mrb[0].mxu0
        %v763 = vadd.f32 0.0, %v762
        %v764 = vpop.f32.mrb[0].mxu0
        %765 = vmatprep.mubr.f32.mxu0 0.0
        %766 = vmatmul.mubr.f32.gmra.mrb[0].mxu0 %v357
        %v767 = vpop.f32.mrb[0].mxu0
        %v768 = vadd.f32 0.0, %v767
        %v769 = vpop.f32.mrb[0].mxu0
        %770 = vmatprep.mubr.f32.mxu0 0.0
        %771 = vmatmul.mubr.f32.gmra.mrb[0].mxu0 %v358
        %v772 = vpop.f32.mrb[0].mxu0
        %v773 = vadd.f32 0.0, %v772
        %v774 = vpop.f32.mrb[0].mxu0
        %775 = vmatprep.mubr.f32.mxu0 0.0
        %776 = vmatmul.mubr.f32.gmra.mrb[0].mxu0 %v359
        %v777 = vpop.f32.mrb[0].mxu0
        %v778 = vadd.f32 0.0, %v777
        %v779 = vpop.f32.mrb[0].mxu0
        %780 = vmatprep.mubr.f32.mxu0 0.0
        %781 = vmatmul.mubr.f32.gmra.mrb[0].mxu0 %v360
        %v782 = vpop.f32.mrb[0].mxu0
        %v783 = vadd.f32 0.0, %v782
        %v784 = vpop.f32.mrb[0].mxu0
        %785 = vmatprep.mubr.f32.mxu0 0.0
        %786 = vmatmul.mubr.f32.gmra.mrb[0].mxu0 %v361
        %v787 = vpop.f32.mrb[0].mxu0
        %v788 = vadd.f32 0.0, %v787
        %v789 = vpop.f32.mrb[0].mxu0
        %790 = vmatprep.mubr.f32.mxu0 0.0
        %791 = vmatmul.mubr.f32.gmra.mrb[0].mxu0 %v362
        %v792 = vpop.f32.mrb[0].mxu0
        %v793 = vadd.f32 0.0, %v792
        %v794 = vpop.f32.mrb[0].mxu0
        %795 = vmatprep.mubr.f32.mxu0 0.0
        %796 = vmatmul.mubr.f32.gmra.mrb[0].mxu0 %v363
        %v797 = vpop.f32.mrb[0].mxu0
        %v798 = vadd.f32 0.0, %v797
        %v799 = vpop.f32.mrb[0].mxu0
        %800 = vmatprep.mubr.f32.mxu0 0.0
        %801 = vmatmul.mubr.f32.gmra.mrb[0].mxu0 %v364
        %v802 = vpop.f32.mrb[0].mxu0
        %v803 = vadd.f32 0.0, %v802
        %v804 = vpop.f32.mrb[0].mxu0
        %805 = vmatprep.mubr.f32.mxu0 0.0
        %806 = vmatmul.mubr.f32.gmra.mrb[0].mxu0 %v365
        %v807 = vpop.f32.mrb[0].mxu0
        %v808 = vadd.f32 0.0, %v807
        %v809 = vpop.f32.mrb[0].mxu0
        %810 = vmatprep.mubr.f32.mxu0 0.0
        %811 = vmatmul.mubr.f32.gmra.mrb[0].mxu0 %v366
        %v812 = vpop.f32.mrb[0].mxu0
        %v813 = vadd.f32 0.0, %v812
        %v814 = vpop.f32.mrb[0].mxu0
        %815 = vmatprep.mubr.f32.mxu0 0.0
        %816 = vmatmul.mubr.f32.gmra.mrb[0].mxu0 %v367
        %v817 = vpop.f32.mrb[0].mxu0
        %v818 = vadd.f32 0.0, %v817
        %v819 = vpop.f32.mrb[0].mxu0
        %820 = vmatprep.mubr.f32.mxu0 0.0
        %821 = vmatmul.mubr.f32.gmra.mrb[0].mxu0 %v368
        %v822 = vpop.f32.mrb[0].mxu0
        %v823 = vadd.f32 0.0, %v822
        %v824 = vpop.f32.mrb[0].mxu0
        %825 = vmatprep.mubr.f32.mxu0 0.0
        %826 = vmatmul.mubr.f32.gmra.mrb[0].mxu0 %v369
        %v827 = vpop.f32.mrb[0].mxu0
        %v828 = vadd.f32 0.0, %v827
        %v829 = vpop.f32.mrb[0].mxu0
        %830 = vmatprep.mubr.f32.mxu0 0.0
        %831 = vmatmul.mubr.f32.gmra.mrb[0].mxu0 %v370
        %v832 = vpop.f32.mrb[0].mxu0
        %v833 = vadd.f32 0.0, %v832
        %v834 = vpop.f32.mrb[0].mxu0
        %835 = vmatprep.mubr.f32.mxu0 0.0
        %836 = vmatmul.mubr.f32.gmra.mrb[0].mxu0 %v371
        %v837 = vpop.f32.mrb[0].mxu0
        %v838 = vadd.f32 0.0, %v837
        %v839 = vpop.f32.mrb[0].mxu0
        %840 = vmatprep.mubr.f32.mxu0 0.0
        %841 = vmatmul.mubr.f32.gmra.mrb[0].mxu0 %v372
        %v842 = vpop.f32.mrb[0].mxu0
        %v843 = vadd.f32 0.0, %v842
        %v844 = vpop.f32.mrb[0].mxu0
        %845 = vmatprep.mubr.f32.mxu0 0.0
        %846 = vmatmul.mubr.f32.gmra.mrb[0].mxu0 %v373
        %v847 = vpop.f32.mrb[0].mxu0
        %v848 = vadd.f32 0.0, %v847
        %v849 = vpop.f32.mrb[0].mxu0
        %850 = vmatprep.mubr.f32.mxu0 0.0
        %851 = vmatmul.mubr.f32.gmra.mrb[0].mxu0 %v374
        %v852 = vpop.f32.mrb[0].mxu0
        %v853 = vadd.f32 0.0, %v852
        %v854 = vpop.f32.mrb[0].mxu0
        %855 = vmatprep.mubr.f32.mxu0 0.0
        %856 = vmatmul.mubr.f32.gmra.mrb[0].mxu0 %v375
        %v857 = vpop.f32.mrb[0].mxu0
        %v858 = vadd.f32 0.0, %v857
        %v859 = vpop.f32.mrb[0].mxu0
        %860 = vmatprep.mubr.f32.mxu0 0.0
        %861 = vmatmul.mubr.f32.gmra.mrb[0].mxu0 %v376
        %v862 = vpop.f32.mrb[0].mxu0
        %v863 = vadd.f32 0.0, %v862
        %v864 = vpop.f32.mrb[0].mxu0
        %865 = vmatprep.mubr.f32.mxu0 0.0
        %866 = vmatmul.mubr.f32.gmra.mrb[0].mxu0 %v377
        %v867 = vpop.f32.mrb[0].mxu0
        %v868 = vadd.f32 0.0, %v867
        %v869 = vpop.f32.mrb[0].mxu0
        %870 = vmatprep.mubr.f32.mxu0 0.0
        %871 = vmatmul.mubr.f32.gmra.mrb[0].mxu0 %v378
        %v872 = vpop.f32.mrb[0].mxu0
        %v873 = vadd.f32 0.0, %v872
        %v874 = vpop.f32.mrb[0].mxu0
        %875 = vmatprep.mubr.f32.mxu0 0.0
        %876 = vmatmul.mubr.f32.gmra.mrb[0].mxu0 %v379
        %v877 = vpop.f32.mrb[0].mxu0
        %v878 = vadd.f32 0.0, %v877
        %v879 = vpop.f32.mrb[0].mxu0
        %880 = vmatprep.mubr.f32.mxu0 0.0
        %881 = vmatmul.mubr.f32.gmra.mrb[0].mxu0 %v380
        %v882 = vpop.f32.mrb[0].mxu0
        %v883 = vadd.f32 0.0, %v882
        %v884 = vpop.f32.mrb[0].mxu0
        %885 = vmatprep.mubr.f32.mxu0 0.0
        %886 = vmatmul.mubr.f32.gmra.mrb[0].mxu0 %v381
        %v887 = vpop.f32.mrb[0].mxu0
        %v888 = vadd.f32 0.0, %v887
        %v889 = vpop.f32.mrb[0].mxu0
        %890 = vmatprep.mubr.f32.mxu0 0.0
        %891 = vmatmul.mubr.f32.gmra.mrb[0].mxu0 %v382
        %v892 = vpop.f32.mrb[0].mxu0
        %v893 = vadd.f32 0.0, %v892
        %v894 = vpop.f32.mrb[0].mxu0
        %895 = vmatprep.mubr.f32.mxu0 0.0
        %896 = vmatmul.mubr.f32.gmra.mrb[0].mxu0 %v383
        %v897 = vpop.f32.mrb[0].mxu0
        %v898 = vadd.f32 0.0, %v897
        %v899 = vpop.f32.mrb[0].mxu0
        %900 = vmatprep.mubr.f32.mxu0 0.0
        %901 = vmatmul.mubr.f32.gmra.mrb[0].mxu0 %v384
        %v902 = vpop.f32.mrb[0].mxu0
        %v903 = vadd.f32 0.0, %v902
        %v904 = vpop.f32.mrb[0].mxu0
        %905 = vmatprep.mubr.f32.mxu0 0.0
        %906 = vmatmul.mubr.f32.gmra.mrb[0].mxu0 %v385
        %v907 = vpop.f32.mrb[0].mxu0
        %v908 = vadd.f32 0.0, %v907
        %v909 = vpop.f32.mrb[0].mxu0
        %910 = vmatprep.mubr.f32.mxu0 0.0
        %911 = vmatmul.mubr.f32.gmra.mrb[0].mxu0 %v386
        %v912 = vpop.f32.mrb[0].mxu0
        %v913 = vadd.f32 0.0, %v912
        %v914 = vpop.f32.mrb[0].mxu0
        %915 = vmatprep.mubr.f32.mxu0 0.0
        %916 = vmatmul.mubr.f32.gmra.mrb[0].mxu0 %v387
        %v917 = vpop.f32.mrb[0].mxu0
        %v918 = vadd.f32 0.0, %v917
        %v919 = vpop.f32.mrb[0].mxu0
        %920 = vmatprep.mubr.f32.mxu0 0.0
        %921 = vmatmul.mubr.f32.gmra.mrb[0].mxu0 %v388
        %v922 = vpop.f32.mrb[0].mxu0
        %v923 = vadd.f32 0.0, %v922
        %v924 = vpop.f32.mrb[0].mxu0
        %925 = vmatprep.mubr.f32.mxu0 0.0
        %926 = vmatmul.mubr.f32.gmra.mrb[0].mxu0 %v389
        %v927 = vpop.f32.mrb[0].mxu0
        %v928 = vadd.f32 0.0, %v927
        %v929 = vpop.f32.mrb[0].mxu0
        %930 = vmatprep.mubr.f32.mxu0 0.0
        %931 = vmatmul.mubr.f32.gmra.mrb[0].mxu0 %v390
        %v932 = vpop.f32.mrb[0].mxu0
        %v933 = vadd.f32 0.0, %v932
        %v934 = vpop.f32.mrb[0].mxu0
        %935 = vmatprep.mubr.f32.mxu0 0.0
        %936 = vmatmul.mubr.f32.gmra.mrb[0].mxu0 %v391
        %v937 = vpop.f32.mrb[0].mxu0
        %v938 = vadd.f32 0.0, %v937
        %v939 = vpop.f32.mrb[0].mxu0
        %940 = vmatprep.mubr.f32.mxu0 0.0
        %941 = vmatmul.mubr.f32.gmra.mrb[0].mxu0 %v392
        %v942 = vpop.f32.mrb[0].mxu0
        %v943 = vadd.f32 0.0, %v942
        %v944 = vpop.f32.mrb[0].mxu0
        %945 = vmatprep.mubr.f32.mxu0 0.0
        %946 = vmatmul.mubr.f32.gmra.mrb[0].mxu0 %v393
        %v947 = vpop.f32.mrb[0].mxu0
        %v948 = vadd.f32 0.0, %v947
        %v949 = vpop.f32.mrb[0].mxu0
        %950 = vmatprep.mubr.f32.mxu0 0.0
        %951 = vmatmul.mubr.f32.gmra.mrb[0].mxu0 %v394
        %v952 = vpop.f32.mrb[0].mxu0
        %v953 = vadd.f32 0.0, %v952
        %v954 = vpop.f32.mrb[0].mxu0
        %955 = vmatprep.mubr.f32.mxu0 0.0
        %956 = vmatmul.mubr.f32.gmra.mrb[0].mxu0 %v395
        %v957 = vpop.f32.mrb[0].mxu0
        %v958 = vadd.f32 0.0, %v957
        %v959 = vpop.f32.mrb[0].mxu0
        %960 = vmatprep.mubr.f32.mxu0 0.0
        %961 = vmatmul.mubr.f32.gmra.mrb[0].mxu0 %v396
        %v962 = vpop.f32.mrb[0].mxu0
        %v963 = vadd.f32 0.0, %v962
        %v964 = vpop.f32.mrb[0].mxu0
        %965 = vmatprep.mubr.f32.mxu0 0.0
        %966 = vmatmul.mubr.f32.gmra.mrb[0].mxu0 %v397
        %v967 = vpop.f32.mrb[0].mxu0
        %v968 = vadd.f32 0.0, %v967
        %v969 = vpop.f32.mrb[0].mxu0
        %970 = vmatprep.mubr.f32.mxu0 0.0
        %971 = vmatmul.mubr.f32.gmra.mrb[0].mxu0 %v398
        %v972 = vpop.f32.mrb[0].mxu0
        %v973 = vadd.f32 0.0, %v972
        %v974 = vpop.f32.mrb[0].mxu0
        %975 = vmatprep.mubr.f32.mxu0 0.0
        %976 = vmatmul.mubr.f32.gmra.mrb[0].mxu0 %v399
        %v977 = vpop.f32.mrb[0].mxu0
        %v978 = vadd.f32 0.0, %v977
        %v979 = vpop.f32.mrb[0].mxu0
        %980 = vmatprep.mubr.f32.mxu0 0.0
        %981 = vmatmul.mubr.f32.gmra.mrb[0].mxu0 %v400
        %v982 = vpop.f32.mrb[0].mxu0
        %v983 = vadd.f32 0.0, %v982
        %v984 = vpop.f32.mrb[0].mxu0
        %985 = vmatprep.mubr.f32.mxu0 0.0
        %986 = vmatmul.mubr.f32.gmra.mrb[0].mxu0 %v401
        %v987 = vpop.f32.mrb[0].mxu0
        %v988 = vadd.f32 0.0, %v987
        %v989 = vpop.f32.mrb[0].mxu0
        %990 = vmatprep.mubr.f32.mxu0 0.0
        %991 = vmatmul.mubr.f32.gmra.mrb[0].mxu0 %v402
        %v992 = vpop.f32.mrb[0].mxu0
        %v993 = vadd.f32 0.0, %v992
        %v994 = vpop.f32.mrb[0].mxu0
        %995 = vmatprep.mubr.f32.mxu0 0.0
        %996 = vmatmul.mubr.f32.gmra.mrb[0].mxu0 %v403
        %v997 = vpop.f32.mrb[0].mxu0
        %v998 = vadd.f32 0.0, %v997
        %v999 = vpop.f32.mrb[0].mxu0
        %1000 = vmatprep.mubr.f32.mxu0 0.0
        %1001 = vmatmul.mubr.f32.gmra.mrb[0].mxu0 %v404
        %v1002 = vpop.f32.mrb[0].mxu0
        %v1003 = vadd.f32 0.0, %v1002
        %v1004 = vpop.f32.mrb[0].mxu0
        %1005 = vmatprep.mubr.f32.mxu0 0.0
        %1006 = vmatmul.mubr.f32.gmra.mrb[0].mxu0 %v405
        %v1007 = vpop.f32.mrb[0].mxu0
        %v1008 = vadd.f32 0.0, %v1007
        %v1009 = vpop.f32.mrb[0].mxu0
        %1010 = vmatprep.mubr.f32.mxu0 0.0
        %1011 = vmatmul.mubr.f32.gmra.mrb[0].mxu0 %v406
        %v1012 = vpop.f32.mrb[0].mxu0
        %v1013 = vadd.f32 0.0, %v1012
        %v1014 = vpop.f32.mrb[0].mxu0
        %1015 = vmatprep.mubr.f32.mxu0 0.0
        %1016 = vmatmul.mubr.f32.gmra.mrb[0].mxu0 %v407
        %v1017 = vpop.f32.mrb[0].mxu0
        %v1018 = vadd.f32 0.0, %v1017
        %v1019 = vpop.f32.mrb[0].mxu0
        %1020 = vmatprep.mubr.f32.mxu0 0.0
        %1021 = vmatmul.mubr.f32.gmra.mrb[0].mxu0 %v408
        %v1022 = vpop.f32.mrb[0].mxu0
        %v1023 = vadd.f32 0.0, %v1022
        %v1024 = vpop.f32.mrb[0].mxu0
        %1025 = vmatprep.mubr.f32.mxu0 0.0
        %1026 = vmatmul.mubr.f32.gmra.mrb[0].mxu0 %v409
        %v1027 = vpop.f32.mrb[0].mxu0
        %v1028 = vadd.f32 0.0, %v1027
        %v1029 = vpop.f32.mrb[0].mxu0
        %1030 = vmatprep.mubr.f32.mxu0 0.0
        %1031 = vmatmul.mubr.f32.gmra.mrb[0].mxu0 %v410
        %v1032 = vpop.f32.mrb[0].mxu0
        %v1033 = vadd.f32 0.0, %v1032
        %v1034 = vpop.f32.mrb[0].mxu0
        %1035 = vmatprep.mubr.f32.mxu0 0.0
        %1036 = vmatmul.mubr.f32.gmra.mrb[0].mxu0 %v411
        %v1037 = vpop.f32.mrb[0].mxu0
        %v1038 = vadd.f32 0.0, %v1037
        %v1039 = vpop.f32.mrb[0].mxu0
        %1040 = vmatprep.mubr.f32.mxu0 0.0
        %1041 = vmatmul.mubr.f32.gmra.mrb[0].mxu0 %v412
        %v1042 = vpop.f32.mrb[0].mxu0
        %v1043 = vadd.f32 0.0, %v1042
        %v1044 = vpop.f32.mrb[0].mxu0
        %1045 = vmatprep.mubr.f32.mxu0 0.0
        %1046 = vmatmul.mubr.f32.gmra.mrb[0].mxu0 %v413
        %v1047 = vpop.f32.mrb[0].mxu0
        %v1048 = vadd.f32 0.0, %v1047
        %v1049 = vpop.f32.mrb[0].mxu0
        %1050 = vmatprep.mubr.f32.mxu0 0.0
        %1051 = vmatmul.mubr.f32.gmra.mrb[0].mxu0 %v414
        %v1052 = vpop.f32.mrb[0].mxu0
        %v1053 = vadd.f32 0.0, %v1052
        %v1054 = vpop.f32.mrb[0].mxu0
        %1055 = vmatprep.mubr.f32.mxu0 0.0
        %1056 = vmatmul.mubr.f32.gmra.mrb[0].mxu0 %v415
        %v1057 = vpop.f32.mrb[0].mxu0
        %v1058 = vadd.f32 0.0, %v1057
        %v1059 = vpop.f32.mrb[0].mxu0
        %1060 = vmatprep.mubr.f32.mxu0 0.0
        %1061 = vmatmul.mubr.f32.gmra.mrb[0].mxu0 %v416
        %v1062 = vpop.f32.mrb[0].mxu0
        %v1063 = vadd.f32 0.0, %v1062
        %v1064 = vpop.f32.mrb[0].mxu0
        %1065 = vmatprep.mubr.f32.mxu0 0.0
        %1066 = vmatmul.mubr.f32.gmra.mrb[0].mxu0 %v417
        %v1067 = vpop.f32.mrb[0].mxu0
        %v1068 = vadd.f32 0.0, %v1067
        %v1069 = vpop.f32.mrb[0].mxu0
        %1070 = vmatprep.mubr.f32.mxu0 0.0
        %1071 = vmatmul.mubr.f32.gmra.mrb[0].mxu0 %v418
        %v1072 = vpop.f32.mrb[0].mxu0
        %v1073 = vadd.f32 0.0, %v1072
        %v1074 = vpop.f32.mrb[0].mxu0
        %1075 = vmatprep.mubr.f32.mxu0 0.0
        %1076 = vmatmul.mubr.f32.gmra.mrb[0].mxu0 %v419
        %v1077 = vpop.f32.mrb[0].mxu0
        %v1078 = vadd.f32 0.0, %v1077
        %v1079 = vpop.f32.mrb[0].mxu0
        %1080 = vmatprep.mubr.f32.mxu0 0.0
        %1081 = vmatmul.mubr.f32.gmra.mrb[0].mxu0 %v420
        %v1082 = vpop.f32.mrb[0].mxu0
        %v1083 = vadd.f32 0.0, %v1082
        %v1084 = vpop.f32.mrb[0].mxu0
        %1085 = vmatprep.mubr.f32.mxu0 0.0
        %1086 = vmatmul.mubr.f32.gmra.mrb[0].mxu0 %v421
        %v1087 = vpop.f32.mrb[0].mxu0
        %v1088 = vadd.f32 0.0, %v1087
        %v1089 = vpop.f32.mrb[0].mxu0
        %1090 = vmatprep.mubr.f32.mxu0 0.0
        %1091 = vmatmul.mubr.f32.gmra.mrb[0].mxu0 %v422
        %v1092 = vpop.f32.mrb[0].mxu0
        %v1093 = vadd.f32 0.0, %v1092
        %v1094 = vpop.f32.mrb[0].mxu0
        %1095 = vmatprep.mubr.f32.mxu0 0.0
        %1096 = vmatmul.mubr.f32.gmra.mrb[0].mxu0 %v423
        %v1097 = vpop.f32.mrb[0].mxu0
        %v1098 = vadd.f32 0.0, %v1097
        %v1099 = vpop.f32.mrb[0].mxu0
        %1100 = vmatprep.mubr.f32.mxu0 0.0
        %1101 = vmatmul.mubr.f32.gmra.mrb[0].mxu0 %v424
        %v1102 = vpop.f32.mrb[0].mxu0
        %v1103 = vadd.f32 0.0, %v1102
        %v1104 = vpop.f32.mrb[0].mxu0
        %1105 = vmatprep.mubr.f32.mxu0 0.0
        %1106 = vmatmul.mubr.f32.gmra.mrb[0].mxu0 %v425
        %v1107 = vpop.f32.mrb[0].mxu0
        %v1108 = vadd.f32 0.0, %v1107
        %v1109 = vpop.f32.mrb[0].mxu0
        %1110 = vmatprep.mubr.f32.mxu0 0.0
        %1111 = vmatmul.mubr.f32.gmra.mrb[0].mxu0 %v426
        %v1112 = vpop.f32.mrb[0].mxu0
        %v1113 = vadd.f32 0.0, %v1112
        %v1114 = vpop.f32.mrb[0].mxu0
        %1115 = vmatprep.mubr.f32.mxu0 0.0
        %1116 = vmatmul.mubr.f32.gmra.mrb[0].mxu0 %v427
        %v1117 = vpop.f32.mrb[0].mxu0
        %v1118 = vadd.f32 0.0, %v1117
        %v1119 = vpop.f32.mrb[0].mxu0
        %1120 = vmatprep.mubr.f32.mxu0 0.0
        %1121 = vmatmul.mubr.f32.gmra.mrb[0].mxu0 %v428
        %v1122 = vpop.f32.mrb[0].mxu0
        %v1123 = vadd.f32 0.0, %v1122
        %v1124 = vpop.f32.mrb[0].mxu0
        %1125 = vmatprep.mubr.f32.mxu0 0.0
        %1126 = vmatmul.mubr.f32.gmra.mrb[0].mxu0 %v429
        %v1127 = vpop.f32.mrb[0].mxu0
        %v1128 = vadd.f32 0.0, %v1127
        %v1129 = vpop.f32.mrb[0].mxu0
        %1130 = vmatprep.mubr.f32.mxu0 0.0
        %1131 = vmatmul.mubr.f32.gmra.mrb[0].mxu0 %v430
        %v1132 = vpop.f32.mrb[0].mxu0
        %v1133 = vadd.f32 0.0, %v1132
        %v1134 = vpop.f32.mrb[0].mxu0
        %1135 = vmatprep.mubr.f32.mxu0 0.0
        %1136 = vmatmul.mubr.f32.gmra.mrb[0].mxu0 %v431
        %v1137 = vpop.f32.mrb[0].mxu0
        %v1138 = vadd.f32 0.0, %v1137
        %v1139 = vpop.f32.mrb[0].mxu0
        %1140 = vmatprep.mubr.f32.mxu0 0.0
        %1141 = vmatmul.mubr.f32.gmra.mrb[0].mxu0 %v432
        %v1142 = vpop.f32.mrb[0].mxu0
        %v1143 = vadd.f32 0.0, %v1142
        %v1144 = vpop.f32.mrb[0].mxu0
        %1145 = vmatprep.mubr.f32.mxu0 0.0
        %1146 = vmatmul.mubr.f32.gmra.mrb[0].mxu0 %v433
        %v1147 = vpop.f32.mrb[0].mxu0
        %v1148 = vadd.f32 0.0, %v1147
        %v1149 = vpop.f32.mrb[0].mxu0
        %1150 = vmatprep.mubr.f32.mxu0 0.0
        %1151 = vmatmul.mubr.f32.gmra.mrb[0].mxu0 %v434
        %v1152 = vpop.f32.mrb[0].mxu0
        %v1153 = vadd.f32 0.0, %v1152
        %v1154 = vpop.f32.mrb[0].mxu0
        %1155 = vdwg.mxu0
        %v1156 = vld [vmem:[%s265] sm:$0xff]
        %v1158 = vcombine.high %v1156, %v1156
        %v1160 = vunpack.c.l.s4 1966171168
        %v1161 = vunpack.c.0.s8 %v1160
        %v1162 = vlaneseq
        %v1163 = vshrl.u32 %v1162, 7
        %v1164 = vsub.s32 %v1161, %v1163
        %v1165 = vrot.slane %v1156, %v1164
        %v1167 = vunpack.c.l.s4 1966171168
        %v1168 = vunpack.c.0.s8 %v1167
        %v1169 = vlaneseq
        %v1170 = vshrl.u32 %v1169, 7
        %v1171 = vsub.s32 %v1168, %v1170
        %v1172 = vrot.slane %v1158, %v1171
        %v1173 = vcombine.high %v1165, %v1165
        %v1174 = vcombine.high %v1172, %v1172
        %v1176 = vunpack.c.l.s4 1966171168
        %v1177 = vunpack.c.0.s8 %v1176
        %v1178 = vlaneseq
        %v1179 = vshrl.u32 %v1178, 7
        %v1180 = vsub.s32 %v1177, %v1179
        %v1181 = vrot.slane %v1165, %v1180
        %v1183 = vunpack.c.l.s4 1966171168
        %v1184 = vunpack.c.0.s8 %v1183
        %v1185 = vlaneseq
        %v1186 = vshrl.u32 %v1185, 7
        %v1187 = vsub.s32 %v1184, %v1186
        %v1188 = vrot.slane %v1172, %v1187
        %v1190 = vunpack.c.l.s4 1966171168
        %v1191 = vunpack.c.0.s8 %v1190
        %v1192 = vlaneseq
        %v1193 = vshrl.u32 %v1192, 7
        %v1194 = vsub.s32 %v1191, %v1193
        %v1195 = vrot.slane %v1173, %v1194
        %v1197 = vunpack.c.l.s4 1966171168
        %v1198 = vunpack.c.0.s8 %v1197
        %v1199 = vlaneseq
        %v1200 = vshrl.u32 %v1199, 7
        %v1201 = vsub.s32 %v1198, %v1200
        %v1202 = vrot.slane %v1174, %v1201
        %v1203 = vcombine.high %v1181, %v1181
        %v1204 = vcombine.high %v1188, %v1188
        %v1205 = vcombine.high %v1195, %v1195
        %v1206 = vcombine.high %v1202, %v1202
        %v1207 = vlaneseq
        %v1208 = vshrl.u32 %v1207, 7
        %v1209 = vsub.s32 0, %v1208
        %v1210 = vrot.slane %v1181, %v1209
        %v1211 = vlaneseq
        %v1212 = vshrl.u32 %v1211, 7
        %v1213 = vsub.s32 0, %v1212
        %v1214 = vrot.slane %v1195, %v1213
        %v1215 = vlaneseq
        %v1216 = vshrl.u32 %v1215, 7
        %v1217 = vsub.s32 0, %v1216
        %v1218 = vrot.slane %v1203, %v1217
        %v1219 = vlaneseq
        %v1220 = vshrl.u32 %v1219, 7
        %v1221 = vsub.s32 0, %v1220
        %v1222 = vrot.slane %v1205, %v1221
        %v1223 = vlaneseq
        %v1224 = vshrl.u32 %v1223, 7
        %v1225 = vsub.s32 0, %v1224
        %v1226 = vrot.slane %v1188, %v1225
        %v1227 = vlaneseq
        %v1228 = vshrl.u32 %v1227, 7
        %v1229 = vsub.s32 0, %v1228
        %v1230 = vrot.slane %v1202, %v1229
        %v1231 = vlaneseq
        %v1232 = vshrl.u32 %v1231, 7
        %v1233 = vsub.s32 0, %v1232
        %v1234 = vrot.slane %v1204, %v1233
        %v1235 = vlaneseq
        %v1236 = vshrl.u32 %v1235, 7
        %v1237 = vsub.s32 0, %v1236
        %v1238 = vrot.slane %v1206, %v1237
        %v1247 = vadd.f32 %v518, %v1210
        %v1248 = vadd.f32 %v523, %v1210
        %v1249 = vadd.f32 %v528, %v1210
        %v1250 = vadd.f32 %v533, %v1210
        %v1251 = vadd.f32 %v538, %v1210
        %v1252 = vadd.f32 %v543, %v1210
        %v1253 = vadd.f32 %v548, %v1210
        %v1254 = vadd.f32 %v553, %v1210
        %v1255 = vadd.f32 %v558, %v1210
        %v1256 = vadd.f32 %v563, %v1210
        %v1257 = vadd.f32 %v568, %v1210
        %v1258 = vadd.f32 %v573, %v1210
        %v1259 = vadd.f32 %v578, %v1210
        %v1260 = vadd.f32 %v583, %v1210
        %v1261 = vadd.f32 %v588, %v1210
        %v1262 = vadd.f32 %v593, %v1210
        %v1263 = vadd.f32 %v598, %v1214
        %v1264 = vadd.f32 %v603, %v1214
        %v1265 = vadd.f32 %v608, %v1214
        %v1266 = vadd.f32 %v613, %v1214
        %v1267 = vadd.f32 %v618, %v1214
        %v1268 = vadd.f32 %v623, %v1214
        %v1269 = vadd.f32 %v628, %v1214
        %v1270 = vadd.f32 %v633, %v1214
        %v1271 = vadd.f32 %v638, %v1214
        %v1272 = vadd.f32 %v643, %v1214
        %v1273 = vadd.f32 %v648, %v1214
        %v1274 = vadd.f32 %v653, %v1214
        %v1275 = vadd.f32 %v658, %v1214
        %v1276 = vadd.f32 %v663, %v1214
        %v1277 = vadd.f32 %v668, %v1214
        %v1278 = vadd.f32 %v673, %v1214
        %v1279 = vadd.f32 %v678, %v1218
        %v1280 = vadd.f32 %v683, %v1218
        %v1281 = vadd.f32 %v688, %v1218
        %v1282 = vadd.f32 %v693, %v1218
        %v1283 = vadd.f32 %v698, %v1218
        %v1284 = vadd.f32 %v703, %v1218
        %v1285 = vadd.f32 %v708, %v1218
        %v1286 = vadd.f32 %v713, %v1218
        %v1287 = vadd.f32 %v718, %v1218
        %v1288 = vadd.f32 %v723, %v1218
        %v1289 = vadd.f32 %v728, %v1218
        %v1290 = vadd.f32 %v733, %v1218
        %v1291 = vadd.f32 %v738, %v1218
        %v1292 = vadd.f32 %v743, %v1218
        %v1293 = vadd.f32 %v748, %v1218
        %v1294 = vadd.f32 %v753, %v1218
        %v1295 = vadd.f32 %v758, %v1222
        %v1296 = vadd.f32 %v763, %v1222
        %v1297 = vadd.f32 %v768, %v1222
        %v1298 = vadd.f32 %v773, %v1222
        %v1299 = vadd.f32 %v778, %v1222
        %v1300 = vadd.f32 %v783, %v1222
        %v1301 = vadd.f32 %v788, %v1222
        %v1302 = vadd.f32 %v793, %v1222
        %v1303 = vadd.f32 %v798, %v1222
        %v1304 = vadd.f32 %v803, %v1222
        %v1305 = vadd.f32 %v808, %v1222
        %v1306 = vadd.f32 %v813, %v1222
        %v1307 = vadd.f32 %v818, %v1222
        %v1308 = vadd.f32 %v823, %v1222
        %v1309 = vadd.f32 %v828, %v1222
        %v1310 = vadd.f32 %v833, %v1222
        %v1311 = vadd.f32 %v838, %v1226
        %v1312 = vadd.f32 %v843, %v1226
        %v1313 = vadd.f32 %v848, %v1226
        %v1314 = vadd.f32 %v853, %v1226
        %v1315 = vadd.f32 %v858, %v1226
        %v1316 = vadd.f32 %v863, %v1226
        %v1317 = vadd.f32 %v868, %v1226
        %v1318 = vadd.f32 %v873, %v1226
        %v1319 = vadd.f32 %v878, %v1226
        %v1320 = vadd.f32 %v883, %v1226
        %v1321 = vadd.f32 %v888, %v1226
        %v1322 = vadd.f32 %v893, %v1226
        %v1323 = vadd.f32 %v898, %v1226
        %v1324 = vadd.f32 %v903, %v1226
        %v1325 = vadd.f32 %v908, %v1226
        %v1326 = vadd.f32 %v913, %v1226
        %v1327 = vadd.f32 %v918, %v1230
        %v1328 = vadd.f32 %v923, %v1230
        %v1329 = vadd.f32 %v928, %v1230
        %v1330 = vadd.f32 %v933, %v1230
        %v1331 = vadd.f32 %v938, %v1230
        %v1332 = vadd.f32 %v943, %v1230
        %v1333 = vadd.f32 %v948, %v1230
        %v1334 = vadd.f32 %v953, %v1230
        %v1335 = vadd.f32 %v958, %v1230
        %v1336 = vadd.f32 %v963, %v1230
        %v1337 = vadd.f32 %v968, %v1230
        %v1338 = vadd.f32 %v973, %v1230
        %v1339 = vadd.f32 %v978, %v1230
        %v1340 = vadd.f32 %v983, %v1230
        %v1341 = vadd.f32 %v988, %v1230
        %v1342 = vadd.f32 %v993, %v1230
        %v1343 = vadd.f32 %v998, %v1234
        %v1344 = vadd.f32 %v1003, %v1234
        %v1345 = vadd.f32 %v1008, %v1234
        %v1346 = vadd.f32 %v1013, %v1234
        %v1347 = vadd.f32 %v1018, %v1234
        %v1348 = vadd.f32 %v1023, %v1234
        %v1349 = vadd.f32 %v1028, %v1234
        %v1350 = vadd.f32 %v1033, %v1234
        %v1351 = vadd.f32 %v1038, %v1234
        %v1352 = vadd.f32 %v1043, %v1234
        %v1353 = vadd.f32 %v1048, %v1234
        %v1354 = vadd.f32 %v1053, %v1234
        %v1355 = vadd.f32 %v1058, %v1234
        %v1356 = vadd.f32 %v1063, %v1234
        %v1357 = vadd.f32 %v1068, %v1234
        %v1358 = vadd.f32 %v1073, %v1234
        %v1359 = vadd.f32 %v1078, %v1238
        %v1360 = vadd.f32 %v1083, %v1238
        %v1361 = vadd.f32 %v1088, %v1238
        %v1362 = vadd.f32 %v1093, %v1238
        %v1363 = vadd.f32 %v1098, %v1238
        %v1364 = vadd.f32 %v1103, %v1238
        %v1365 = vadd.f32 %v1108, %v1238
        %v1366 = vadd.f32 %v1113, %v1238
        %v1367 = vadd.f32 %v1118, %v1238
        %v1368 = vadd.f32 %v1123, %v1238
        %v1369 = vadd.f32 %v1128, %v1238
        %v1370 = vadd.f32 %v1133, %v1238
        %v1371 = vadd.f32 %v1138, %v1238
        %v1372 = vadd.f32 %v1143, %v1238
        %v1373 = vadd.f32 %v1148, %v1238
        %v1374 = vadd.f32 %v1153, %v1238
        %v1375 = vtanh.pop %v1247
        %v1376 = vtanh.pop %v1248
        %v1377 = vtanh.pop %v1249
        %v1378 = vtanh.pop %v1250
        %v1379 = vtanh.pop %v1251
        %v1380 = vtanh.pop %v1252
        %v1381 = vtanh.pop %v1253
        %v1382 = vtanh.pop %v1254
        %v1383 = vtanh.pop %v1255
        %v1384 = vtanh.pop %v1256
        %v1385 = vtanh.pop %v1257
        %v1386 = vtanh.pop %v1258
        %v1387 = vtanh.pop %v1259
        %v1388 = vtanh.pop %v1260
        %v1389 = vtanh.pop %v1261
        %v1390 = vtanh.pop %v1262
        %v1391 = vtanh.pop %v1263
        %v1392 = vtanh.pop %v1264
        %v1393 = vtanh.pop %v1265
        %v1394 = vtanh.pop %v1266
        %v1395 = vtanh.pop %v1267
        %v1396 = vtanh.pop %v1268
        %v1397 = vtanh.pop %v1269
        %v1398 = vtanh.pop %v1270
        %v1399 = vtanh.pop %v1271
        %v1400 = vtanh.pop %v1272
        %v1401 = vtanh.pop %v1273
        %v1402 = vtanh.pop %v1274
        %v1403 = vtanh.pop %v1275
        %v1404 = vtanh.pop %v1276
        %v1405 = vtanh.pop %v1277
        %v1406 = vtanh.pop %v1278
        %v1407 = vtanh.pop %v1279
        %v1408 = vtanh.pop %v1280
        %v1409 = vtanh.pop %v1281
        %v1410 = vtanh.pop %v1282
        %v1411 = vtanh.pop %v1283
        %v1412 = vtanh.pop %v1284
        %v1413 = vtanh.pop %v1285
        %v1414 = vtanh.pop %v1286
        %v1415 = vtanh.pop %v1287
        %v1416 = vtanh.pop %v1288
        %v1417 = vtanh.pop %v1289
        %v1418 = vtanh.pop %v1290
        %v1419 = vtanh.pop %v1291
        %v1420 = vtanh.pop %v1292
        %v1421 = vtanh.pop %v1293
        %v1422 = vtanh.pop %v1294
        %v1423 = vtanh.pop %v1295
        %v1424 = vtanh.pop %v1296
        %v1425 = vtanh.pop %v1297
        %v1426 = vtanh.pop %v1298
        %v1427 = vtanh.pop %v1299
        %v1428 = vtanh.pop %v1300
        %v1429 = vtanh.pop %v1301
        %v1430 = vtanh.pop %v1302
        %v1431 = vtanh.pop %v1303
        %v1432 = vtanh.pop %v1304
        %v1433 = vtanh.pop %v1305
        %v1434 = vtanh.pop %v1306
        %v1435 = vtanh.pop %v1307
        %v1436 = vtanh.pop %v1308
        %v1437 = vtanh.pop %v1309
        %v1438 = vtanh.pop %v1310
        %v1439 = vtanh.pop %v1311
        %v1440 = vtanh.pop %v1312
        %v1441 = vtanh.pop %v1313
        %v1442 = vtanh.pop %v1314
        %v1443 = vtanh.pop %v1315
        %v1444 = vtanh.pop %v1316
        %v1445 = vtanh.pop %v1317
        %v1446 = vtanh.pop %v1318
        %v1447 = vtanh.pop %v1319
        %v1448 = vtanh.pop %v1320
        %v1449 = vtanh.pop %v1321
        %v1450 = vtanh.pop %v1322
        %v1451 = vtanh.pop %v1323
        %v1452 = vtanh.pop %v1324
        %v1453 = vtanh.pop %v1325
        %v1454 = vtanh.pop %v1326
        %v1455 = vtanh.pop %v1327
        %v1456 = vtanh.pop %v1328
        %v1457 = vtanh.pop %v1329
        %v1458 = vtanh.pop %v1330
        %v1459 = vtanh.pop %v1331
        %v1460 = vtanh.pop %v1332
        %v1461 = vtanh.pop %v1333
        %v1462 = vtanh.pop %v1334
        %v1463 = vtanh.pop %v1335
        %v1464 = vtanh.pop %v1336
        %v1465 = vtanh.pop %v1337
        %v1466 = vtanh.pop %v1338
        %v1467 = vtanh.pop %v1339
        %v1468 = vtanh.pop %v1340
        %v1469 = vtanh.pop %v1341
        %v1470 = vtanh.pop %v1342
        %v1471 = vtanh.pop %v1343
        %v1472 = vtanh.pop %v1344
        %v1473 = vtanh.pop %v1345
        %v1474 = vtanh.pop %v1346
        %v1475 = vtanh.pop %v1347
        %v1476 = vtanh.pop %v1348
        %v1477 = vtanh.pop %v1349
        %v1478 = vtanh.pop %v1350
        %v1479 = vtanh.pop %v1351
        %v1480 = vtanh.pop %v1352
        %v1481 = vtanh.pop %v1353
        %v1482 = vtanh.pop %v1354
        %v1483 = vtanh.pop %v1355
        %v1484 = vtanh.pop %v1356
        %v1485 = vtanh.pop %v1357
        %v1486 = vtanh.pop %v1358
        %v1487 = vtanh.pop %v1359
        %v1488 = vtanh.pop %v1360
        %v1489 = vtanh.pop %v1361
        %v1490 = vtanh.pop %v1362
        %v1491 = vtanh.pop %v1363
        %v1492 = vtanh.pop %v1364
        %v1493 = vtanh.pop %v1365
        %v1494 = vtanh.pop %v1366
        %v1495 = vtanh.pop %v1367
        %v1496 = vtanh.pop %v1368
        %v1497 = vtanh.pop %v1369
        %v1498 = vtanh.pop %v1370
        %v1499 = vtanh.pop %v1371
        %v1500 = vtanh.pop %v1372
        %v1501 = vtanh.pop %v1373
        %v1502 = vtanh.pop %v1374
        %v1503 = vld [vmem:[%s3] sm:$0x1]
        %v1505 = vlaneseq
        %v1506 = vshrl.u32 %v1505, 7
        %v1507 = vsub.s32 0, %v1506
        %v1508 = vrot.slane %v1503, %v1507
        %v1510 = vmul.f32 %v1375, %v1508
        %v1511 = vmul.f32 %v1376, %v1508
        %v1512 = vmul.f32 %v1377, %v1508
        %v1513 = vmul.f32 %v1378, %v1508
        %v1514 = vmul.f32 %v1379, %v1508
        %v1515 = vmul.f32 %v1380, %v1508
        %v1516 = vmul.f32 %v1381, %v1508
        %v1517 = vmul.f32 %v1382, %v1508
        %v1518 = vmul.f32 %v1383, %v1508
        %v1519 = vmul.f32 %v1384, %v1508
        %v1520 = vmul.f32 %v1385, %v1508
        %v1521 = vmul.f32 %v1386, %v1508
        %v1522 = vmul.f32 %v1387, %v1508
        %v1523 = vmul.f32 %v1388, %v1508
        %v1524 = vmul.f32 %v1389, %v1508
        %v1525 = vmul.f32 %v1390, %v1508
        %v1526 = vmul.f32 %v1391, %v1508
        %v1527 = vmul.f32 %v1392, %v1508
        %v1528 = vmul.f32 %v1393, %v1508
        %v1529 = vmul.f32 %v1394, %v1508
        %v1530 = vmul.f32 %v1395, %v1508
        %v1531 = vmul.f32 %v1396, %v1508
        %v1532 = vmul.f32 %v1397, %v1508
        %v1533 = vmul.f32 %v1398, %v1508
        %v1534 = vmul.f32 %v1399, %v1508
        %v1535 = vmul.f32 %v1400, %v1508
        %v1536 = vmul.f32 %v1401, %v1508
        %v1537 = vmul.f32 %v1402, %v1508
        %v1538 = vmul.f32 %v1403, %v1508
        %v1539 = vmul.f32 %v1404, %v1508
        %v1540 = vmul.f32 %v1405, %v1508
        %v1541 = vmul.f32 %v1406, %v1508
        %v1542 = vmul.f32 %v1407, %v1508
        %v1543 = vmul.f32 %v1408, %v1508
        %v1544 = vmul.f32 %v1409, %v1508
        %v1545 = vmul.f32 %v1410, %v1508
        %v1546 = vmul.f32 %v1411, %v1508
        %v1547 = vmul.f32 %v1412, %v1508
        %v1548 = vmul.f32 %v1413, %v1508
        %v1549 = vmul.f32 %v1414, %v1508
        %v1550 = vmul.f32 %v1415, %v1508
        %v1551 = vmul.f32 %v1416, %v1508
        %v1552 = vmul.f32 %v1417, %v1508
        %v1553 = vmul.f32 %v1418, %v1508
        %v1554 = vmul.f32 %v1419, %v1508
        %v1555 = vmul.f32 %v1420, %v1508
        %v1556 = vmul.f32 %v1421, %v1508
        %v1557 = vmul.f32 %v1422, %v1508
        %v1558 = vmul.f32 %v1423, %v1508
        %v1559 = vmul.f32 %v1424, %v1508
        %v1560 = vmul.f32 %v1425, %v1508
        %v1561 = vmul.f32 %v1426, %v1508
        %v1562 = vmul.f32 %v1427, %v1508
        %v1563 = vmul.f32 %v1428, %v1508
        %v1564 = vmul.f32 %v1429, %v1508
        %v1565 = vmul.f32 %v1430, %v1508
        %v1566 = vmul.f32 %v1431, %v1508
        %v1567 = vmul.f32 %v1432, %v1508
        %v1568 = vmul.f32 %v1433, %v1508
        %v1569 = vmul.f32 %v1434, %v1508
        %v1570 = vmul.f32 %v1435, %v1508
        %v1571 = vmul.f32 %v1436, %v1508
        %v1572 = vmul.f32 %v1437, %v1508
        %v1573 = vmul.f32 %v1438, %v1508
        %v1574 = vmul.f32 %v1439, %v1508
        %v1575 = vmul.f32 %v1440, %v1508
        %v1576 = vmul.f32 %v1441, %v1508
        %v1577 = vmul.f32 %v1442, %v1508
        %v1578 = vmul.f32 %v1443, %v1508
        %v1579 = vmul.f32 %v1444, %v1508
        %v1580 = vmul.f32 %v1445, %v1508
        %v1581 = vmul.f32 %v1446, %v1508
        %v1582 = vmul.f32 %v1447, %v1508
        %v1583 = vmul.f32 %v1448, %v1508
        %v1584 = vmul.f32 %v1449, %v1508
        %v1585 = vmul.f32 %v1450, %v1508
        %v1586 = vmul.f32 %v1451, %v1508
        %v1587 = vmul.f32 %v1452, %v1508
        %v1588 = vmul.f32 %v1453, %v1508
        %v1589 = vmul.f32 %v1454, %v1508
        %v1590 = vmul.f32 %v1455, %v1508
        %v1591 = vmul.f32 %v1456, %v1508
        %v1592 = vmul.f32 %v1457, %v1508
        %v1593 = vmul.f32 %v1458, %v1508
        %v1594 = vmul.f32 %v1459, %v1508
        %v1595 = vmul.f32 %v1460, %v1508
        %v1596 = vmul.f32 %v1461, %v1508
        %v1597 = vmul.f32 %v1462, %v1508
        %v1598 = vmul.f32 %v1463, %v1508
        %v1599 = vmul.f32 %v1464, %v1508
        %v1600 = vmul.f32 %v1465, %v1508
        %v1601 = vmul.f32 %v1466, %v1508
        %v1602 = vmul.f32 %v1467, %v1508
        %v1603 = vmul.f32 %v1468, %v1508
        %v1604 = vmul.f32 %v1469, %v1508
        %v1605 = vmul.f32 %v1470, %v1508
        %v1606 = vmul.f32 %v1471, %v1508
        %v1607 = vmul.f32 %v1472, %v1508
        %v1608 = vmul.f32 %v1473, %v1508
        %v1609 = vmul.f32 %v1474, %v1508
        %v1610 = vmul.f32 %v1475, %v1508
        %v1611 = vmul.f32 %v1476, %v1508
        %v1612 = vmul.f32 %v1477, %v1508
        %v1613 = vmul.f32 %v1478, %v1508
        %v1614 = vmul.f32 %v1479, %v1508
        %v1615 = vmul.f32 %v1480, %v1508
        %v1616 = vmul.f32 %v1481, %v1508
        %v1617 = vmul.f32 %v1482, %v1508
        %v1618 = vmul.f32 %v1483, %v1508
        %v1619 = vmul.f32 %v1484, %v1508
        %v1620 = vmul.f32 %v1485, %v1508
        %v1621 = vmul.f32 %v1486, %v1508
        %v1622 = vmul.f32 %v1487, %v1508
        %v1623 = vmul.f32 %v1488, %v1508
        %v1624 = vmul.f32 %v1489, %v1508
        %v1625 = vmul.f32 %v1490, %v1508
        %v1626 = vmul.f32 %v1491, %v1508
        %v1627 = vmul.f32 %v1492, %v1508
        %v1628 = vmul.f32 %v1493, %v1508
        %v1629 = vmul.f32 %v1494, %v1508
        %v1630 = vmul.f32 %v1495, %v1508
        %v1631 = vmul.f32 %v1496, %v1508
        %v1632 = vmul.f32 %v1497, %v1508
        %v1633 = vmul.f32 %v1498, %v1508
        %v1634 = vmul.f32 %v1499, %v1508
        %v1635 = vmul.f32 %v1500, %v1508
        %v1636 = vmul.f32 %v1501, %v1508
        %v1637 = vmul.f32 %v1502, %v1508
        %1638 = vadd.xlane.f32.xlu0 %v1510
        %v1639 = vpop.xlane.xlu0 %1638
        %1640 = vadd.xlane.f32.xlu0 %v1511
        %v1641 = vpop.xlane.xlu0 %1640
        %1642 = vadd.xlane.f32.xlu0 %v1512
        %v1643 = vpop.xlane.xlu0 %1642
        %1644 = vadd.xlane.f32.xlu0 %v1513
        %v1645 = vpop.xlane.xlu0 %1644
        %1646 = vadd.xlane.f32.xlu0 %v1514
        %v1647 = vpop.xlane.xlu0 %1646
        %1648 = vadd.xlane.f32.xlu0 %v1515
        %v1649 = vpop.xlane.xlu0 %1648
        %1650 = vadd.xlane.f32.xlu0 %v1516
        %v1651 = vpop.xlane.xlu0 %1650
        %1652 = vadd.xlane.f32.xlu0 %v1517
        %v1653 = vpop.xlane.xlu0 %1652
        %1654 = vadd.xlane.f32.xlu0 %v1518
        %v1655 = vpop.xlane.xlu0 %1654
        %1656 = vadd.xlane.f32.xlu0 %v1519
        %v1657 = vpop.xlane.xlu0 %1656
        %1658 = vadd.xlane.f32.xlu0 %v1520
        %v1659 = vpop.xlane.xlu0 %1658
        %1660 = vadd.xlane.f32.xlu0 %v1521
        %v1661 = vpop.xlane.xlu0 %1660
        %1662 = vadd.xlane.f32.xlu0 %v1522
        %v1663 = vpop.xlane.xlu0 %1662
        %1664 = vadd.xlane.f32.xlu0 %v1523
        %v1665 = vpop.xlane.xlu0 %1664
        %1666 = vadd.xlane.f32.xlu0 %v1524
        %v1667 = vpop.xlane.xlu0 %1666
        %1668 = vadd.xlane.f32.xlu0 %v1525
        %v1669 = vpop.xlane.xlu0 %1668
        %1670 = vadd.xlane.f32.xlu0 %v1526
        %v1671 = vpop.xlane.xlu0 %1670
        %1672 = vadd.xlane.f32.xlu0 %v1527
        %v1673 = vpop.xlane.xlu0 %1672
        %1674 = vadd.xlane.f32.xlu0 %v1528
        %v1675 = vpop.xlane.xlu0 %1674
        %1676 = vadd.xlane.f32.xlu0 %v1529
        %v1677 = vpop.xlane.xlu0 %1676
        %1678 = vadd.xlane.f32.xlu0 %v1530
        %v1679 = vpop.xlane.xlu0 %1678
        %1680 = vadd.xlane.f32.xlu0 %v1531
        %v1681 = vpop.xlane.xlu0 %1680
        %1682 = vadd.xlane.f32.xlu0 %v1532
        %v1683 = vpop.xlane.xlu0 %1682
        %1684 = vadd.xlane.f32.xlu0 %v1533
        %v1685 = vpop.xlane.xlu0 %1684
        %1686 = vadd.xlane.f32.xlu0 %v1534
        %v1687 = vpop.xlane.xlu0 %1686
        %1688 = vadd.xlane.f32.xlu0 %v1535
        %v1689 = vpop.xlane.xlu0 %1688
        %1690 = vadd.xlane.f32.xlu0 %v1536
        %v1691 = vpop.xlane.xlu0 %1690
        %1692 = vadd.xlane.f32.xlu0 %v1537
        %v1693 = vpop.xlane.xlu0 %1692
        %1694 = vadd.xlane.f32.xlu0 %v1538
        %v1695 = vpop.xlane.xlu0 %1694
        %1696 = vadd.xlane.f32.xlu0 %v1539
        %v1697 = vpop.xlane.xlu0 %1696
        %1698 = vadd.xlane.f32.xlu0 %v1540
        %v1699 = vpop.xlane.xlu0 %1698
        %1700 = vadd.xlane.f32.xlu0 %v1541
        %v1701 = vpop.xlane.xlu0 %1700
        %1702 = vadd.xlane.f32.xlu0 %v1542
        %v1703 = vpop.xlane.xlu0 %1702
        %1704 = vadd.xlane.f32.xlu0 %v1543
        %v1705 = vpop.xlane.xlu0 %1704
        %1706 = vadd.xlane.f32.xlu0 %v1544
        %v1707 = vpop.xlane.xlu0 %1706
        %1708 = vadd.xlane.f32.xlu0 %v1545
        %v1709 = vpop.xlane.xlu0 %1708
        %1710 = vadd.xlane.f32.xlu0 %v1546
        %v1711 = vpop.xlane.xlu0 %1710
        %1712 = vadd.xlane.f32.xlu0 %v1547
        %v1713 = vpop.xlane.xlu0 %1712
        %1714 = vadd.xlane.f32.xlu0 %v1548
        %v1715 = vpop.xlane.xlu0 %1714
        %1716 = vadd.xlane.f32.xlu0 %v1549
        %v1717 = vpop.xlane.xlu0 %1716
        %1718 = vadd.xlane.f32.xlu0 %v1550
        %v1719 = vpop.xlane.xlu0 %1718
        %1720 = vadd.xlane.f32.xlu0 %v1551
        %v1721 = vpop.xlane.xlu0 %1720
        %1722 = vadd.xlane.f32.xlu0 %v1552
        %v1723 = vpop.xlane.xlu0 %1722
        %1724 = vadd.xlane.f32.xlu0 %v1553
        %v1725 = vpop.xlane.xlu0 %1724
        %1726 = vadd.xlane.f32.xlu0 %v1554
        %v1727 = vpop.xlane.xlu0 %1726
        %1728 = vadd.xlane.f32.xlu0 %v1555
        %v1729 = vpop.xlane.xlu0 %1728
        %1730 = vadd.xlane.f32.xlu0 %v1556
        %v1731 = vpop.xlane.xlu0 %1730
        %1732 = vadd.xlane.f32.xlu0 %v1557
        %v1733 = vpop.xlane.xlu0 %1732
        %1734 = vadd.xlane.f32.xlu0 %v1558
        %v1735 = vpop.xlane.xlu0 %1734
        %1736 = vadd.xlane.f32.xlu0 %v1559
        %v1737 = vpop.xlane.xlu0 %1736
        %1738 = vadd.xlane.f32.xlu0 %v1560
        %v1739 = vpop.xlane.xlu0 %1738
        %1740 = vadd.xlane.f32.xlu0 %v1561
        %v1741 = vpop.xlane.xlu0 %1740
        %1742 = vadd.xlane.f32.xlu0 %v1562
        %v1743 = vpop.xlane.xlu0 %1742
        %1744 = vadd.xlane.f32.xlu0 %v1563
        %v1745 = vpop.xlane.xlu0 %1744
        %1746 = vadd.xlane.f32.xlu0 %v1564
        %v1747 = vpop.xlane.xlu0 %1746
        %1748 = vadd.xlane.f32.xlu0 %v1565
        %v1749 = vpop.xlane.xlu0 %1748
        %1750 = vadd.xlane.f32.xlu0 %v1566
        %v1751 = vpop.xlane.xlu0 %1750
        %1752 = vadd.xlane.f32.xlu0 %v1567
        %v1753 = vpop.xlane.xlu0 %1752
        %1754 = vadd.xlane.f32.xlu0 %v1568
        %v1755 = vpop.xlane.xlu0 %1754
        %1756 = vadd.xlane.f32.xlu0 %v1569
        %v1757 = vpop.xlane.xlu0 %1756
        %1758 = vadd.xlane.f32.xlu0 %v1570
        %v1759 = vpop.xlane.xlu0 %1758
        %1760 = vadd.xlane.f32.xlu0 %v1571
        %v1761 = vpop.xlane.xlu0 %1760
        %1762 = vadd.xlane.f32.xlu0 %v1572
        %v1763 = vpop.xlane.xlu0 %1762
        %1764 = vadd.xlane.f32.xlu0 %v1573
        %v1765 = vpop.xlane.xlu0 %1764
        %1766 = vadd.xlane.f32.xlu0 %v1574
        %v1767 = vpop.xlane.xlu0 %1766
        %1768 = vadd.xlane.f32.xlu0 %v1575
        %v1769 = vpop.xlane.xlu0 %1768
        %1770 = vadd.xlane.f32.xlu0 %v1576
        %v1771 = vpop.xlane.xlu0 %1770
        %1772 = vadd.xlane.f32.xlu0 %v1577
        %v1773 = vpop.xlane.xlu0 %1772
        %1774 = vadd.xlane.f32.xlu0 %v1578
        %v1775 = vpop.xlane.xlu0 %1774
        %1776 = vadd.xlane.f32.xlu0 %v1579
        %v1777 = vpop.xlane.xlu0 %1776
        %1778 = vadd.xlane.f32.xlu0 %v1580
        %v1779 = vpop.xlane.xlu0 %1778
        %1780 = vadd.xlane.f32.xlu0 %v1581
        %v1781 = vpop.xlane.xlu0 %1780
        %1782 = vadd.xlane.f32.xlu0 %v1582
        %v1783 = vpop.xlane.xlu0 %1782
        %1784 = vadd.xlane.f32.xlu0 %v1583
        %v1785 = vpop.xlane.xlu0 %1784
        %1786 = vadd.xlane.f32.xlu0 %v1584
        %v1787 = vpop.xlane.xlu0 %1786
        %1788 = vadd.xlane.f32.xlu0 %v1585
        %v1789 = vpop.xlane.xlu0 %1788
        %1790 = vadd.xlane.f32.xlu0 %v1586
        %v1791 = vpop.xlane.xlu0 %1790
        %1792 = vadd.xlane.f32.xlu0 %v1587
        %v1793 = vpop.xlane.xlu0 %1792
        %1794 = vadd.xlane.f32.xlu0 %v1588
        %v1795 = vpop.xlane.xlu0 %1794
        %1796 = vadd.xlane.f32.xlu0 %v1589
        %v1797 = vpop.xlane.xlu0 %1796
        %1798 = vadd.xlane.f32.xlu0 %v1590
        %v1799 = vpop.xlane.xlu0 %1798
        %1800 = vadd.xlane.f32.xlu0 %v1591
        %v1801 = vpop.xlane.xlu0 %1800
        %1802 = vadd.xlane.f32.xlu0 %v1592
        %v1803 = vpop.xlane.xlu0 %1802
        %1804 = vadd.xlane.f32.xlu0 %v1593
        %v1805 = vpop.xlane.xlu0 %1804
        %1806 = vadd.xlane.f32.xlu0 %v1594
        %v1807 = vpop.xlane.xlu0 %1806
        %1808 = vadd.xlane.f32.xlu0 %v1595
        %v1809 = vpop.xlane.xlu0 %1808
        %1810 = vadd.xlane.f32.xlu0 %v1596
        %v1811 = vpop.xlane.xlu0 %1810
        %1812 = vadd.xlane.f32.xlu0 %v1597
        %v1813 = vpop.xlane.xlu0 %1812
        %1814 = vadd.xlane.f32.xlu0 %v1598
        %v1815 = vpop.xlane.xlu0 %1814
        %1816 = vadd.xlane.f32.xlu0 %v1599
        %v1817 = vpop.xlane.xlu0 %1816
        %1818 = vadd.xlane.f32.xlu0 %v1600
        %v1819 = vpop.xlane.xlu0 %1818
        %1820 = vadd.xlane.f32.xlu0 %v1601
        %v1821 = vpop.xlane.xlu0 %1820
        %1822 = vadd.xlane.f32.xlu0 %v1602
        %v1823 = vpop.xlane.xlu0 %1822
        %1824 = vadd.xlane.f32.xlu0 %v1603
        %v1825 = vpop.xlane.xlu0 %1824
        %1826 = vadd.xlane.f32.xlu0 %v1604
        %v1827 = vpop.xlane.xlu0 %1826
        %1828 = vadd.xlane.f32.xlu0 %v1605
        %v1829 = vpop.xlane.xlu0 %1828
        %1830 = vadd.xlane.f32.xlu0 %v1606
        %v1831 = vpop.xlane.xlu0 %1830
        %1832 = vadd.xlane.f32.xlu0 %v1607
        %v1833 = vpop.xlane.xlu0 %1832
        %1834 = vadd.xlane.f32.xlu0 %v1608
        %v1835 = vpop.xlane.xlu0 %1834
        %1836 = vadd.xlane.f32.xlu0 %v1609
        %v1837 = vpop.xlane.xlu0 %1836
        %1838 = vadd.xlane.f32.xlu0 %v1610
        %v1839 = vpop.xlane.xlu0 %1838
        %1840 = vadd.xlane.f32.xlu0 %v1611
        %v1841 = vpop.xlane.xlu0 %1840
        %1842 = vadd.xlane.f32.xlu0 %v1612
        %v1843 = vpop.xlane.xlu0 %1842
        %1844 = vadd.xlane.f32.xlu0 %v1613
        %v1845 = vpop.xlane.xlu0 %1844
        %1846 = vadd.xlane.f32.xlu0 %v1614
        %v1847 = vpop.xlane.xlu0 %1846
        %1848 = vadd.xlane.f32.xlu0 %v1615
        %v1849 = vpop.xlane.xlu0 %1848
        %1850 = vadd.xlane.f32.xlu0 %v1616
        %v1851 = vpop.xlane.xlu0 %1850
        %1852 = vadd.xlane.f32.xlu0 %v1617
        %v1853 = vpop.xlane.xlu0 %1852
        %1854 = vadd.xlane.f32.xlu0 %v1618
        %v1855 = vpop.xlane.xlu0 %1854
        %1856 = vadd.xlane.f32.xlu0 %v1619
        %v1857 = vpop.xlane.xlu0 %1856
        %1858 = vadd.xlane.f32.xlu0 %v1620
        %v1859 = vpop.xlane.xlu0 %1858
        %1860 = vadd.xlane.f32.xlu0 %v1621
        %v1861 = vpop.xlane.xlu0 %1860
        %1862 = vadd.xlane.f32.xlu0 %v1622
        %v1863 = vpop.xlane.xlu0 %1862
        %1864 = vadd.xlane.f32.xlu0 %v1623
        %v1865 = vpop.xlane.xlu0 %1864
        %1866 = vadd.xlane.f32.xlu0 %v1624
        %v1867 = vpop.xlane.xlu0 %1866
        %1868 = vadd.xlane.f32.xlu0 %v1625
        %v1869 = vpop.xlane.xlu0 %1868
        %1870 = vadd.xlane.f32.xlu0 %v1626
        %v1871 = vpop.xlane.xlu0 %1870
        %1872 = vadd.xlane.f32.xlu0 %v1627
        %v1873 = vpop.xlane.xlu0 %1872
        %1874 = vadd.xlane.f32.xlu0 %v1628
        %v1875 = vpop.xlane.xlu0 %1874
        %1876 = vadd.xlane.f32.xlu0 %v1629
        %v1877 = vpop.xlane.xlu0 %1876
        %1878 = vadd.xlane.f32.xlu0 %v1630
        %v1879 = vpop.xlane.xlu0 %1878
        %1880 = vadd.xlane.f32.xlu0 %v1631
        %v1881 = vpop.xlane.xlu0 %1880
        %1882 = vadd.xlane.f32.xlu0 %v1632
        %v1883 = vpop.xlane.xlu0 %1882
        %1884 = vadd.xlane.f32.xlu0 %v1633
        %v1885 = vpop.xlane.xlu0 %1884
        %1886 = vadd.xlane.f32.xlu0 %v1634
        %v1887 = vpop.xlane.xlu0 %1886
        %1888 = vadd.xlane.f32.xlu0 %v1635
        %v1889 = vpop.xlane.xlu0 %1888
        %1890 = vadd.xlane.f32.xlu0 %v1636
        %v1891 = vpop.xlane.xlu0 %1890
        %1892 = vadd.xlane.f32.xlu0 %v1637
        %v1893 = vpop.xlane.xlu0 %1892
        %v1894 = vlaneseq
        %v1895 = vand.u32 %v1894, 127
        %vm1896 = vcmp.lt.s32.totalorder %v1895, 8
        %v2025 = vlaneseq
        %v2026 = vshrl.u32 %v2025, 7
        %v2027 = vsub.s32 %v1895, %v2026
        %v2028 = vrot.slane %v1639, %v2027
        %v2029 = vadd.s32 %v1895, 4294967288
        %v2030 = vlaneseq
        %v2031 = vshrl.u32 %v2030, 7
        %v2032 = vsub.s32 %v2029, %v2031
        %v2033 = vrot.slane %v1641, %v2032
        %vm2034 = vcmask 130112
        %v2035 = vsel %vm2034, %v2033, %v2028
        %v2036 = vadd.s32 %v1895, 4294967280
        %v2037 = vlaneseq
        %v2038 = vshrl.u32 %v2037, 7
        %v2039 = vsub.s32 %v2036, %v2038
        %v2040 = vrot.slane %v1643, %v2039
        %vm2041 = vcmask 195712
        %v2042 = vsel %vm2041, %v2040, %v2035
        %v2043 = vadd.s32 %v1895, 4294967272
        %v2044 = vlaneseq
        %v2045 = vshrl.u32 %v2044, 7
        %v2046 = vsub.s32 %v2043, %v2045
        %v2047 = vrot.slane %v1645, %v2046
        %vm2048 = vcmask 261312
        %v2049 = vsel %vm2048, %v2047, %v2042
        %v2050 = vadd.s32 %v1895, 4294967264
        %v2051 = vlaneseq
        %v2052 = vshrl.u32 %v2051, 7
        %v2053 = vsub.s32 %v2050, %v2052
        %v2054 = vrot.slane %v1647, %v2053
        %vm2055 = vcmask 326912
        %v2056 = vsel %vm2055, %v2054, %v2049
        %v2057 = vadd.s32 %v1895, 4294967256
        %v2058 = vlaneseq
        %v2059 = vshrl.u32 %v2058, 7
        %v2060 = vsub.s32 %v2057, %v2059
        %v2061 = vrot.slane %v1649, %v2060
        %vm2062 = vcmask 392512
        %v2063 = vsel %vm2062, %v2061, %v2056
        %v2064 = vadd.s32 %v1895, 4294967248
        %v2065 = vlaneseq
        %v2066 = vshrl.u32 %v2065, 7
        %v2067 = vsub.s32 %v2064, %v2066
        %v2068 = vrot.slane %v1651, %v2067
        %vm2069 = vcmask 458112
        %v2070 = vsel %vm2069, %v2068, %v2063
        %v2071 = vadd.s32 %v1895, 4294967240
        %v2072 = vlaneseq
        %v2073 = vshrl.u32 %v2072, 7
        %v2074 = vsub.s32 %v2071, %v2073
        %v2075 = vrot.slane %v1653, %v2074
        %vm2076 = vcmask 523712
        %v2077 = vsel %vm2076, %v2075, %v2070
        %v2078 = vadd.s32 %v1895, 4294967232
        %v2079 = vlaneseq
        %v2080 = vshrl.u32 %v2079, 7
        %v2081 = vsub.s32 %v2078, %v2080
        %v2082 = vrot.slane %v1655, %v2081
        %vm2083 = vcmask 589312
        %v2084 = vsel %vm2083, %v2082, %v2077
        %v2085 = vadd.s32 %v1895, 4294967224
        %v2086 = vlaneseq
        %v2087 = vshrl.u32 %v2086, 7
        %v2088 = vsub.s32 %v2085, %v2087
        %v2089 = vrot.slane %v1657, %v2088
        %vm2090 = vcmask 654912
        %v2091 = vsel %vm2090, %v2089, %v2084
        %v2092 = vadd.s32 %v1895, 4294967216
        %v2093 = vlaneseq
        %v2094 = vshrl.u32 %v2093, 7
        %v2095 = vsub.s32 %v2092, %v2094
        %v2096 = vrot.slane %v1659, %v2095
        %vm2097 = vcmask 720512
        %v2098 = vsel %vm2097, %v2096, %v2091
        %v2099 = vadd.s32 %v1895, 4294967208
        %v2100 = vlaneseq
        %v2101 = vshrl.u32 %v2100, 7
        %v2102 = vsub.s32 %v2099, %v2101
        %v2103 = vrot.slane %v1661, %v2102
        %vm2104 = vcmask 786112
        %v2105 = vsel %vm2104, %v2103, %v2098
        %v2106 = vadd.s32 %v1895, 4294967200
        %v2107 = vlaneseq
        %v2108 = vshrl.u32 %v2107, 7
        %v2109 = vsub.s32 %v2106, %v2108
        %v2110 = vrot.slane %v1663, %v2109
        %vm2111 = vcmask 851712
        %v2112 = vsel %vm2111, %v2110, %v2105
        %v2113 = vadd.s32 %v1895, 4294967192
        %v2114 = vlaneseq
        %v2115 = vshrl.u32 %v2114, 7
        %v2116 = vsub.s32 %v2113, %v2115
        %v2117 = vrot.slane %v1665, %v2116
        %vm2118 = vcmask 917312
        %v2119 = vsel %vm2118, %v2117, %v2112
        %v2120 = vadd.s32 %v1895, 4294967184
        %v2121 = vlaneseq
        %v2122 = vshrl.u32 %v2121, 7
        %v2123 = vsub.s32 %v2120, %v2122
        %v2124 = vrot.slane %v1667, %v2123
        %vm2125 = vcmask 982912
        %v2126 = vsel %vm2125, %v2124, %v2119
        %v2127 = vadd.s32 %v1895, 4294967176
        %v2128 = vlaneseq
        %v2129 = vshrl.u32 %v2128, 7
        %v2130 = vsub.s32 %v2127, %v2129
        %v2131 = vrot.slane %v1669, %v2130
        %vm2132 = vcmask 1048512
        %v2133 = vsel %vm2132, %v2131, %v2126
        %v2134 = vlaneseq
        %v2135 = vshrl.u32 %v2134, 7
        %v2136 = vsub.s32 %v1895, %v2135
        %v2137 = vrot.slane %v1671, %v2136
        %v2138 = vlaneseq
        %v2139 = vshrl.u32 %v2138, 7
        %v2140 = vsub.s32 %v2029, %v2139
        %v2141 = vrot.slane %v1673, %v2140
        %v2142 = vsel %vm2034, %v2141, %v2137
        %v2143 = vlaneseq
        %v2144 = vshrl.u32 %v2143, 7
        %v2145 = vsub.s32 %v2036, %v2144
        %v2146 = vrot.slane %v1675, %v2145
        %v2147 = vsel %vm2041, %v2146, %v2142
        %v2148 = vlaneseq
        %v2149 = vshrl.u32 %v2148, 7
        %v2150 = vsub.s32 %v2043, %v2149
        %v2151 = vrot.slane %v1677, %v2150
        %v2152 = vsel %vm2048, %v2151, %v2147
        %v2153 = vlaneseq
        %v2154 = vshrl.u32 %v2153, 7
        %v2155 = vsub.s32 %v2050, %v2154
        %v2156 = vrot.slane %v1679, %v2155
        %v2157 = vsel %vm2055, %v2156, %v2152
        %v2158 = vlaneseq
        %v2159 = vshrl.u32 %v2158, 7
        %v2160 = vsub.s32 %v2057, %v2159
        %v2161 = vrot.slane %v1681, %v2160
        %v2162 = vsel %vm2062, %v2161, %v2157
        %v2163 = vlaneseq
        %v2164 = vshrl.u32 %v2163, 7
        %v2165 = vsub.s32 %v2064, %v2164
        %v2166 = vrot.slane %v1683, %v2165
        %v2167 = vsel %vm2069, %v2166, %v2162
        %v2168 = vlaneseq
        %v2169 = vshrl.u32 %v2168, 7
        %v2170 = vsub.s32 %v2071, %v2169
        %v2171 = vrot.slane %v1685, %v2170
        %v2172 = vsel %vm2076, %v2171, %v2167
        %v2173 = vlaneseq
        %v2174 = vshrl.u32 %v2173, 7
        %v2175 = vsub.s32 %v2078, %v2174
        %v2176 = vrot.slane %v1687, %v2175
        %v2177 = vsel %vm2083, %v2176, %v2172
        %v2178 = vlaneseq
        %v2179 = vshrl.u32 %v2178, 7
        %v2180 = vsub.s32 %v2085, %v2179
        %v2181 = vrot.slane %v1689, %v2180
        %v2182 = vsel %vm2090, %v2181, %v2177
        %v2183 = vlaneseq
        %v2184 = vshrl.u32 %v2183, 7
        %v2185 = vsub.s32 %v2092, %v2184
        %v2186 = vrot.slane %v1691, %v2185
        %v2187 = vsel %vm2097, %v2186, %v2182
        %v2188 = vlaneseq
        %v2189 = vshrl.u32 %v2188, 7
        %v2190 = vsub.s32 %v2099, %v2189
        %v2191 = vrot.slane %v1693, %v2190
        %v2192 = vsel %vm2104, %v2191, %v2187
        %v2193 = vlaneseq
        %v2194 = vshrl.u32 %v2193, 7
        %v2195 = vsub.s32 %v2106, %v2194
        %v2196 = vrot.slane %v1695, %v2195
        %v2197 = vsel %vm2111, %v2196, %v2192
        %v2198 = vlaneseq
        %v2199 = vshrl.u32 %v2198, 7
        %v2200 = vsub.s32 %v2113, %v2199
        %v2201 = vrot.slane %v1697, %v2200
        %v2202 = vsel %vm2118, %v2201, %v2197
        %v2203 = vlaneseq
        %v2204 = vshrl.u32 %v2203, 7
        %v2205 = vsub.s32 %v2120, %v2204
        %v2206 = vrot.slane %v1699, %v2205
        %v2207 = vsel %vm2125, %v2206, %v2202
        %v2208 = vlaneseq
        %v2209 = vshrl.u32 %v2208, 7
        %v2210 = vsub.s32 %v2127, %v2209
        %v2211 = vrot.slane %v1701, %v2210
        %v2212 = vsel %vm2132, %v2211, %v2207
        %v2213 = vlaneseq
        %v2214 = vshrl.u32 %v2213, 7
        %v2215 = vsub.s32 %v1895, %v2214
        %v2216 = vrot.slane %v1703, %v2215
        %v2217 = vlaneseq
        %v2218 = vshrl.u32 %v2217, 7
        %v2219 = vsub.s32 %v2029, %v2218
        %v2220 = vrot.slane %v1705, %v2219
        %v2221 = vsel %vm2034, %v2220, %v2216
        %v2222 = vlaneseq
        %v2223 = vshrl.u32 %v2222, 7
        %v2224 = vsub.s32 %v2036, %v2223
        %v2225 = vrot.slane %v1707, %v2224
        %v2226 = vsel %vm2041, %v2225, %v2221
        %v2227 = vlaneseq
        %v2228 = vshrl.u32 %v2227, 7
        %v2229 = vsub.s32 %v2043, %v2228
        %v2230 = vrot.slane %v1709, %v2229
        %v2231 = vsel %vm2048, %v2230, %v2226
        %v2232 = vlaneseq
        %v2233 = vshrl.u32 %v2232, 7
        %v2234 = vsub.s32 %v2050, %v2233
        %v2235 = vrot.slane %v1711, %v2234
        %v2236 = vsel %vm2055, %v2235, %v2231
        %v2237 = vlaneseq
        %v2238 = vshrl.u32 %v2237, 7
        %v2239 = vsub.s32 %v2057, %v2238
        %v2240 = vrot.slane %v1713, %v2239
        %v2241 = vsel %vm2062, %v2240, %v2236
        %v2242 = vlaneseq
        %v2243 = vshrl.u32 %v2242, 7
        %v2244 = vsub.s32 %v2064, %v2243
        %v2245 = vrot.slane %v1715, %v2244
        %v2246 = vsel %vm2069, %v2245, %v2241
        %v2247 = vlaneseq
        %v2248 = vshrl.u32 %v2247, 7
        %v2249 = vsub.s32 %v2071, %v2248
        %v2250 = vrot.slane %v1717, %v2249
        %v2251 = vsel %vm2076, %v2250, %v2246
        %v2252 = vlaneseq
        %v2253 = vshrl.u32 %v2252, 7
        %v2254 = vsub.s32 %v2078, %v2253
        %v2255 = vrot.slane %v1719, %v2254
        %v2256 = vsel %vm2083, %v2255, %v2251
        %v2257 = vlaneseq
        %v2258 = vshrl.u32 %v2257, 7
        %v2259 = vsub.s32 %v2085, %v2258
        %v2260 = vrot.slane %v1721, %v2259
        %v2261 = vsel %vm2090, %v2260, %v2256
        %v2262 = vlaneseq
        %v2263 = vshrl.u32 %v2262, 7
        %v2264 = vsub.s32 %v2092, %v2263
        %v2265 = vrot.slane %v1723, %v2264
        %v2266 = vsel %vm2097, %v2265, %v2261
        %v2267 = vlaneseq
        %v2268 = vshrl.u32 %v2267, 7
        %v2269 = vsub.s32 %v2099, %v2268
        %v2270 = vrot.slane %v1725, %v2269
        %v2271 = vsel %vm2104, %v2270, %v2266
        %v2272 = vlaneseq
        %v2273 = vshrl.u32 %v2272, 7
        %v2274 = vsub.s32 %v2106, %v2273
        %v2275 = vrot.slane %v1727, %v2274
        %v2276 = vsel %vm2111, %v2275, %v2271
        %v2277 = vlaneseq
        %v2278 = vshrl.u32 %v2277, 7
        %v2279 = vsub.s32 %v2113, %v2278
        %v2280 = vrot.slane %v1729, %v2279
        %v2281 = vsel %vm2118, %v2280, %v2276
        %v2282 = vlaneseq
        %v2283 = vshrl.u32 %v2282, 7
        %v2284 = vsub.s32 %v2120, %v2283
        %v2285 = vrot.slane %v1731, %v2284
        %v2286 = vsel %vm2125, %v2285, %v2281
        %v2287 = vlaneseq
        %v2288 = vshrl.u32 %v2287, 7
        %v2289 = vsub.s32 %v2127, %v2288
        %v2290 = vrot.slane %v1733, %v2289
        %v2291 = vsel %vm2132, %v2290, %v2286
        %v2292 = vlaneseq
        %v2293 = vshrl.u32 %v2292, 7
        %v2294 = vsub.s32 %v1895, %v2293
        %v2295 = vrot.slane %v1735, %v2294
        %v2296 = vlaneseq
        %v2297 = vshrl.u32 %v2296, 7
        %v2298 = vsub.s32 %v2029, %v2297
        %v2299 = vrot.slane %v1737, %v2298
        %v2300 = vsel %vm2034, %v2299, %v2295
        %v2301 = vlaneseq
        %v2302 = vshrl.u32 %v2301, 7
        %v2303 = vsub.s32 %v2036, %v2302
        %v2304 = vrot.slane %v1739, %v2303
        %v2305 = vsel %vm2041, %v2304, %v2300
        %v2306 = vlaneseq
        %v2307 = vshrl.u32 %v2306, 7
        %v2308 = vsub.s32 %v2043, %v2307
        %v2309 = vrot.slane %v1741, %v2308
        %v2310 = vsel %vm2048, %v2309, %v2305
        %v2311 = vlaneseq
        %v2312 = vshrl.u32 %v2311, 7
        %v2313 = vsub.s32 %v2050, %v2312
        %v2314 = vrot.slane %v1743, %v2313
        %v2315 = vsel %vm2055, %v2314, %v2310
        %v2316 = vlaneseq
        %v2317 = vshrl.u32 %v2316, 7
        %v2318 = vsub.s32 %v2057, %v2317
        %v2319 = vrot.slane %v1745, %v2318
        %v2320 = vsel %vm2062, %v2319, %v2315
        %v2321 = vlaneseq
        %v2322 = vshrl.u32 %v2321, 7
        %v2323 = vsub.s32 %v2064, %v2322
        %v2324 = vrot.slane %v1747, %v2323
        %v2325 = vsel %vm2069, %v2324, %v2320
        %v2326 = vlaneseq
        %v2327 = vshrl.u32 %v2326, 7
        %v2328 = vsub.s32 %v2071, %v2327
        %v2329 = vrot.slane %v1749, %v2328
        %v2330 = vsel %vm2076, %v2329, %v2325
        %v2331 = vlaneseq
        %v2332 = vshrl.u32 %v2331, 7
        %v2333 = vsub.s32 %v2078, %v2332
        %v2334 = vrot.slane %v1751, %v2333
        %v2335 = vsel %vm2083, %v2334, %v2330
        %v2336 = vlaneseq
        %v2337 = vshrl.u32 %v2336, 7
        %v2338 = vsub.s32 %v2085, %v2337
        %v2339 = vrot.slane %v1753, %v2338
        %v2340 = vsel %vm2090, %v2339, %v2335
        %v2341 = vlaneseq
        %v2342 = vshrl.u32 %v2341, 7
        %v2343 = vsub.s32 %v2092, %v2342
        %v2344 = vrot.slane %v1755, %v2343
        %v2345 = vsel %vm2097, %v2344, %v2340
        %v2346 = vlaneseq
        %v2347 = vshrl.u32 %v2346, 7
        %v2348 = vsub.s32 %v2099, %v2347
        %v2349 = vrot.slane %v1757, %v2348
        %v2350 = vsel %vm2104, %v2349, %v2345
        %v2351 = vlaneseq
        %v2352 = vshrl.u32 %v2351, 7
        %v2353 = vsub.s32 %v2106, %v2352
        %v2354 = vrot.slane %v1759, %v2353
        %v2355 = vsel %vm2111, %v2354, %v2350
        %v2356 = vlaneseq
        %v2357 = vshrl.u32 %v2356, 7
        %v2358 = vsub.s32 %v2113, %v2357
        %v2359 = vrot.slane %v1761, %v2358
        %v2360 = vsel %vm2118, %v2359, %v2355
        %v2361 = vlaneseq
        %v2362 = vshrl.u32 %v2361, 7
        %v2363 = vsub.s32 %v2120, %v2362
        %v2364 = vrot.slane %v1763, %v2363
        %v2365 = vsel %vm2125, %v2364, %v2360
        %v2366 = vlaneseq
        %v2367 = vshrl.u32 %v2366, 7
        %v2368 = vsub.s32 %v2127, %v2367
        %v2369 = vrot.slane %v1765, %v2368
        %v2370 = vsel %vm2132, %v2369, %v2365
        %v2371 = vlaneseq
        %v2372 = vshrl.u32 %v2371, 7
        %v2373 = vsub.s32 %v1895, %v2372
        %v2374 = vrot.slane %v1767, %v2373
        %v2375 = vlaneseq
        %v2376 = vshrl.u32 %v2375, 7
        %v2377 = vsub.s32 %v2029, %v2376
        %v2378 = vrot.slane %v1769, %v2377
        %v2379 = vsel %vm2034, %v2378, %v2374
        %v2380 = vlaneseq
        %v2381 = vshrl.u32 %v2380, 7
        %v2382 = vsub.s32 %v2036, %v2381
        %v2383 = vrot.slane %v1771, %v2382
        %v2384 = vsel %vm2041, %v2383, %v2379
        %v2385 = vlaneseq
        %v2386 = vshrl.u32 %v2385, 7
        %v2387 = vsub.s32 %v2043, %v2386
        %v2388 = vrot.slane %v1773, %v2387
        %v2389 = vsel %vm2048, %v2388, %v2384
        %v2390 = vlaneseq
        %v2391 = vshrl.u32 %v2390, 7
        %v2392 = vsub.s32 %v2050, %v2391
        %v2393 = vrot.slane %v1775, %v2392
        %v2394 = vsel %vm2055, %v2393, %v2389
        %v2395 = vlaneseq
        %v2396 = vshrl.u32 %v2395, 7
        %v2397 = vsub.s32 %v2057, %v2396
        %v2398 = vrot.slane %v1777, %v2397
        %v2399 = vsel %vm2062, %v2398, %v2394
        %v2400 = vlaneseq
        %v2401 = vshrl.u32 %v2400, 7
        %v2402 = vsub.s32 %v2064, %v2401
        %v2403 = vrot.slane %v1779, %v2402
        %v2404 = vsel %vm2069, %v2403, %v2399
        %v2405 = vlaneseq
        %v2406 = vshrl.u32 %v2405, 7
        %v2407 = vsub.s32 %v2071, %v2406
        %v2408 = vrot.slane %v1781, %v2407
        %v2409 = vsel %vm2076, %v2408, %v2404
        %v2410 = vlaneseq
        %v2411 = vshrl.u32 %v2410, 7
        %v2412 = vsub.s32 %v2078, %v2411
        %v2413 = vrot.slane %v1783, %v2412
        %v2414 = vsel %vm2083, %v2413, %v2409
        %v2415 = vlaneseq
        %v2416 = vshrl.u32 %v2415, 7
        %v2417 = vsub.s32 %v2085, %v2416
        %v2418 = vrot.slane %v1785, %v2417
        %v2419 = vsel %vm2090, %v2418, %v2414
        %v2420 = vlaneseq
        %v2421 = vshrl.u32 %v2420, 7
        %v2422 = vsub.s32 %v2092, %v2421
        %v2423 = vrot.slane %v1787, %v2422
        %v2424 = vsel %vm2097, %v2423, %v2419
        %v2425 = vlaneseq
        %v2426 = vshrl.u32 %v2425, 7
        %v2427 = vsub.s32 %v2099, %v2426
        %v2428 = vrot.slane %v1789, %v2427
        %v2429 = vsel %vm2104, %v2428, %v2424
        %v2430 = vlaneseq
        %v2431 = vshrl.u32 %v2430, 7
        %v2432 = vsub.s32 %v2106, %v2431
        %v2433 = vrot.slane %v1791, %v2432
        %v2434 = vsel %vm2111, %v2433, %v2429
        %v2435 = vlaneseq
        %v2436 = vshrl.u32 %v2435, 7
        %v2437 = vsub.s32 %v2113, %v2436
        %v2438 = vrot.slane %v1793, %v2437
        %v2439 = vsel %vm2118, %v2438, %v2434
        %v2440 = vlaneseq
        %v2441 = vshrl.u32 %v2440, 7
        %v2442 = vsub.s32 %v2120, %v2441
        %v2443 = vrot.slane %v1795, %v2442
        %v2444 = vsel %vm2125, %v2443, %v2439
        %v2445 = vlaneseq
        %v2446 = vshrl.u32 %v2445, 7
        %v2447 = vsub.s32 %v2127, %v2446
        %v2448 = vrot.slane %v1797, %v2447
        %v2449 = vsel %vm2132, %v2448, %v2444
        %v2450 = vlaneseq
        %v2451 = vshrl.u32 %v2450, 7
        %v2452 = vsub.s32 %v1895, %v2451
        %v2453 = vrot.slane %v1799, %v2452
        %v2454 = vlaneseq
        %v2455 = vshrl.u32 %v2454, 7
        %v2456 = vsub.s32 %v2029, %v2455
        %v2457 = vrot.slane %v1801, %v2456
        %v2458 = vsel %vm2034, %v2457, %v2453
        %v2459 = vlaneseq
        %v2460 = vshrl.u32 %v2459, 7
        %v2461 = vsub.s32 %v2036, %v2460
        %v2462 = vrot.slane %v1803, %v2461
        %v2463 = vsel %vm2041, %v2462, %v2458
        %v2464 = vlaneseq
        %v2465 = vshrl.u32 %v2464, 7
        %v2466 = vsub.s32 %v2043, %v2465
        %v2467 = vrot.slane %v1805, %v2466
        %v2468 = vsel %vm2048, %v2467, %v2463
        %v2469 = vlaneseq
        %v2470 = vshrl.u32 %v2469, 7
        %v2471 = vsub.s32 %v2050, %v2470
        %v2472 = vrot.slane %v1807, %v2471
        %v2473 = vsel %vm2055, %v2472, %v2468
        %v2474 = vlaneseq
        %v2475 = vshrl.u32 %v2474, 7
        %v2476 = vsub.s32 %v2057, %v2475
        %v2477 = vrot.slane %v1809, %v2476
        %v2478 = vsel %vm2062, %v2477, %v2473
        %v2479 = vlaneseq
        %v2480 = vshrl.u32 %v2479, 7
        %v2481 = vsub.s32 %v2064, %v2480
        %v2482 = vrot.slane %v1811, %v2481
        %v2483 = vsel %vm2069, %v2482, %v2478
        %v2484 = vlaneseq
        %v2485 = vshrl.u32 %v2484, 7
        %v2486 = vsub.s32 %v2071, %v2485
        %v2487 = vrot.slane %v1813, %v2486
        %v2488 = vsel %vm2076, %v2487, %v2483
        %v2489 = vlaneseq
        %v2490 = vshrl.u32 %v2489, 7
        %v2491 = vsub.s32 %v2078, %v2490
        %v2492 = vrot.slane %v1815, %v2491
        %v2493 = vsel %vm2083, %v2492, %v2488
        %v2494 = vlaneseq
        %v2495 = vshrl.u32 %v2494, 7
        %v2496 = vsub.s32 %v2085, %v2495
        %v2497 = vrot.slane %v1817, %v2496
        %v2498 = vsel %vm2090, %v2497, %v2493
        %v2499 = vlaneseq
        %v2500 = vshrl.u32 %v2499, 7
        %v2501 = vsub.s32 %v2092, %v2500
        %v2502 = vrot.slane %v1819, %v2501
        %v2503 = vsel %vm2097, %v2502, %v2498
        %v2504 = vlaneseq
        %v2505 = vshrl.u32 %v2504, 7
        %v2506 = vsub.s32 %v2099, %v2505
        %v2507 = vrot.slane %v1821, %v2506
        %v2508 = vsel %vm2104, %v2507, %v2503
        %v2509 = vlaneseq
        %v2510 = vshrl.u32 %v2509, 7
        %v2511 = vsub.s32 %v2106, %v2510
        %v2512 = vrot.slane %v1823, %v2511
        %v2513 = vsel %vm2111, %v2512, %v2508
        %v2514 = vlaneseq
        %v2515 = vshrl.u32 %v2514, 7
        %v2516 = vsub.s32 %v2113, %v2515
        %v2517 = vrot.slane %v1825, %v2516
        %v2518 = vsel %vm2118, %v2517, %v2513
        %v2519 = vlaneseq
        %v2520 = vshrl.u32 %v2519, 7
        %v2521 = vsub.s32 %v2120, %v2520
        %v2522 = vrot.slane %v1827, %v2521
        %v2523 = vsel %vm2125, %v2522, %v2518
        %v2524 = vlaneseq
        %v2525 = vshrl.u32 %v2524, 7
        %v2526 = vsub.s32 %v2127, %v2525
        %v2527 = vrot.slane %v1829, %v2526
        %v2528 = vsel %vm2132, %v2527, %v2523
        %v2529 = vlaneseq
        %v2530 = vshrl.u32 %v2529, 7
        %v2531 = vsub.s32 %v1895, %v2530
        %v2532 = vrot.slane %v1831, %v2531
        %v2533 = vlaneseq
        %v2534 = vshrl.u32 %v2533, 7
        %v2535 = vsub.s32 %v2029, %v2534
        %v2536 = vrot.slane %v1833, %v2535
        %v2537 = vsel %vm2034, %v2536, %v2532
        %v2538 = vlaneseq
        %v2539 = vshrl.u32 %v2538, 7
        %v2540 = vsub.s32 %v2036, %v2539
        %v2541 = vrot.slane %v1835, %v2540
        %v2542 = vsel %vm2041, %v2541, %v2537
        %v2543 = vlaneseq
        %v2544 = vshrl.u32 %v2543, 7
        %v2545 = vsub.s32 %v2043, %v2544
        %v2546 = vrot.slane %v1837, %v2545
        %v2547 = vsel %vm2048, %v2546, %v2542
        %v2548 = vlaneseq
        %v2549 = vshrl.u32 %v2548, 7
        %v2550 = vsub.s32 %v2050, %v2549
        %v2551 = vrot.slane %v1839, %v2550
        %v2552 = vsel %vm2055, %v2551, %v2547
        %v2553 = vlaneseq
        %v2554 = vshrl.u32 %v2553, 7
        %v2555 = vsub.s32 %v2057, %v2554
        %v2556 = vrot.slane %v1841, %v2555
        %v2557 = vsel %vm2062, %v2556, %v2552
        %v2558 = vlaneseq
        %v2559 = vshrl.u32 %v2558, 7
        %v2560 = vsub.s32 %v2064, %v2559
        %v2561 = vrot.slane %v1843, %v2560
        %v2562 = vsel %vm2069, %v2561, %v2557
        %v2563 = vlaneseq
        %v2564 = vshrl.u32 %v2563, 7
        %v2565 = vsub.s32 %v2071, %v2564
        %v2566 = vrot.slane %v1845, %v2565
        %v2567 = vsel %vm2076, %v2566, %v2562
        %v2568 = vlaneseq
        %v2569 = vshrl.u32 %v2568, 7
        %v2570 = vsub.s32 %v2078, %v2569
        %v2571 = vrot.slane %v1847, %v2570
        %v2572 = vsel %vm2083, %v2571, %v2567
        %v2573 = vlaneseq
        %v2574 = vshrl.u32 %v2573, 7
        %v2575 = vsub.s32 %v2085, %v2574
        %v2576 = vrot.slane %v1849, %v2575
        %v2577 = vsel %vm2090, %v2576, %v2572
        %v2578 = vlaneseq
        %v2579 = vshrl.u32 %v2578, 7
        %v2580 = vsub.s32 %v2092, %v2579
        %v2581 = vrot.slane %v1851, %v2580
        %v2582 = vsel %vm2097, %v2581, %v2577
        %v2583 = vlaneseq
        %v2584 = vshrl.u32 %v2583, 7
        %v2585 = vsub.s32 %v2099, %v2584
        %v2586 = vrot.slane %v1853, %v2585
        %v2587 = vsel %vm2104, %v2586, %v2582
        %v2588 = vlaneseq
        %v2589 = vshrl.u32 %v2588, 7
        %v2590 = vsub.s32 %v2106, %v2589
        %v2591 = vrot.slane %v1855, %v2590
        %v2592 = vsel %vm2111, %v2591, %v2587
        %v2593 = vlaneseq
        %v2594 = vshrl.u32 %v2593, 7
        %v2595 = vsub.s32 %v2113, %v2594
        %v2596 = vrot.slane %v1857, %v2595
        %v2597 = vsel %vm2118, %v2596, %v2592
        %v2598 = vlaneseq
        %v2599 = vshrl.u32 %v2598, 7
        %v2600 = vsub.s32 %v2120, %v2599
        %v2601 = vrot.slane %v1859, %v2600
        %v2602 = vsel %vm2125, %v2601, %v2597
        %v2603 = vlaneseq
        %v2604 = vshrl.u32 %v2603, 7
        %v2605 = vsub.s32 %v2127, %v2604
        %v2606 = vrot.slane %v1861, %v2605
        %v2607 = vsel %vm2132, %v2606, %v2602
        %v2608 = vlaneseq
        %v2609 = vshrl.u32 %v2608, 7
        %v2610 = vsub.s32 %v1895, %v2609
        %v2611 = vrot.slane %v1863, %v2610
        %v2612 = vlaneseq
        %v2613 = vshrl.u32 %v2612, 7
        %v2614 = vsub.s32 %v2029, %v2613
        %v2615 = vrot.slane %v1865, %v2614
        %v2616 = vsel %vm2034, %v2615, %v2611
        %v2617 = vlaneseq
        %v2618 = vshrl.u32 %v2617, 7
        %v2619 = vsub.s32 %v2036, %v2618
        %v2620 = vrot.slane %v1867, %v2619
        %v2621 = vsel %vm2041, %v2620, %v2616
        %v2622 = vlaneseq
        %v2623 = vshrl.u32 %v2622, 7
        %v2624 = vsub.s32 %v2043, %v2623
        %v2625 = vrot.slane %v1869, %v2624
        %v2626 = vsel %vm2048, %v2625, %v2621
        %v2627 = vlaneseq
        %v2628 = vshrl.u32 %v2627, 7
        %v2629 = vsub.s32 %v2050, %v2628
        %v2630 = vrot.slane %v1871, %v2629
        %v2631 = vsel %vm2055, %v2630, %v2626
        %v2632 = vlaneseq
        %v2633 = vshrl.u32 %v2632, 7
        %v2634 = vsub.s32 %v2057, %v2633
        %v2635 = vrot.slane %v1873, %v2634
        %v2636 = vsel %vm2062, %v2635, %v2631
        %v2637 = vlaneseq
        %v2638 = vshrl.u32 %v2637, 7
        %v2639 = vsub.s32 %v2064, %v2638
        %v2640 = vrot.slane %v1875, %v2639
        %v2641 = vsel %vm2069, %v2640, %v2636
        %v2642 = vlaneseq
        %v2643 = vshrl.u32 %v2642, 7
        %v2644 = vsub.s32 %v2071, %v2643
        %v2645 = vrot.slane %v1877, %v2644
        %v2646 = vsel %vm2076, %v2645, %v2641
        %v2647 = vlaneseq
        %v2648 = vshrl.u32 %v2647, 7
        %v2649 = vsub.s32 %v2078, %v2648
        %v2650 = vrot.slane %v1879, %v2649
        %v2651 = vsel %vm2083, %v2650, %v2646
        %v2652 = vlaneseq
        %v2653 = vshrl.u32 %v2652, 7
        %v2654 = vsub.s32 %v2085, %v2653
        %v2655 = vrot.slane %v1881, %v2654
        %v2656 = vsel %vm2090, %v2655, %v2651
        %v2657 = vlaneseq
        %v2658 = vshrl.u32 %v2657, 7
        %v2659 = vsub.s32 %v2092, %v2658
        %v2660 = vrot.slane %v1883, %v2659
        %v2661 = vsel %vm2097, %v2660, %v2656
        %v2662 = vlaneseq
        %v2663 = vshrl.u32 %v2662, 7
        %v2664 = vsub.s32 %v2099, %v2663
        %v2665 = vrot.slane %v1885, %v2664
        %v2666 = vsel %vm2104, %v2665, %v2661
        %v2667 = vlaneseq
        %v2668 = vshrl.u32 %v2667, 7
        %v2669 = vsub.s32 %v2106, %v2668
        %v2670 = vrot.slane %v1887, %v2669
        %v2671 = vsel %vm2111, %v2670, %v2666
        %v2672 = vlaneseq
        %v2673 = vshrl.u32 %v2672, 7
        %v2674 = vsub.s32 %v2113, %v2673
        %v2675 = vrot.slane %v1889, %v2674
        %v2676 = vsel %vm2118, %v2675, %v2671
        %v2677 = vlaneseq
        %v2678 = vshrl.u32 %v2677, 7
        %v2679 = vsub.s32 %v2120, %v2678
        %v2680 = vrot.slane %v1891, %v2679
        %v2681 = vsel %vm2125, %v2680, %v2676
        %v2682 = vlaneseq
        %v2683 = vshrl.u32 %v2682, 7
        %v2684 = vsub.s32 %v2127, %v2683
        %v2685 = vrot.slane %v1893, %v2684
        %v2686 = vsel %vm2132, %v2685, %v2681
        %vm2687 = vcmask 1041409
        %v2688 = vsel %vm2687, %v2212, %v2133
        %vm2689 = vcmask 1042434
        %v2690 = vsel %vm2689, %v2291, %v2688
        %vm2691 = vcmask 1043459
        %v2692 = vsel %vm2691, %v2370, %v2690
        %vm2693 = vcmask 1044484
        %v2694 = vsel %vm2693, %v2449, %v2692
        %vm2695 = vcmask 1045509
        %v2696 = vsel %vm2695, %v2528, %v2694
        %vm2697 = vcmask 1046534
        %v2698 = vsel %vm2697, %v2607, %v2696
        %vm2699 = vcmask 1047559
        %v2700 = vsel %vm2699, %v2686, %v2698
        %v2702 = vsel %vm1896, %v2700, -1e+30
        %2703 = vmax.xlane.f32.xlu0 %v2702
        %v2704 = vpop.xlane.xlu0 %2703
        %v2705 = vsub.f32 %v2702, %v2704
        %v2706 = vmul.f32 %v2705, 1.442695
        %v2707 = vpow.pop %v2706
        %2708 = vadd.xlane.f32.xlu0 %v2707
        %v2709 = vpop.xlane.xlu0 %2708
        %v2710 = vrcp.pop %v2709
        %v2711 = vmul.f32 %v2709, %v2710
        %v2712 = vsub.f32 2.0, %v2711
        %v2713 = vmul.f32 %v2710, %v2712
        %v2714 = vmul.f32 %v2707, %v2713
        %v2716 = vcombine.high %v2714, %v2714
        %v2718 = vunpack.c.l.s4 1966171168
        %v2719 = vunpack.c.0.s8 %v2718
        %v2720 = vlaneseq
        %v2721 = vshrl.u32 %v2720, 7
        %v2722 = vsub.s32 %v2719, %v2721
        %v2723 = vrot.slane %v2714, %v2722
        %v2725 = vunpack.c.l.s4 1966171168
        %v2726 = vunpack.c.0.s8 %v2725
        %v2727 = vlaneseq
        %v2728 = vshrl.u32 %v2727, 7
        %v2729 = vsub.s32 %v2726, %v2728
        %v2730 = vrot.slane %v2716, %v2729
        %v2731 = vcombine.high %v2723, %v2723
        %v2732 = vcombine.high %v2730, %v2730
        %v2734 = vunpack.c.l.s4 1966171168
        %v2735 = vunpack.c.0.s8 %v2734
        %v2736 = vlaneseq
        %v2737 = vshrl.u32 %v2736, 7
        %v2738 = vsub.s32 %v2735, %v2737
        %v2739 = vrot.slane %v2723, %v2738
        %v2741 = vunpack.c.l.s4 1966171168
        %v2742 = vunpack.c.0.s8 %v2741
        %v2743 = vlaneseq
        %v2744 = vshrl.u32 %v2743, 7
        %v2745 = vsub.s32 %v2742, %v2744
        %v2746 = vrot.slane %v2730, %v2745
        %v2748 = vunpack.c.l.s4 1966171168
        %v2749 = vunpack.c.0.s8 %v2748
        %v2750 = vlaneseq
        %v2751 = vshrl.u32 %v2750, 7
        %v2752 = vsub.s32 %v2749, %v2751
        %v2753 = vrot.slane %v2731, %v2752
        %v2755 = vunpack.c.l.s4 1966171168
        %v2756 = vunpack.c.0.s8 %v2755
        %v2757 = vlaneseq
        %v2758 = vshrl.u32 %v2757, 7
        %v2759 = vsub.s32 %v2756, %v2758
        %v2760 = vrot.slane %v2732, %v2759
        %v2761 = vcombine.high %v2739, %v2739
        %v2762 = vcombine.high %v2746, %v2746
        %v2763 = vcombine.high %v2753, %v2753
        %v2764 = vcombine.high %v2760, %v2760
        %2773 = vmatprep.subr.mxu0 0.0
        %2774 = vmatpush1.msra.mxu0 %v307
        %2775 = vmatprep.subr.mxu0 0.0
        %2776 = vmatpush1.msra.mxu0 %v308
        %2777 = vmatprep.subr.mxu0 0.0
        %2778 = vmatpush1.msra.mxu0 %v309
        %2779 = vmatprep.subr.mxu0 0.0
        %2780 = vmatpush1.msra.mxu0 %v310
        %2781 = vmatprep.subr.mxu0 0.0
        %2782 = vmatpush1.msra.mxu0 %v311
        %2783 = vmatprep.subr.mxu0 0.0
        %2784 = vmatpush1.msra.mxu0 %v312
        %2785 = vmatprep.subr.mxu0 0.0
        %2786 = vmatpush1.msra.mxu0 %v313
        %2787 = vmatprep.subr.mxu0 0.0
        %2788 = vmatpush1.msra.mxu0 %v314
        %2789 = vmatprep.subr.mxu0 0.0
        %2790 = vmatpush1.msra.mxu0 %v315
        %2791 = vmatprep.subr.mxu0 0.0
        %2792 = vmatpush1.msra.mxu0 %v316
        %2793 = vmatprep.subr.mxu0 0.0
        %2794 = vmatpush1.msra.mxu0 %v317
        %2795 = vmatprep.subr.mxu0 0.0
        %2796 = vmatpush1.msra.mxu0 %v318
        %2797 = vmatprep.subr.mxu0 0.0
        %2798 = vmatpush1.msra.mxu0 %v319
        %2799 = vmatprep.subr.mxu0 0.0
        %2800 = vmatpush1.msra.mxu0 %v320
        %2801 = vmatprep.subr.mxu0 0.0
        %2802 = vmatpush1.msra.mxu0 %v321
        %2803 = vmatprep.subr.mxu0 0.0
        %2804 = vmatpush1.msra.mxu0 %v322
        %2805 = vmatprep.subr.mxu0 0.0
        %2806 = vmatpush1.msra.mxu0 0.0
        %2807 = vmatprep.subr.mxu0 0.0
        %2808 = vmatpush1.msra.mxu0 0.0
        %2809 = vmatprep.subr.mxu0 0.0
        %2810 = vmatpush1.msra.mxu0 0.0
        %2811 = vmatprep.subr.mxu0 0.0
        %2812 = vmatpush1.msra.mxu0 0.0
        %2813 = vmatprep.subr.mxu0 0.0
        %2814 = vmatpush1.msra.mxu0 0.0
        %2815 = vmatprep.subr.mxu0 0.0
        %2816 = vmatpush1.msra.mxu0 0.0
        %2817 = vmatprep.subr.mxu0 0.0
        %2818 = vmatpush1.msra.mxu0 0.0
        %2819 = vmatprep.subr.mxu0 0.0
        %2820 = vmatpush1.msra.mxu0 0.0
        %2821 = vmatprep.subr.mxu0 0.0
        %2822 = vmatpush1.msra.mxu0 0.0
        %2823 = vmatprep.subr.mxu0 0.0
        %2824 = vmatpush1.msra.mxu0 0.0
        %2825 = vmatprep.subr.mxu0 0.0
        %2826 = vmatpush1.msra.mxu0 0.0
        %2827 = vmatprep.subr.mxu0 0.0
        %2828 = vmatpush1.msra.mxu0 0.0
        %2829 = vmatprep.subr.mxu0 0.0
        %2830 = vmatpush1.msra.mxu0 0.0
        %2831 = vmatprep.subr.mxu0 0.0
        %2832 = vmatpush1.msra.mxu0 0.0
        %2833 = vmatprep.subr.mxu0 0.0
        %2834 = vmatpush1.msra.mxu0 0.0
        %2835 = vmatprep.subr.mxu0 0.0
        %2836 = vmatpush1.msra.mxu0 0.0
        %2837 = vmatprep.mubr.f32.mxu0 0.0
        %2838 = vmatmul.mubr.f32.gmra.mrb[0].mxu0 %v2739
        %v2839 = vpop.f32.mrb[0].mxu0
        %v2840 = vadd.f32 0.0, %v2839
        %v2841 = vpop.f32.mrb[0].mxu0
        %2842 = vdwg.mxu0
        %2843 = vmatprep.subr.mxu0 0.0
        %2844 = vmatpush1.msra.mxu0 %v323
        %2845 = vmatprep.subr.mxu0 0.0
        %2846 = vmatpush1.msra.mxu0 %v324
        %2847 = vmatprep.subr.mxu0 0.0
        %2848 = vmatpush1.msra.mxu0 %v325
        %2849 = vmatprep.subr.mxu0 0.0
        %2850 = vmatpush1.msra.mxu0 %v326
        %2851 = vmatprep.subr.mxu0 0.0
        %2852 = vmatpush1.msra.mxu0 %v327
        %2853 = vmatprep.subr.mxu0 0.0
        %2854 = vmatpush1.msra.mxu0 %v328
        %2855 = vmatprep.subr.mxu0 0.0
        %2856 = vmatpush1.msra.mxu0 %v329
        %2857 = vmatprep.subr.mxu0 0.0
        %2858 = vmatpush1.msra.mxu0 %v330
        %2859 = vmatprep.subr.mxu0 0.0
        %2860 = vmatpush1.msra.mxu0 %v331
        %2861 = vmatprep.subr.mxu0 0.0
        %2862 = vmatpush1.msra.mxu0 %v332
        %2863 = vmatprep.subr.mxu0 0.0
        %2864 = vmatpush1.msra.mxu0 %v333
        %2865 = vmatprep.subr.mxu0 0.0
        %2866 = vmatpush1.msra.mxu0 %v334
        %2867 = vmatprep.subr.mxu0 0.0
        %2868 = vmatpush1.msra.mxu0 %v335
        %2869 = vmatprep.subr.mxu0 0.0
        %2870 = vmatpush1.msra.mxu0 %v336
        %2871 = vmatprep.subr.mxu0 0.0
        %2872 = vmatpush1.msra.mxu0 %v337
        %2873 = vmatprep.subr.mxu0 0.0
        %2874 = vmatpush1.msra.mxu0 %v338
        %2875 = vmatprep.subr.mxu0 0.0
        %2876 = vmatpush1.msra.mxu0 0.0
        %2877 = vmatprep.subr.mxu0 0.0
        %2878 = vmatpush1.msra.mxu0 0.0
        %2879 = vmatprep.subr.mxu0 0.0
        %2880 = vmatpush1.msra.mxu0 0.0
        %2881 = vmatprep.subr.mxu0 0.0
        %2882 = vmatpush1.msra.mxu0 0.0
        %2883 = vmatprep.subr.mxu0 0.0
        %2884 = vmatpush1.msra.mxu0 0.0
        %2885 = vmatprep.subr.mxu0 0.0
        %2886 = vmatpush1.msra.mxu0 0.0
        %2887 = vmatprep.subr.mxu0 0.0
        %2888 = vmatpush1.msra.mxu0 0.0
        %2889 = vmatprep.subr.mxu0 0.0
        %2890 = vmatpush1.msra.mxu0 0.0
        %2891 = vmatprep.subr.mxu0 0.0
        %2892 = vmatpush1.msra.mxu0 0.0
        %2893 = vmatprep.subr.mxu0 0.0
        %2894 = vmatpush1.msra.mxu0 0.0
        %2895 = vmatprep.subr.mxu0 0.0
        %2896 = vmatpush1.msra.mxu0 0.0
        %2897 = vmatprep.subr.mxu0 0.0
        %2898 = vmatpush1.msra.mxu0 0.0
        %2899 = vmatprep.subr.mxu0 0.0
        %2900 = vmatpush1.msra.mxu0 0.0
        %2901 = vmatprep.subr.mxu0 0.0
        %2902 = vmatpush1.msra.mxu0 0.0
        %2903 = vmatprep.subr.mxu0 0.0
        %2904 = vmatpush1.msra.mxu0 0.0
        %2905 = vmatprep.subr.mxu0 0.0
        %2906 = vmatpush1.msra.mxu0 0.0
        %2907 = vmatprep.mubr.f32.mxu0 0.0
        %2908 = vmatmul.mubr.f32.gmra.mrb[0].mxu0 %v2753
        %v2909 = vpop.f32.mrb[0].mxu0
        %v2910 = vadd.f32 0.0, %v2909
        %v2911 = vpop.f32.mrb[0].mxu0
        %2912 = vdwg.mxu0
        %2913 = vmatprep.subr.mxu0 0.0
        %2914 = vmatpush1.msra.mxu0 %v339
        %2915 = vmatprep.subr.mxu0 0.0
        %2916 = vmatpush1.msra.mxu0 %v340
        %2917 = vmatprep.subr.mxu0 0.0
        %2918 = vmatpush1.msra.mxu0 %v341
        %2919 = vmatprep.subr.mxu0 0.0
        %2920 = vmatpush1.msra.mxu0 %v342
        %2921 = vmatprep.subr.mxu0 0.0
        %2922 = vmatpush1.msra.mxu0 %v343
        %2923 = vmatprep.subr.mxu0 0.0
        %2924 = vmatpush1.msra.mxu0 %v344
        %2925 = vmatprep.subr.mxu0 0.0
        %2926 = vmatpush1.msra.mxu0 %v345
        %2927 = vmatprep.subr.mxu0 0.0
        %2928 = vmatpush1.msra.mxu0 %v346
        %2929 = vmatprep.subr.mxu0 0.0
        %2930 = vmatpush1.msra.mxu0 %v347
        %2931 = vmatprep.subr.mxu0 0.0
        %2932 = vmatpush1.msra.mxu0 %v348
        %2933 = vmatprep.subr.mxu0 0.0
        %2934 = vmatpush1.msra.mxu0 %v349
        %2935 = vmatprep.subr.mxu0 0.0
        %2936 = vmatpush1.msra.mxu0 %v350
        %2937 = vmatprep.subr.mxu0 0.0
        %2938 = vmatpush1.msra.mxu0 %v351
        %2939 = vmatprep.subr.mxu0 0.0
        %2940 = vmatpush1.msra.mxu0 %v352
        %2941 = vmatprep.subr.mxu0 0.0
        %2942 = vmatpush1.msra.mxu0 %v353
        %2943 = vmatprep.subr.mxu0 0.0
        %2944 = vmatpush1.msra.mxu0 %v354
        %2945 = vmatprep.subr.mxu0 0.0
        %2946 = vmatpush1.msra.mxu0 0.0
        %2947 = vmatprep.subr.mxu0 0.0
        %2948 = vmatpush1.msra.mxu0 0.0
        %2949 = vmatprep.subr.mxu0 0.0
        %2950 = vmatpush1.msra.mxu0 0.0
        %2951 = vmatprep.subr.mxu0 0.0
        %2952 = vmatpush1.msra.mxu0 0.0
        %2953 = vmatprep.subr.mxu0 0.0
        %2954 = vmatpush1.msra.mxu0 0.0
        %2955 = vmatprep.subr.mxu0 0.0
        %2956 = vmatpush1.msra.mxu0 0.0
        %2957 = vmatprep.subr.mxu0 0.0
        %2958 = vmatpush1.msra.mxu0 0.0
        %2959 = vmatprep.subr.mxu0 0.0
        %2960 = vmatpush1.msra.mxu0 0.0
        %2961 = vmatprep.subr.mxu0 0.0
        %2962 = vmatpush1.msra.mxu0 0.0
        %2963 = vmatprep.subr.mxu0 0.0
        %2964 = vmatpush1.msra.mxu0 0.0
        %2965 = vmatprep.subr.mxu0 0.0
        %2966 = vmatpush1.msra.mxu0 0.0
        %2967 = vmatprep.subr.mxu0 0.0
        %2968 = vmatpush1.msra.mxu0 0.0
        %2969 = vmatprep.subr.mxu0 0.0
        %2970 = vmatpush1.msra.mxu0 0.0
        %2971 = vmatprep.subr.mxu0 0.0
        %2972 = vmatpush1.msra.mxu0 0.0
        %2973 = vmatprep.subr.mxu0 0.0
        %2974 = vmatpush1.msra.mxu0 0.0
        %2975 = vmatprep.subr.mxu0 0.0
        %2976 = vmatpush1.msra.mxu0 0.0
        %2977 = vmatprep.mubr.f32.mxu0 0.0
        %2978 = vmatmul.mubr.f32.gmra.mrb[0].mxu0 %v2761
        %v2979 = vpop.f32.mrb[0].mxu0
        %v2980 = vadd.f32 0.0, %v2979
        %v2981 = vpop.f32.mrb[0].mxu0
        %2982 = vdwg.mxu0
        %2983 = vmatprep.subr.mxu0 0.0
        %2984 = vmatpush1.msra.mxu0 %v355
        %2985 = vmatprep.subr.mxu0 0.0
        %2986 = vmatpush1.msra.mxu0 %v356
        %2987 = vmatprep.subr.mxu0 0.0
        %2988 = vmatpush1.msra.mxu0 %v357
        %2989 = vmatprep.subr.mxu0 0.0
        %2990 = vmatpush1.msra.mxu0 %v358
        %2991 = vmatprep.subr.mxu0 0.0
        %2992 = vmatpush1.msra.mxu0 %v359
        %2993 = vmatprep.subr.mxu0 0.0
        %2994 = vmatpush1.msra.mxu0 %v360
        %2995 = vmatprep.subr.mxu0 0.0
        %2996 = vmatpush1.msra.mxu0 %v361
        %2997 = vmatprep.subr.mxu0 0.0
        %2998 = vmatpush1.msra.mxu0 %v362
        %2999 = vmatprep.subr.mxu0 0.0
        %3000 = vmatpush1.msra.mxu0 %v363
        %3001 = vmatprep.subr.mxu0 0.0
        %3002 = vmatpush1.msra.mxu0 %v364
        %3003 = vmatprep.subr.mxu0 0.0
        %3004 = vmatpush1.msra.mxu0 %v365
        %3005 = vmatprep.subr.mxu0 0.0
        %3006 = vmatpush1.msra.mxu0 %v366
        %3007 = vmatprep.subr.mxu0 0.0
        %3008 = vmatpush1.msra.mxu0 %v367
        %3009 = vmatprep.subr.mxu0 0.0
        %3010 = vmatpush1.msra.mxu0 %v368
        %3011 = vmatprep.subr.mxu0 0.0
        %3012 = vmatpush1.msra.mxu0 %v369
        %3013 = vmatprep.subr.mxu0 0.0
        %3014 = vmatpush1.msra.mxu0 %v370
        %3015 = vmatprep.subr.mxu0 0.0
        %3016 = vmatpush1.msra.mxu0 0.0
        %3017 = vmatprep.subr.mxu0 0.0
        %3018 = vmatpush1.msra.mxu0 0.0
        %3019 = vmatprep.subr.mxu0 0.0
        %3020 = vmatpush1.msra.mxu0 0.0
        %3021 = vmatprep.subr.mxu0 0.0
        %3022 = vmatpush1.msra.mxu0 0.0
        %3023 = vmatprep.subr.mxu0 0.0
        %3024 = vmatpush1.msra.mxu0 0.0
        %3025 = vmatprep.subr.mxu0 0.0
        %3026 = vmatpush1.msra.mxu0 0.0
        %3027 = vmatprep.subr.mxu0 0.0
        %3028 = vmatpush1.msra.mxu0 0.0
        %3029 = vmatprep.subr.mxu0 0.0
        %3030 = vmatpush1.msra.mxu0 0.0
        %3031 = vmatprep.subr.mxu0 0.0
        %3032 = vmatpush1.msra.mxu0 0.0
        %3033 = vmatprep.subr.mxu0 0.0
        %3034 = vmatpush1.msra.mxu0 0.0
        %3035 = vmatprep.subr.mxu0 0.0
        %3036 = vmatpush1.msra.mxu0 0.0
        %3037 = vmatprep.subr.mxu0 0.0
        %3038 = vmatpush1.msra.mxu0 0.0
        %3039 = vmatprep.subr.mxu0 0.0
        %3040 = vmatpush1.msra.mxu0 0.0
        %3041 = vmatprep.subr.mxu0 0.0
        %3042 = vmatpush1.msra.mxu0 0.0
        %3043 = vmatprep.subr.mxu0 0.0
        %3044 = vmatpush1.msra.mxu0 0.0
        %3045 = vmatprep.subr.mxu0 0.0
        %3046 = vmatpush1.msra.mxu0 0.0
        %3047 = vmatprep.mubr.f32.mxu0 0.0
        %3048 = vmatmul.mubr.f32.gmra.mrb[0].mxu0 %v2763
        %v3049 = vpop.f32.mrb[0].mxu0
        %v3050 = vadd.f32 0.0, %v3049
        %v3051 = vpop.f32.mrb[0].mxu0
        %3052 = vdwg.mxu0
        %3053 = vmatprep.subr.mxu0 0.0
        %3054 = vmatpush1.msra.mxu0 %v371
        %3055 = vmatprep.subr.mxu0 0.0
        %3056 = vmatpush1.msra.mxu0 %v372
        %3057 = vmatprep.subr.mxu0 0.0
        %3058 = vmatpush1.msra.mxu0 %v373
        %3059 = vmatprep.subr.mxu0 0.0
        %3060 = vmatpush1.msra.mxu0 %v374
        %3061 = vmatprep.subr.mxu0 0.0
        %3062 = vmatpush1.msra.mxu0 %v375
        %3063 = vmatprep.subr.mxu0 0.0
        %3064 = vmatpush1.msra.mxu0 %v376
        %3065 = vmatprep.subr.mxu0 0.0
        %3066 = vmatpush1.msra.mxu0 %v377
        %3067 = vmatprep.subr.mxu0 0.0
        %3068 = vmatpush1.msra.mxu0 %v378
        %3069 = vmatprep.subr.mxu0 0.0
        %3070 = vmatpush1.msra.mxu0 %v379
        %3071 = vmatprep.subr.mxu0 0.0
        %3072 = vmatpush1.msra.mxu0 %v380
        %3073 = vmatprep.subr.mxu0 0.0
        %3074 = vmatpush1.msra.mxu0 %v381
        %3075 = vmatprep.subr.mxu0 0.0
        %3076 = vmatpush1.msra.mxu0 %v382
        %3077 = vmatprep.subr.mxu0 0.0
        %3078 = vmatpush1.msra.mxu0 %v383
        %3079 = vmatprep.subr.mxu0 0.0
        %3080 = vmatpush1.msra.mxu0 %v384
        %3081 = vmatprep.subr.mxu0 0.0
        %3082 = vmatpush1.msra.mxu0 %v385
        %3083 = vmatprep.subr.mxu0 0.0
        %3084 = vmatpush1.msra.mxu0 %v386
        %3085 = vmatprep.subr.mxu0 0.0
        %3086 = vmatpush1.msra.mxu0 0.0
        %3087 = vmatprep.subr.mxu0 0.0
        %3088 = vmatpush1.msra.mxu0 0.0
        %3089 = vmatprep.subr.mxu0 0.0
        %3090 = vmatpush1.msra.mxu0 0.0
        %3091 = vmatprep.subr.mxu0 0.0
        %3092 = vmatpush1.msra.mxu0 0.0
        %3093 = vmatprep.subr.mxu0 0.0
        %3094 = vmatpush1.msra.mxu0 0.0
        %3095 = vmatprep.subr.mxu0 0.0
        %3096 = vmatpush1.msra.mxu0 0.0
        %3097 = vmatprep.subr.mxu0 0.0
        %3098 = vmatpush1.msra.mxu0 0.0
        %3099 = vmatprep.subr.mxu0 0.0
        %3100 = vmatpush1.msra.mxu0 0.0
        %3101 = vmatprep.subr.mxu0 0.0
        %3102 = vmatpush1.msra.mxu0 0.0
        %3103 = vmatprep.subr.mxu0 0.0
        %3104 = vmatpush1.msra.mxu0 0.0
        %3105 = vmatprep.subr.mxu0 0.0
        %3106 = vmatpush1.msra.mxu0 0.0
        %3107 = vmatprep.subr.mxu0 0.0
        %3108 = vmatpush1.msra.mxu0 0.0
        %3109 = vmatprep.subr.mxu0 0.0
        %3110 = vmatpush1.msra.mxu0 0.0
        %3111 = vmatprep.subr.mxu0 0.0
        %3112 = vmatpush1.msra.mxu0 0.0
        %3113 = vmatprep.subr.mxu0 0.0
        %3114 = vmatpush1.msra.mxu0 0.0
        %3115 = vmatprep.subr.mxu0 0.0
        %3116 = vmatpush1.msra.mxu0 0.0
        %3117 = vmatprep.mubr.f32.mxu0 0.0
        %3118 = vmatmul.mubr.f32.gmra.mrb[0].mxu0 %v2746
        %v3119 = vpop.f32.mrb[0].mxu0
        %v3120 = vadd.f32 0.0, %v3119
        %v3121 = vpop.f32.mrb[0].mxu0
        %3122 = vdwg.mxu0
        %3123 = vmatprep.subr.mxu0 0.0
        %3124 = vmatpush1.msra.mxu0 %v387
        %3125 = vmatprep.subr.mxu0 0.0
        %3126 = vmatpush1.msra.mxu0 %v388
        %3127 = vmatprep.subr.mxu0 0.0
        %3128 = vmatpush1.msra.mxu0 %v389
        %3129 = vmatprep.subr.mxu0 0.0
        %3130 = vmatpush1.msra.mxu0 %v390
        %3131 = vmatprep.subr.mxu0 0.0
        %3132 = vmatpush1.msra.mxu0 %v391
        %3133 = vmatprep.subr.mxu0 0.0
        %3134 = vmatpush1.msra.mxu0 %v392
        %3135 = vmatprep.subr.mxu0 0.0
        %3136 = vmatpush1.msra.mxu0 %v393
        %3137 = vmatprep.subr.mxu0 0.0
        %3138 = vmatpush1.msra.mxu0 %v394
        %3139 = vmatprep.subr.mxu0 0.0
        %3140 = vmatpush1.msra.mxu0 %v395
        %3141 = vmatprep.subr.mxu0 0.0
        %3142 = vmatpush1.msra.mxu0 %v396
        %3143 = vmatprep.subr.mxu0 0.0
        %3144 = vmatpush1.msra.mxu0 %v397
        %3145 = vmatprep.subr.mxu0 0.0
        %3146 = vmatpush1.msra.mxu0 %v398
        %3147 = vmatprep.subr.mxu0 0.0
        %3148 = vmatpush1.msra.mxu0 %v399
        %3149 = vmatprep.subr.mxu0 0.0
        %3150 = vmatpush1.msra.mxu0 %v400
        %3151 = vmatprep.subr.mxu0 0.0
        %3152 = vmatpush1.msra.mxu0 %v401
        %3153 = vmatprep.subr.mxu0 0.0
        %3154 = vmatpush1.msra.mxu0 %v402
        %3155 = vmatprep.subr.mxu0 0.0
        %3156 = vmatpush1.msra.mxu0 0.0
        %3157 = vmatprep.subr.mxu0 0.0
        %3158 = vmatpush1.msra.mxu0 0.0
        %3159 = vmatprep.subr.mxu0 0.0
        %3160 = vmatpush1.msra.mxu0 0.0
        %3161 = vmatprep.subr.mxu0 0.0
        %3162 = vmatpush1.msra.mxu0 0.0
        %3163 = vmatprep.subr.mxu0 0.0
        %3164 = vmatpush1.msra.mxu0 0.0
        %3165 = vmatprep.subr.mxu0 0.0
        %3166 = vmatpush1.msra.mxu0 0.0
        %3167 = vmatprep.subr.mxu0 0.0
        %3168 = vmatpush1.msra.mxu0 0.0
        %3169 = vmatprep.subr.mxu0 0.0
        %3170 = vmatpush1.msra.mxu0 0.0
        %3171 = vmatprep.subr.mxu0 0.0
        %3172 = vmatpush1.msra.mxu0 0.0
        %3173 = vmatprep.subr.mxu0 0.0
        %3174 = vmatpush1.msra.mxu0 0.0
        %3175 = vmatprep.subr.mxu0 0.0
        %3176 = vmatpush1.msra.mxu0 0.0
        %3177 = vmatprep.subr.mxu0 0.0
        %3178 = vmatpush1.msra.mxu0 0.0
        %3179 = vmatprep.subr.mxu0 0.0
        %3180 = vmatpush1.msra.mxu0 0.0
        %3181 = vmatprep.subr.mxu0 0.0
        %3182 = vmatpush1.msra.mxu0 0.0
        %3183 = vmatprep.subr.mxu0 0.0
        %3184 = vmatpush1.msra.mxu0 0.0
        %3185 = vmatprep.subr.mxu0 0.0
        %3186 = vmatpush1.msra.mxu0 0.0
        %3187 = vmatprep.mubr.f32.mxu0 0.0
        %3188 = vmatmul.mubr.f32.gmra.mrb[0].mxu0 %v2760
        %v3189 = vpop.f32.mrb[0].mxu0
        %v3190 = vadd.f32 0.0, %v3189
        %v3191 = vpop.f32.mrb[0].mxu0
        %3192 = vdwg.mxu0
        %3193 = vmatprep.subr.mxu0 0.0
        %3194 = vmatpush1.msra.mxu0 %v403
        %3195 = vmatprep.subr.mxu0 0.0
        %3196 = vmatpush1.msra.mxu0 %v404
        %3197 = vmatprep.subr.mxu0 0.0
        %3198 = vmatpush1.msra.mxu0 %v405
        %3199 = vmatprep.subr.mxu0 0.0
        %3200 = vmatpush1.msra.mxu0 %v406
        %3201 = vmatprep.subr.mxu0 0.0
        %3202 = vmatpush1.msra.mxu0 %v407
        %3203 = vmatprep.subr.mxu0 0.0
        %3204 = vmatpush1.msra.mxu0 %v408
        %3205 = vmatprep.subr.mxu0 0.0
        %3206 = vmatpush1.msra.mxu0 %v409
        %3207 = vmatprep.subr.mxu0 0.0
        %3208 = vmatpush1.msra.mxu0 %v410
        %3209 = vmatprep.subr.mxu0 0.0
        %3210 = vmatpush1.msra.mxu0 %v411
        %3211 = vmatprep.subr.mxu0 0.0
        %3212 = vmatpush1.msra.mxu0 %v412
        %3213 = vmatprep.subr.mxu0 0.0
        %3214 = vmatpush1.msra.mxu0 %v413
        %3215 = vmatprep.subr.mxu0 0.0
        %3216 = vmatpush1.msra.mxu0 %v414
        %3217 = vmatprep.subr.mxu0 0.0
        %3218 = vmatpush1.msra.mxu0 %v415
        %3219 = vmatprep.subr.mxu0 0.0
        %3220 = vmatpush1.msra.mxu0 %v416
        %3221 = vmatprep.subr.mxu0 0.0
        %3222 = vmatpush1.msra.mxu0 %v417
        %3223 = vmatprep.subr.mxu0 0.0
        %3224 = vmatpush1.msra.mxu0 %v418
        %3225 = vmatprep.subr.mxu0 0.0
        %3226 = vmatpush1.msra.mxu0 0.0
        %3227 = vmatprep.subr.mxu0 0.0
        %3228 = vmatpush1.msra.mxu0 0.0
        %3229 = vmatprep.subr.mxu0 0.0
        %3230 = vmatpush1.msra.mxu0 0.0
        %3231 = vmatprep.subr.mxu0 0.0
        %3232 = vmatpush1.msra.mxu0 0.0
        %3233 = vmatprep.subr.mxu0 0.0
        %3234 = vmatpush1.msra.mxu0 0.0
        %3235 = vmatprep.subr.mxu0 0.0
        %3236 = vmatpush1.msra.mxu0 0.0
        %3237 = vmatprep.subr.mxu0 0.0
        %3238 = vmatpush1.msra.mxu0 0.0
        %3239 = vmatprep.subr.mxu0 0.0
        %3240 = vmatpush1.msra.mxu0 0.0
        %3241 = vmatprep.subr.mxu0 0.0
        %3242 = vmatpush1.msra.mxu0 0.0
        %3243 = vmatprep.subr.mxu0 0.0
        %3244 = vmatpush1.msra.mxu0 0.0
        %3245 = vmatprep.subr.mxu0 0.0
        %3246 = vmatpush1.msra.mxu0 0.0
        %3247 = vmatprep.subr.mxu0 0.0
        %3248 = vmatpush1.msra.mxu0 0.0
        %3249 = vmatprep.subr.mxu0 0.0
        %3250 = vmatpush1.msra.mxu0 0.0
        %3251 = vmatprep.subr.mxu0 0.0
        %3252 = vmatpush1.msra.mxu0 0.0
        %3253 = vmatprep.subr.mxu0 0.0
        %3254 = vmatpush1.msra.mxu0 0.0
        %3255 = vmatprep.subr.mxu0 0.0
        %3256 = vmatpush1.msra.mxu0 0.0
        %3257 = vmatprep.mubr.f32.mxu0 0.0
        %3258 = vmatmul.mubr.f32.gmra.mrb[0].mxu0 %v2762
        %v3259 = vpop.f32.mrb[0].mxu0
        %v3260 = vadd.f32 0.0, %v3259
        %v3261 = vpop.f32.mrb[0].mxu0
        %3262 = vdwg.mxu0
        %3263 = vmatprep.subr.mxu0 0.0
        %3264 = vmatpush1.msra.mxu0 %v419
        %3265 = vmatprep.subr.mxu0 0.0
        %3266 = vmatpush1.msra.mxu0 %v420
        %3267 = vmatprep.subr.mxu0 0.0
        %3268 = vmatpush1.msra.mxu0 %v421
        %3269 = vmatprep.subr.mxu0 0.0
        %3270 = vmatpush1.msra.mxu0 %v422
        %3271 = vmatprep.subr.mxu0 0.0
        %3272 = vmatpush1.msra.mxu0 %v423
        %3273 = vmatprep.subr.mxu0 0.0
        %3274 = vmatpush1.msra.mxu0 %v424
        %3275 = vmatprep.subr.mxu0 0.0
        %3276 = vmatpush1.msra.mxu0 %v425
        %3277 = vmatprep.subr.mxu0 0.0
        %3278 = vmatpush1.msra.mxu0 %v426
        %3279 = vmatprep.subr.mxu0 0.0
        %3280 = vmatpush1.msra.mxu0 %v427
        %3281 = vmatprep.subr.mxu0 0.0
        %3282 = vmatpush1.msra.mxu0 %v428
        %3283 = vmatprep.subr.mxu0 0.0
        %3284 = vmatpush1.msra.mxu0 %v429
        %3285 = vmatprep.subr.mxu0 0.0
        %3286 = vmatpush1.msra.mxu0 %v430
        %3287 = vmatprep.subr.mxu0 0.0
        %3288 = vmatpush1.msra.mxu0 %v431
        %3289 = vmatprep.subr.mxu0 0.0
        %3290 = vmatpush1.msra.mxu0 %v432
        %3291 = vmatprep.subr.mxu0 0.0
        %3292 = vmatpush1.msra.mxu0 %v433
        %3293 = vmatprep.subr.mxu0 0.0
        %3294 = vmatpush1.msra.mxu0 %v434
        %3295 = vmatprep.subr.mxu0 0.0
        %3296 = vmatpush1.msra.mxu0 0.0
        %3297 = vmatprep.subr.mxu0 0.0
        %3298 = vmatpush1.msra.mxu0 0.0
        %3299 = vmatprep.subr.mxu0 0.0
        %3300 = vmatpush1.msra.mxu0 0.0
        %3301 = vmatprep.subr.mxu0 0.0
        %3302 = vmatpush1.msra.mxu0 0.0
        %3303 = vmatprep.subr.mxu0 0.0
        %3304 = vmatpush1.msra.mxu0 0.0
        %3305 = vmatprep.subr.mxu0 0.0
        %3306 = vmatpush1.msra.mxu0 0.0
        %3307 = vmatprep.subr.mxu0 0.0
        %3308 = vmatpush1.msra.mxu0 0.0
        %3309 = vmatprep.subr.mxu0 0.0
        %3310 = vmatpush1.msra.mxu0 0.0
        %3311 = vmatprep.subr.mxu0 0.0
        %3312 = vmatpush1.msra.mxu0 0.0
        %3313 = vmatprep.subr.mxu0 0.0
        %3314 = vmatpush1.msra.mxu0 0.0
        %3315 = vmatprep.subr.mxu0 0.0
        %3316 = vmatpush1.msra.mxu0 0.0
        %3317 = vmatprep.subr.mxu0 0.0
        %3318 = vmatpush1.msra.mxu0 0.0
        %3319 = vmatprep.subr.mxu0 0.0
        %3320 = vmatpush1.msra.mxu0 0.0
        %3321 = vmatprep.subr.mxu0 0.0
        %3322 = vmatpush1.msra.mxu0 0.0
        %3323 = vmatprep.subr.mxu0 0.0
        %3324 = vmatpush1.msra.mxu0 0.0
        %3325 = vmatprep.subr.mxu0 0.0
        %3326 = vmatpush1.msra.mxu0 0.0
        %3327 = vmatprep.mubr.f32.mxu0 0.0
        %3328 = vmatmul.mubr.f32.gmra.mrb[0].mxu0 %v2764
        %v3329 = vpop.f32.mrb[0].mxu0
        %v3330 = vadd.f32 0.0, %v3329
        %v3331 = vpop.f32.mrb[0].mxu0
        %3332 = vdwg.mxu0
        %v3341 = vrot.slane %v2910, 7
        %v3342 = vsel %vm2687, %v3341, %v2840
        %v3343 = vrot.slane %v2980, 6
        %v3344 = vsel %vm2689, %v3343, %v3342
        %v3345 = vrot.slane %v3050, 5
        %v3346 = vsel %vm2691, %v3345, %v3344
        %v3347 = vrot.slane %v3120, 4
        %v3348 = vsel %vm2693, %v3347, %v3346
        %v3349 = vrot.slane %v3190, 3
        %v3350 = vsel %vm2695, %v3349, %v3348
        %v3351 = vrot.slane %v3260, 2
        %v3352 = vsel %vm2697, %v3351, %v3350
        %v3353 = vrot.slane %v3330, 1
        %v3354 = vsel %vm2699, %v3353, %v3352
        %3356 = vst [vmem:[%s298] sm:$0xff] %v3354
        %3357 = vst [vmem:[%s305] sm:$0xff] %v2714
        %s3358 = sand.u32 %s131, 1
        %s3359 = scalar_lea.sflag [#allocation4], %s3358
        %s3360 = sand.u32 %s131, 1
        %s3361 = smul.addr %s3360, 8
        %s3362 = scalar_lea.vmem [#allocation8], %s3361
        %s3363 = sand.u32 %s157, 1
        %s3364 = scalar_lea.sflag [#allocation10], %s3363
        %s3365 = sand.u32 %s157, 1
        %s3366 = smul.addr %s3365, 8
        %s3367 = scalar_lea.vmem [#allocation9], %s3366
        // Predicated region
        $region49: #{tpu_custom_call.1} parent=35 // pred_check
          %p3368 = pneg %p141
        $region50: #{tpu_custom_call.1} parent=35 // pred_check_branch
          %3370 = sbr.rel (%p3368) target = $region52
        $region51: #{tpu_custom_call.1} parent=35 // pred_region
          %s3372 = ssub.s32 128, 128
          %3373 = vsyncadd %s3359, %s3372
          %s3374 = smul.addr %s29, 128
          %s3375 = scalar_lea.hbm %s4, %s3374
          %s3377 = sshll.u32 %s3362, 4
          %s3378 = int_to_ptr.vmem [resolvable:$true] %s3377
          %3380 = dma.vmem_to_hbm [thread:$0]  %s3378, 128, %s3375, %s3359
        $region52: #{tpu_custom_call.1} parent=35 // pred_fallthru
          _
        // Predicated region
        $region53: #{tpu_custom_call.1} parent=35 // pred_check
          %p3381 = pneg %p167
        $region54: #{tpu_custom_call.1} parent=35 // pred_check_branch
          %3383 = sbr.rel (%p3381) target = $region56
        $region55: #{tpu_custom_call.1} parent=35 // pred_region
          %s3385 = ssub.s32 128, 128
          %3386 = vsyncadd %s3364, %s3385
          %s3387 = smul.addr %s29, 128
          %s3388 = scalar_lea.hbm %s5, %s3387
          %s3390 = sshll.u32 %s3367, 4
          %s3391 = int_to_ptr.vmem [resolvable:$true] %s3390
          %3393 = dma.vmem_to_hbm [thread:$0]  %s3391, 128, %s3388, %s3364
        $region56: #{tpu_custom_call.1} parent=35 // pred_fallthru
          _
      $region36: #{tpu_custom_call.1} parent=5 // pred_fallthru
        _
      %p3394 = scmp.le.s32.totalorder 2, %s24
      // Predicated region
      $region57: #{tpu_custom_call.1} parent=5 // pred_check
        %p3395 = pneg %p3394
      $region58: #{tpu_custom_call.1} parent=5 // pred_check_branch
        %3397 = sbr.rel (%p3395) target = $region60
      $region59: #{tpu_custom_call.1} parent=5 // pred_region
        %s3398 = ssub.s32 %s24, 2
        // Predicated region
        $region61: #{tpu_custom_call.1} parent=59 // pred_check
          %p3399 = pneg %p147
        $region62: #{tpu_custom_call.1} parent=59 // pred_check_branch
          %3401 = sbr.rel (%p3399) target = $region64
        $region63: #{tpu_custom_call.1} parent=59 // pred_region
          %s3402 = sand.u32 %s132, 1
          %s3403 = scalar_lea.sflag [#allocation4], %s3402
          %s3404 = sand.u32 %s132, 1
          %s3405 = smul.addr %s3404, 8
          %s3406 = scalar_lea.vmem [#allocation8], %s3405
          %3407 = dma.done %s3403, 128
        $region64: #{tpu_custom_call.1} parent=59 // pred_fallthru
          _
        // Predicated region
        $region65: #{tpu_custom_call.1} parent=59 // pred_check
          %p3408 = pneg %p173
        $region66: #{tpu_custom_call.1} parent=59 // pred_check_branch
          %3410 = sbr.rel (%p3408) target = $region68
        $region67: #{tpu_custom_call.1} parent=59 // pred_region
          %s3411 = sand.u32 %s158, 1
          %s3412 = scalar_lea.sflag [#allocation10], %s3411
          %s3413 = sand.u32 %s158, 1
          %s3414 = smul.addr %s3413, 8
          %s3415 = scalar_lea.vmem [#allocation9], %s3414
          %3416 = dma.done %s3412, 128
        $region68: #{tpu_custom_call.1} parent=59 // pred_fallthru
          _
      $region60: #{tpu_custom_call.1} parent=5 // pred_fallthru
        _
    $region6: #{tpu_custom_call.1} parent=1 // loop_footer
      %s28 = sadd.s32 1, %s24
    $region7: #{tpu_custom_call.1} parent=1 // loop_footer_branch
      %23 = sbr.rel target = $region3
    $region8: #{tpu_custom_call.1} parent=1 // loop_exit
      _
    %3417 = vsyncpa [#allocation3], 1
    %s3418 = scalar_lea.sflag [#allocation3], 1
    %3419 = vsyncpa %s3418, 1
    %3420 = vsyncpa [#allocation6], 1
    %s3421 = scalar_lea.sflag [#allocation6], 1
    %3422 = vsyncpa %s3421, 1
    %3423 = vsyncpa [#allocation4], 1
    %s3424 = scalar_lea.sflag [#allocation4], 1
    %3425 = vsyncpa %s3424, 1
    %3426 = vsyncpa [#allocation10], 1
    %s3427 = scalar_lea.sflag [#allocation10], 1
    %3428 = vsyncpa %s3427, 1

</llo_original>
